<compile_context>
chip_gen: v5e
topology: v5e:2x2
jax: 0.10.0
libtpu: 0.0.40
codegen_flags: <defaults>
</compile_context>

<pallas_src>
import functools

import jax
import jax.numpy as jnp
from jax.experimental import pallas as pl
from jax.experimental.pallas import tpu as pltpu  # noqa: F401  (kept for TPU-specific tuning hooks)


# ----------------------------- in-kernel helpers -----------------------------

def _layer_norm(x, gamma, beta, eps=1e-6):
    # PyTorch nn.LayerNorm (eps=1e-6): biased variance.
    mean = jnp.mean(x, axis=-1, keepdims=True)
    var = jnp.mean((x - mean) ** 2, axis=-1, keepdims=True)
    return (x - mean) * jax.lax.rsqrt(var + eps) * gamma + beta


# ------------------------- fused DecoderLayer kernel --------------------------

def _decoder_layer_kernel(n_head, d_k, d_v,
                          dec_ref, enc_ref, smask_ref, emask_ref,
                          wqkv_s_ref, wfc_s_ref,
                          wq_e_ref, wkv_e_ref, wfc_e_ref,
                          w1_ref, w2_ref, ln_ref, b1_ref, b2_ref,
                          out_ref, sattn_ref, eattn_ref):
    f32, bf16 = jnp.float32, jnp.bfloat16
    H, dk, dv = n_head, d_k, d_v

    B, Lq, D = dec_ref.shape
    Lk = enc_ref.shape[1]

    x2d = dec_ref[...].reshape(B * Lq, D)       # (B*Lq, D) f32
    enc2d = enc_ref[...].reshape(B * Lk, D)     # (B*Lk, D) f32

    ln = ln_ref[...]                            # (6, D): [g_slf,b_slf,g_enc,b_enc,g_ffn,b_ffn]
    inv_temp = f32(1.0 / (dk ** 0.5))

    def to_heads(p2d, L, d):
        # (B*L, H*d) -> (H*B, L, d); one sublane-crossing transpose, the
        # surrounding reshapes are pure leading-dim splits/merges.
        t = jnp.transpose(p2d.reshape(B * L, H, d), (1, 0, 2))   # (H, B*L, d)
        return t.reshape(H * B, L, d)

    def from_heads(c3, L, d):
        # (H*B, L, d) -> (B*L, H*d) with head-major columns
        # (matches torch .transpose(1,2).contiguous().view(b, l, H*d_v)).
        t = jnp.transpose(c3.reshape(H, B * L, d), (1, 0, 2))    # (B*L, H, d)
        return t.reshape(B * L, H * d)

    def attention(qh, kh, vh, mask_ref, attn_out_ref, L_kv):
        # qh: (H*B, Lq, dk) already scaled; kh: (H*B, L_kv, dk); vh: (H*B, L_kv, dv)
        s = jnp.einsum('nqd,nkd->nqk', qh.astype(bf16), kh.astype(bf16),
                       preferred_element_type=f32)               # (H*B, Lq, L_kv) f32
        s = s.reshape(H, B, Lq, L_kv)
        keep = mask_ref[...] != 0                                # native int8 compare
        s = jnp.where(keep[None], s, f32(-1e9))
        m = jnp.max(s, axis=-1, keepdims=True)
        e = jnp.exp(s - m)
        attn = e * pl.reciprocal(jnp.sum(e, axis=-1, keepdims=True), approx=True)
        # (H,B,..) -> (B,H,..): leading-dim permutation only (minor dims untouched)
        attn_out_ref[...] = jnp.transpose(attn, (1, 0, 2, 3)).astype(attn_out_ref.dtype)
        ctx = jnp.einsum('nqk,nkd->nqd',
                         attn.reshape(H * B, Lq, L_kv).astype(bf16),
                         vh.astype(bf16), preferred_element_type=f32)  # (H*B, Lq, dv)
        return from_heads(ctx, Lq, dv)                           # (B*Lq, H*dv)

    # ---------------- self attention (fused QKV projection) ----------------
    qkv = jnp.dot(x2d.astype(bf16), wqkv_s_ref[...],
                  preferred_element_type=f32)                    # (B*Lq, H*(2dk+dv))
    qp = qkv[:, :H * dk] * inv_temp                              # scale once
    kp = qkv[:, H * dk:2 * H * dk]
    vp = qkv[:, 2 * H * dk:]
    ctx = attention(to_heads(qp, Lq, dk), to_heads(kp, Lq, dk),
                    to_heads(vp, Lq, dv), smask_ref, sattn_ref, Lq)
    # single output projection: (B*Lq, H*dv) @ (H*dv, D)
    o = jnp.dot(ctx.astype(bf16), wfc_s_ref[...],
                preferred_element_type=f32) + x2d                # residual
    x1 = _layer_norm(o, ln[0:1], ln[1:2])

    # ------------- encoder-decoder cross attention (fused KV) --------------
    qp2 = jnp.dot(x1.astype(bf16), wq_e_ref[...],
                  preferred_element_type=f32) * inv_temp         # (B*Lq, H*dk)
    kv2 = jnp.dot(enc2d.astype(bf16), wkv_e_ref[...],
                  preferred_element_type=f32)                    # (B*Lk, H*(dk+dv))
    kp2 = kv2[:, :H * dk]
    vp2 = kv2[:, H * dk:]
    ctx2 = attention(to_heads(qp2, Lq, dk), to_heads(kp2, Lk, dk),
                     to_heads(vp2, Lk, dv), emask_ref, eattn_ref, Lk)
    o2 = jnp.dot(ctx2.astype(bf16), wfc_e_ref[...],
                 preferred_element_type=f32) + x1                # residual
    x2 = _layer_norm(o2, ln[2:3], ln[3:4])

    # ---------------------- position-wise feed forward ----------------------
    h = jnp.dot(x2.astype(bf16), w1_ref[...],
                preferred_element_type=f32) + b1_ref[...]
    h = jnp.maximum(h, 0.0)                                      # ReLU
    y = jnp.dot(h.astype(bf16), w2_ref[...],
                preferred_element_type=f32) + b2_ref[...]
    y = y + x2                                                   # residual
    out_ref[...] = _layer_norm(y, ln[4:5], ln[5:6]).reshape(B, Lq, D).astype(out_ref.dtype)


# --------------------------------- wrapper ------------------------------------

def decoder_layer_forward(params, dec_input, enc_output,
                          slf_attn_mask=None, dec_enc_attn_mask=None,
                          *, n_head, d_k, d_v, attn_dtype=jnp.bfloat16):
    """Fused DecoderLayer forward. dec_input:(B,Lq,D), enc_output:(B,Lk,D)."""
    B, Lq, D = dec_input.shape
    Lk = enc_output.shape[1]

    smask = (jnp.ones((B, Lq, Lq), jnp.int8) if slf_attn_mask is None
             else slf_attn_mask.astype(jnp.int8))
    emask = (jnp.ones((B, Lq, Lk), jnp.int8) if dec_enc_attn_mask is None
             else dec_enc_attn_mask.astype(jnp.int8))

    kernel = functools.partial(_decoder_layer_kernel, n_head, d_k, d_v)
    out_shapes = (
        jax.ShapeDtypeStruct((B, Lq, D), jnp.float32),
        jax.ShapeDtypeStruct((B, n_head, Lq, Lq), attn_dtype),
        jax.ShapeDtypeStruct((B, n_head, Lq, Lk), attn_dtype),
    )

    # grid=() : whole layer in one invocation, everything resident in VMEM
    # (default full-array BlockSpecs); batch is folded into the matmul M dim.
    # TODO(synk): on v7x (2 TensorCores) / long sequences, add a parallel
    # Lq-tile grid axis with online-softmax over Lk and K-tiled FFN weights.
    dec_out, slf_attn, enc_attn = pl.pallas_call(
        kernel,
        out_shape=out_shapes,
    )(dec_input, enc_output, smask, emask,
      params["wqkv_slf"], params["wfc_slf"],
      params["wq_enc"], params["wkv_enc"], params["wfc_enc"],
      params["w1"], params["w2"], params["ln"], params["b1"], params["b2"])
    return dec_out, slf_attn, enc_attn


# ------------------------------ parameter init --------------------------------

def init_decoder_layer_params(key, d_model, d_inner, n_head, d_k, d_v):
    ks = jax.random.split(key, 10)
    scale = 0.02

    def nrm(k, shape):
        return scale * jax.random.normal(k, shape, jnp.float32)

    # self-attention weights (stored as W.T of the PyTorch Linear weights)
    wq_s = nrm(ks[0], (d_model, n_head * d_k))
    wk_s = nrm(ks[1], (d_model, n_head * d_k))
    wv_s = nrm(ks[2], (d_model, n_head * d_v))
    wfc_s = nrm(ks[3], (n_head * d_v, d_model))
    # cross-attention weights
    wq_e = nrm(ks[4], (d_model, n_head * d_k))
    wk_e = nrm(ks[5], (d_model, n_head * d_k))
    wv_e = nrm(ks[6], (d_model, n_head * d_v))
    wfc_e = nrm(ks[7], (n_head * d_v, d_model))
    # FFN weights
    w1 = nrm(ks[8], (d_model, d_inner))
    w2 = nrm(ks[9], (d_inner, d_model))

    ones = jnp.ones((1, d_model), jnp.float32)
    zeros = jnp.zeros((1, d_model), jnp.float32)
    ln = jnp.concatenate([ones, zeros, ones, zeros, ones, zeros], axis=0)  # (6, D)

    bf16 = jnp.bfloat16
    return {
        # bf16 weight copies (native MXU input format; halves DMA bytes)
        "wqkv_slf": jnp.concatenate([wq_s, wk_s, wv_s], axis=1).astype(bf16),
        "wfc_slf": wfc_s.astype(bf16),                       # flat (H*dv, D)
        "wq_enc": wq_e.astype(bf16),
        "wkv_enc": jnp.concatenate([wk_e, wv_e], axis=1).astype(bf16),
        "wfc_enc": wfc_e.astype(bf16),                       # flat (H*dv, D)
        "w1": w1.astype(bf16),
        "w2": w2.astype(bf16),
        # vector params stay f32 (LayerNorm / bias math in f32)
        "ln": ln,
        "b1": jnp.zeros((1, d_inner), jnp.float32),
        "b2": jnp.zeros((1, d_model), jnp.float32),
    }


# ----------------------------------- main --------------------------------------

if __name__ == "__main__":
    B = 2
    L_DEC = 8
    L_ENC = 8
    D_MODEL = 32
    D_INNER = 64
    N_HEAD = 4
    D_K = 8
    D_V = 8

    root = jax.random.PRNGKey(0)
    k_params, k_dec, k_enc = jax.random.split(root, 3)

    params = init_decoder_layer_params(k_params, D_MODEL, D_INNER, N_HEAD, D_K, D_V)

    dec_input = jax.random.normal(k_dec, (B, L_DEC, D_MODEL), jnp.float32)
    enc_output = jax.random.normal(k_enc, (B, L_ENC, D_MODEL), jnp.float32)

    # causal self-attention mask (1 = keep, 0 = masked)
    causal = jnp.tril(jnp.ones((L_DEC, L_DEC), jnp.int8))
    slf_attn_mask = jnp.broadcast_to(causal, (B, L_DEC, L_DEC))

    dec_out, dec_slf_attn, dec_enc_attn = decoder_layer_forward(
        params, dec_input, enc_output,
        slf_attn_mask=slf_attn_mask, dec_enc_attn_mask=None,
        n_head=N_HEAD, d_k=D_K, d_v=D_V)

    jax.block_until_ready((dec_out, dec_slf_attn, dec_enc_attn))

    assert dec_out.shape == (B, L_DEC, D_MODEL)
    assert dec_slf_attn.shape == (B, N_HEAD, L_DEC, L_DEC)
    assert dec_enc_attn.shape == (B, N_HEAD, L_DEC, L_ENC)
    assert bool(jnp.all(jnp.isfinite(dec_out)))
    assert bool(jnp.all(jnp.isfinite(dec_slf_attn)))
    assert bool(jnp.all(jnp.isfinite(dec_enc_attn)))
    # attention rows should sum to ~1 (f32 reduction over the bf16 maps)
    row_sums = jnp.sum(dec_slf_attn.astype(jnp.float32), axis=-1)
    assert bool(jnp.all(jnp.abs(row_sums - 1.0) < 1e-2))
    print("KERNEL_OK")
</pallas_src>

<mosaic_0001>
module attributes {stable_mosaic.version = 11 : i64} {
  func.func @_decoder_layer_kernel(%arg0: memref<2x8x32xf32, #tpu.memory_space<vmem>>, %arg1: memref<2x8x32xf32, #tpu.memory_space<vmem>>, %arg2: memref<2x8x8xi8, #tpu.memory_space<vmem>>, %arg3: memref<2x8x8xi8, #tpu.memory_space<vmem>>, %arg4: memref<32x96xbf16, #tpu.memory_space<vmem>>, %arg5: memref<32x32xbf16, #tpu.memory_space<vmem>>, %arg6: memref<32x32xbf16, #tpu.memory_space<vmem>>, %arg7: memref<32x64xbf16, #tpu.memory_space<vmem>>, %arg8: memref<32x32xbf16, #tpu.memory_space<vmem>>, %arg9: memref<32x64xbf16, #tpu.memory_space<vmem>>, %arg10: memref<64x32xbf16, #tpu.memory_space<vmem>>, %arg11: memref<6x32xf32, #tpu.memory_space<vmem>>, %arg12: memref<1x64xf32, #tpu.memory_space<vmem>>, %arg13: memref<1x32xf32, #tpu.memory_space<vmem>>, %arg14: memref<2x8x32xf32, #tpu.memory_space<vmem>>, %arg15: memref<2x4x8x8xbf16, #tpu.memory_space<vmem>>, %arg16: memref<2x4x8x8xbf16, #tpu.memory_space<vmem>>) attributes {dimension_semantics = [], scalar_prefetch = 0 : i64, scratch_operands = 0 : i64, tpu.core_type = #tpu.core_type<tc>} {
    %c0 = arith.constant 0 : index
    %c0_0 = arith.constant 0 : index
    %c0_1 = arith.constant 0 : index
    %0 = vector.load %arg0[%c0, %c0_0, %c0_1] : memref<2x8x32xf32, #tpu.memory_space<vmem>>, vector<2x8x32xf32>
    %1 = vector.shape_cast %0 : vector<2x8x32xf32> to vector<16x32xf32>
    %c0_2 = arith.constant 0 : index
    %c0_3 = arith.constant 0 : index
    %c0_4 = arith.constant 0 : index
    %2 = vector.load %arg1[%c0_2, %c0_3, %c0_4] : memref<2x8x32xf32, #tpu.memory_space<vmem>>, vector<2x8x32xf32>
    %3 = vector.shape_cast %2 : vector<2x8x32xf32> to vector<16x32xf32>
    %c0_5 = arith.constant 0 : index
    %c0_6 = arith.constant 0 : index
    %4 = vector.load %arg11[%c0_5, %c0_6] : memref<6x32xf32, #tpu.memory_space<vmem>>, vector<6x32xf32>
    %5 = arith.truncf %1 : vector<16x32xf32> to vector<16x32xbf16>
    %c0_7 = arith.constant 0 : index
    %c0_8 = arith.constant 0 : index
    %6 = vector.load %arg4[%c0_7, %c0_8] : memref<32x96xbf16, #tpu.memory_space<vmem>>, vector<32x96xbf16>
    %cst = arith.constant dense<0.000000e+00> : vector<16x96xf32>
    %7 = tpu.matmul %5, %6, %cst {dimension_numbers = #tpu.dot_dimension_numbers<[1], [0], [0], [1], [0, 0, 1, 1], [], []>} : vector<16x32xbf16>, vector<32x96xbf16>, vector<16x96xf32> -> vector<16x96xf32>
    %8 = vector.extract_strided_slice %7 {offsets = [0, 0], sizes = [16, 32], strides = [1, 1]} : vector<16x96xf32> to vector<16x32xf32>
    %cst_9 = arith.constant 0.353553385 : f32
    %9 = vector.broadcast %cst_9 : f32 to vector<16x32xf32>
    %10 = arith.mulf %8, %9 : vector<16x32xf32>
    %11 = vector.extract_strided_slice %7 {offsets = [0, 32], sizes = [16, 32], strides = [1, 1]} : vector<16x96xf32> to vector<16x32xf32>
    %12 = vector.extract_strided_slice %7 {offsets = [0, 64], sizes = [16, 32], strides = [1, 1]} : vector<16x96xf32> to vector<16x32xf32>
    %13 = vector.shape_cast %10 : vector<16x32xf32> to vector<16x4x8xf32>
    %14 = tpu.transpose %13, [1, 0, 2] : vector<16x4x8xf32> -> vector<4x16x8xf32>
    %15 = vector.shape_cast %14 : vector<4x16x8xf32> to vector<8x8x8xf32>
    %16 = vector.shape_cast %11 : vector<16x32xf32> to vector<16x4x8xf32>
    %17 = tpu.transpose %16, [1, 0, 2] : vector<16x4x8xf32> -> vector<4x16x8xf32>
    %18 = vector.shape_cast %17 : vector<4x16x8xf32> to vector<8x8x8xf32>
    %19 = vector.shape_cast %12 : vector<16x32xf32> to vector<16x4x8xf32>
    %20 = tpu.transpose %19, [1, 0, 2] : vector<16x4x8xf32> -> vector<4x16x8xf32>
    %21 = vector.shape_cast %20 : vector<4x16x8xf32> to vector<8x8x8xf32>
    %22 = arith.truncf %15 : vector<8x8x8xf32> to vector<8x8x8xbf16>
    %23 = arith.truncf %18 : vector<8x8x8xf32> to vector<8x8x8xbf16>
    "tpu.trace_start"() <{level = 10 : i32, message = "nqd,nkd->nqk"}> : () -> ()
    %cst_10 = arith.constant dense<0.000000e+00> : vector<8x8x8xf32>
    %24 = tpu.matmul %22, %23, %cst_10 {dimension_numbers = #tpu.dot_dimension_numbers<[2], [2], [1], [1], [0, 0, 0, 1, 1, 1], [0], [0]>} : vector<8x8x8xbf16>, vector<8x8x8xbf16>, vector<8x8x8xf32> -> vector<8x8x8xf32>
    "tpu.trace_stop"() : () -> ()
    %25 = vector.shape_cast %24 : vector<8x8x8xf32> to vector<4x2x8x8xf32>
    %c0_11 = arith.constant 0 : index
    %c0_12 = arith.constant 0 : index
    %c0_13 = arith.constant 0 : index
    %26 = vector.load %arg2[%c0_11, %c0_12, %c0_13] : memref<2x8x8xi8, #tpu.memory_space<vmem>>, vector<2x8x8xi8>
    %c0_i8 = arith.constant 0 : i8
    %27 = vector.broadcast %c0_i8 : i8 to vector<2x8x8xi8>
    %28 = arith.cmpi ne, %26, %27 : vector<2x8x8xi8>
    %29 = vector.shape_cast %28 : vector<2x8x8xi1> to vector<1x2x8x8xi1>
    %cst_14 = arith.constant -1.000000e+09 : f32
    %30 = vector.shape_cast %29 : vector<1x2x8x8xi1> to vector<1x2x8x8xi1>
    %31 = vector.broadcast %30 : vector<1x2x8x8xi1> to vector<4x2x8x8xi1>
    %32 = vector.broadcast %cst_14 : f32 to vector<4x2x8x8xf32>
    %33 = arith.select %31, %25, %32 : vector<4x2x8x8xi1>, vector<4x2x8x8xf32>
    %cst_15 = arith.constant dense<0xFF800000> : vector<4x2x8xf32>
    %34 = vector.multi_reduction <maximumf>, %33, %cst_15 [3] : vector<4x2x8x8xf32> to vector<4x2x8xf32>
    %35 = vector.shape_cast %34 : vector<4x2x8xf32> to vector<4x2x8x1xf32>
    %36 = vector.broadcast %35 : vector<4x2x8x1xf32> to vector<4x2x8x8xf32>
    %37 = arith.subf %33, %36 : vector<4x2x8x8xf32>
    %38 = math.exp %37 : vector<4x2x8x8xf32>
    %cst_16 = arith.constant dense<0.000000e+00> : vector<4x2x8xf32>
    %39 = vector.multi_reduction <add>, %38, %cst_16 [3] : vector<4x2x8x8xf32> to vector<4x2x8xf32>
    %40 = vector.shape_cast %39 : vector<4x2x8xf32> to vector<4x2x8x1xf32>
    %41 = tpu.reciprocal %40 {approx = true} : vector<4x2x8x1xf32> -> vector<4x2x8x1xf32>
    %42 = vector.broadcast %41 : vector<4x2x8x1xf32> to vector<4x2x8x8xf32>
    %43 = arith.mulf %38, %42 : vector<4x2x8x8xf32>
    %44 = tpu.transpose %43, [1, 0, 2, 3] : vector<4x2x8x8xf32> -> vector<2x4x8x8xf32>
    %45 = arith.truncf %44 : vector<2x4x8x8xf32> to vector<2x4x8x8xbf16>
    %c0_17 = arith.constant 0 : index
    %c0_18 = arith.constant 0 : index
    %c0_19 = arith.constant 0 : index
    %c0_20 = arith.constant 0 : index
    %46 = vector.load %arg15[%c0_17, %c0_18, %c0_19, %c0_20] : memref<2x4x8x8xbf16, #tpu.memory_space<vmem>>, vector<2x4x8x8xbf16>
    tpu.vector_store %arg15[%c0_17, %c0_18, %c0_19, %c0_20], %45 {strides = array<i32>} : memref<2x4x8x8xbf16, #tpu.memory_space<vmem>>, vector<2x4x8x8xbf16>,
    %47 = vector.shape_cast %43 : vector<4x2x8x8xf32> to vector<8x8x8xf32>
    %48 = arith.truncf %47 : vector<8x8x8xf32> to vector<8x8x8xbf16>
    %49 = arith.truncf %21 : vector<8x8x8xf32> to vector<8x8x8xbf16>
    "tpu.trace_start"() <{level = 10 : i32, message = "nqk,nkd->nqd"}> : () -> ()
    %cst_21 = arith.constant dense<0.000000e+00> : vector<8x8x8xf32>
    %50 = tpu.matmul %48, %49, %cst_21 {dimension_numbers = #tpu.dot_dimension_numbers<[2], [1], [1], [2], [0, 0, 0, 1, 1, 2], [0], [0]>} : vector<8x8x8xbf16>, vector<8x8x8xbf16>, vector<8x8x8xf32> -> vector<8x8x8xf32>
    "tpu.trace_stop"() : () -> ()
    %51 = vector.shape_cast %50 : vector<8x8x8xf32> to vector<4x16x8xf32>
    %52 = tpu.transpose %51, [1, 0, 2] : vector<4x16x8xf32> -> vector<16x4x8xf32>
    %53 = vector.shape_cast %52 : vector<16x4x8xf32> to vector<16x32xf32>
    %54 = arith.truncf %53 : vector<16x32xf32> to vector<16x32xbf16>
    %c0_22 = arith.constant 0 : index
    %c0_23 = arith.constant 0 : index
    %55 = vector.load %arg5[%c0_22, %c0_23] : memref<32x32xbf16, #tpu.memory_space<vmem>>, vector<32x32xbf16>
    %cst_24 = arith.constant dense<0.000000e+00> : vector<16x32xf32>
    %56 = tpu.matmul %54, %55, %cst_24 {dimension_numbers = #tpu.dot_dimension_numbers<[1], [0], [0], [1], [0, 0, 1, 1], [], []>} : vector<16x32xbf16>, vector<32x32xbf16>, vector<16x32xf32> -> vector<16x32xf32>
    %57 = arith.addf %56, %1 : vector<16x32xf32>
    %58 = vector.extract_strided_slice %4 {offsets = [0, 0], sizes = [1, 32], strides = [1, 1]} : vector<6x32xf32> to vector<1x32xf32>
    %59 = vector.extract_strided_slice %4 {offsets = [1, 0], sizes = [1, 32], strides = [1, 1]} : vector<6x32xf32> to vector<1x32xf32>
    %cst_25 = arith.constant dense<0.000000e+00> : vector<16xf32>
    %60 = vector.multi_reduction <add>, %57, %cst_25 [1] : vector<16x32xf32> to vector<16xf32>
    %61 = vector.shape_cast %60 : vector<16xf32> to vector<16x1xf32>
    %cst_26 = arith.constant 3.200000e+01 : f32
    %62 = vector.broadcast %cst_26 : f32 to vector<16x1xf32>
    %63 = arith.divf %61, %62 : vector<16x1xf32>
    %64 = vector.broadcast %63 : vector<16x1xf32> to vector<16x32xf32>
    %65 = arith.subf %57, %64 : vector<16x32xf32>
    %66 = arith.mulf %65, %65 : vector<16x32xf32>
    %cst_27 = arith.constant dense<0.000000e+00> : vector<16xf32>
    %67 = vector.multi_reduction <add>, %66, %cst_27 [1] : vector<16x32xf32> to vector<16xf32>
    %68 = vector.shape_cast %67 : vector<16xf32> to vector<16x1xf32>
    %cst_28 = arith.constant 3.200000e+01 : f32
    %69 = vector.broadcast %cst_28 : f32 to vector<16x1xf32>
    %70 = arith.divf %68, %69 : vector<16x1xf32>
    %71 = vector.broadcast %63 : vector<16x1xf32> to vector<16x32xf32>
    %72 = arith.subf %57, %71 : vector<16x32xf32>
    %cst_29 = arith.constant 9.99999997E-7 : f32
    %73 = vector.broadcast %cst_29 : f32 to vector<16x1xf32>
    %74 = arith.addf %70, %73 : vector<16x1xf32>
    %75 = math.rsqrt %74 : vector<16x1xf32>
    %76 = vector.broadcast %75 : vector<16x1xf32> to vector<16x32xf32>
    %77 = arith.mulf %72, %76 : vector<16x32xf32>
    %78 = vector.broadcast %58 : vector<1x32xf32> to vector<16x32xf32>
    %79 = arith.mulf %77, %78 : vector<16x32xf32>
    %80 = vector.broadcast %59 : vector<1x32xf32> to vector<16x32xf32>
    %81 = arith.addf %79, %80 : vector<16x32xf32>
    %82 = arith.truncf %81 : vector<16x32xf32> to vector<16x32xbf16>
    %c0_30 = arith.constant 0 : index
    %c0_31 = arith.constant 0 : index
    %83 = vector.load %arg6[%c0_30, %c0_31] : memref<32x32xbf16, #tpu.memory_space<vmem>>, vector<32x32xbf16>
    %cst_32 = arith.constant dense<0.000000e+00> : vector<16x32xf32>
    %84 = tpu.matmul %82, %83, %cst_32 {dimension_numbers = #tpu.dot_dimension_numbers<[1], [0], [0], [1], [0, 0, 1, 1], [], []>} : vector<16x32xbf16>, vector<32x32xbf16>, vector<16x32xf32> -> vector<16x32xf32>
    %cst_33 = arith.constant 0.353553385 : f32
    %85 = vector.broadcast %cst_33 : f32 to vector<16x32xf32>
    %86 = arith.mulf %84, %85 : vector<16x32xf32>
    %87 = arith.truncf %3 : vector<16x32xf32> to vector<16x32xbf16>
    %c0_34 = arith.constant 0 : index
    %c0_35 = arith.constant 0 : index
    %88 = vector.load %arg7[%c0_34, %c0_35] : memref<32x64xbf16, #tpu.memory_space<vmem>>, vector<32x64xbf16>
    %cst_36 = arith.constant dense<0.000000e+00> : vector<16x64xf32>
    %89 = tpu.matmul %87, %88, %cst_36 {dimension_numbers = #tpu.dot_dimension_numbers<[1], [0], [0], [1], [0, 0, 1, 1], [], []>} : vector<16x32xbf16>, vector<32x64xbf16>, vector<16x64xf32> -> vector<16x64xf32>
    %90 = vector.extract_strided_slice %89 {offsets = [0, 0], sizes = [16, 32], strides = [1, 1]} : vector<16x64xf32> to vector<16x32xf32>
    %91 = vector.extract_strided_slice %89 {offsets = [0, 32], sizes = [16, 32], strides = [1, 1]} : vector<16x64xf32> to vector<16x32xf32>
    %92 = vector.shape_cast %86 : vector<16x32xf32> to vector<16x4x8xf32>
    %93 = tpu.transpose %92, [1, 0, 2] : vector<16x4x8xf32> -> vector<4x16x8xf32>
    %94 = vector.shape_cast %93 : vector<4x16x8xf32> to vector<8x8x8xf32>
    %95 = vector.shape_cast %90 : vector<16x32xf32> to vector<16x4x8xf32>
    %96 = tpu.transpose %95, [1, 0, 2] : vector<16x4x8xf32> -> vector<4x16x8xf32>
    %97 = vector.shape_cast %96 : vector<4x16x8xf32> to vector<8x8x8xf32>
    %98 = vector.shape_cast %91 : vector<16x32xf32> to vector<16x4x8xf32>
    %99 = tpu.transpose %98, [1, 0, 2] : vector<16x4x8xf32> -> vector<4x16x8xf32>
    %100 = vector.shape_cast %99 : vector<4x16x8xf32> to vector<8x8x8xf32>
    %101 = arith.truncf %94 : vector<8x8x8xf32> to vector<8x8x8xbf16>
    %102 = arith.truncf %97 : vector<8x8x8xf32> to vector<8x8x8xbf16>
    "tpu.trace_start"() <{level = 10 : i32, message = "nqd,nkd->nqk"}> : () -> ()
    %cst_37 = arith.constant dense<0.000000e+00> : vector<8x8x8xf32>
    %103 = tpu.matmul %101, %102, %cst_37 {dimension_numbers = #tpu.dot_dimension_numbers<[2], [2], [1], [1], [0, 0, 0, 1, 1, 1], [0], [0]>} : vector<8x8x8xbf16>, vector<8x8x8xbf16>, vector<8x8x8xf32> -> vector<8x8x8xf32>
    "tpu.trace_stop"() : () -> ()
    %104 = vector.shape_cast %103 : vector<8x8x8xf32> to vector<4x2x8x8xf32>
    %c0_38 = arith.constant 0 : index
    %c0_39 = arith.constant 0 : index
    %c0_40 = arith.constant 0 : index
    %105 = vector.load %arg3[%c0_38, %c0_39, %c0_40] : memref<2x8x8xi8, #tpu.memory_space<vmem>>, vector<2x8x8xi8>
    %c0_i8_41 = arith.constant 0 : i8
    %106 = vector.broadcast %c0_i8_41 : i8 to vector<2x8x8xi8>
    %107 = arith.cmpi ne, %105, %106 : vector<2x8x8xi8>
    %108 = vector.shape_cast %107 : vector<2x8x8xi1> to vector<1x2x8x8xi1>
    %cst_42 = arith.constant -1.000000e+09 : f32
    %109 = vector.shape_cast %108 : vector<1x2x8x8xi1> to vector<1x2x8x8xi1>
    %110 = vector.broadcast %109 : vector<1x2x8x8xi1> to vector<4x2x8x8xi1>
    %111 = vector.broadcast %cst_42 : f32 to vector<4x2x8x8xf32>
    %112 = arith.select %110, %104, %111 : vector<4x2x8x8xi1>, vector<4x2x8x8xf32>
    %cst_43 = arith.constant dense<0xFF800000> : vector<4x2x8xf32>
    %113 = vector.multi_reduction <maximumf>, %112, %cst_43 [3] : vector<4x2x8x8xf32> to vector<4x2x8xf32>
    %114 = vector.shape_cast %113 : vector<4x2x8xf32> to vector<4x2x8x1xf32>
    %115 = vector.broadcast %114 : vector<4x2x8x1xf32> to vector<4x2x8x8xf32>
    %116 = arith.subf %112, %115 : vector<4x2x8x8xf32>
    %117 = math.exp %116 : vector<4x2x8x8xf32>
    %cst_44 = arith.constant dense<0.000000e+00> : vector<4x2x8xf32>
    %118 = vector.multi_reduction <add>, %117, %cst_44 [3] : vector<4x2x8x8xf32> to vector<4x2x8xf32>
    %119 = vector.shape_cast %118 : vector<4x2x8xf32> to vector<4x2x8x1xf32>
    %120 = tpu.reciprocal %119 {approx = true} : vector<4x2x8x1xf32> -> vector<4x2x8x1xf32>
    %121 = vector.broadcast %120 : vector<4x2x8x1xf32> to vector<4x2x8x8xf32>
    %122 = arith.mulf %117, %121 : vector<4x2x8x8xf32>
    %123 = tpu.transpose %122, [1, 0, 2, 3] : vector<4x2x8x8xf32> -> vector<2x4x8x8xf32>
    %124 = arith.truncf %123 : vector<2x4x8x8xf32> to vector<2x4x8x8xbf16>
    %c0_45 = arith.constant 0 : index
    %c0_46 = arith.constant 0 : index
    %c0_47 = arith.constant 0 : index
    %c0_48 = arith.constant 0 : index
    %125 = vector.load %arg16[%c0_45, %c0_46, %c0_47, %c0_48] : memref<2x4x8x8xbf16, #tpu.memory_space<vmem>>, vector<2x4x8x8xbf16>
    tpu.vector_store %arg16[%c0_45, %c0_46, %c0_47, %c0_48], %124 {strides = array<i32>} : memref<2x4x8x8xbf16, #tpu.memory_space<vmem>>, vector<2x4x8x8xbf16>,
    %126 = vector.shape_cast %122 : vector<4x2x8x8xf32> to vector<8x8x8xf32>
    %127 = arith.truncf %126 : vector<8x8x8xf32> to vector<8x8x8xbf16>
    %128 = arith.truncf %100 : vector<8x8x8xf32> to vector<8x8x8xbf16>
    "tpu.trace_start"() <{level = 10 : i32, message = "nqk,nkd->nqd"}> : () -> ()
    %cst_49 = arith.constant dense<0.000000e+00> : vector<8x8x8xf32>
    %129 = tpu.matmul %127, %128, %cst_49 {dimension_numbers = #tpu.dot_dimension_numbers<[2], [1], [1], [2], [0, 0, 0, 1, 1, 2], [0], [0]>} : vector<8x8x8xbf16>, vector<8x8x8xbf16>, vector<8x8x8xf32> -> vector<8x8x8xf32>
    "tpu.trace_stop"() : () -> ()
    %130 = vector.shape_cast %129 : vector<8x8x8xf32> to vector<4x16x8xf32>
    %131 = tpu.transpose %130, [1, 0, 2] : vector<4x16x8xf32> -> vector<16x4x8xf32>
    %132 = vector.shape_cast %131 : vector<16x4x8xf32> to vector<16x32xf32>
    %133 = arith.truncf %132 : vector<16x32xf32> to vector<16x32xbf16>
    %c0_50 = arith.constant 0 : index
    %c0_51 = arith.constant 0 : index
    %134 = vector.load %arg8[%c0_50, %c0_51] : memref<32x32xbf16, #tpu.memory_space<vmem>>, vector<32x32xbf16>
    %cst_52 = arith.constant dense<0.000000e+00> : vector<16x32xf32>
    %135 = tpu.matmul %133, %134, %cst_52 {dimension_numbers = #tpu.dot_dimension_numbers<[1], [0], [0], [1], [0, 0, 1, 1], [], []>} : vector<16x32xbf16>, vector<32x32xbf16>, vector<16x32xf32> -> vector<16x32xf32>
    %136 = arith.addf %135, %81 : vector<16x32xf32>
    %137 = vector.extract_strided_slice %4 {offsets = [2, 0], sizes = [1, 32], strides = [1, 1]} : vector<6x32xf32> to vector<1x32xf32>
    %138 = vector.extract_strided_slice %4 {offsets = [3, 0], sizes = [1, 32], strides = [1, 1]} : vector<6x32xf32> to vector<1x32xf32>
    %cst_53 = arith.constant dense<0.000000e+00> : vector<16xf32>
    %139 = vector.multi_reduction <add>, %136, %cst_53 [1] : vector<16x32xf32> to vector<16xf32>
    %140 = vector.shape_cast %139 : vector<16xf32> to vector<16x1xf32>
    %cst_54 = arith.constant 3.200000e+01 : f32
    %141 = vector.broadcast %cst_54 : f32 to vector<16x1xf32>
    %142 = arith.divf %140, %141 : vector<16x1xf32>
    %143 = vector.broadcast %142 : vector<16x1xf32> to vector<16x32xf32>
    %144 = arith.subf %136, %143 : vector<16x32xf32>
    %145 = arith.mulf %144, %144 : vector<16x32xf32>
    %cst_55 = arith.constant dense<0.000000e+00> : vector<16xf32>
    %146 = vector.multi_reduction <add>, %145, %cst_55 [1] : vector<16x32xf32> to vector<16xf32>
    %147 = vector.shape_cast %146 : vector<16xf32> to vector<16x1xf32>
    %cst_56 = arith.constant 3.200000e+01 : f32
    %148 = vector.broadcast %cst_56 : f32 to vector<16x1xf32>
    %149 = arith.divf %147, %148 : vector<16x1xf32>
    %150 = vector.broadcast %142 : vector<16x1xf32> to vector<16x32xf32>
    %151 = arith.subf %136, %150 : vector<16x32xf32>
    %cst_57 = arith.constant 9.99999997E-7 : f32
    %152 = vector.broadcast %cst_57 : f32 to vector<16x1xf32>
    %153 = arith.addf %149, %152 : vector<16x1xf32>
    %154 = math.rsqrt %153 : vector<16x1xf32>
    %155 = vector.broadcast %154 : vector<16x1xf32> to vector<16x32xf32>
    %156 = arith.mulf %151, %155 : vector<16x32xf32>
    %157 = vector.broadcast %137 : vector<1x32xf32> to vector<16x32xf32>
    %158 = arith.mulf %156, %157 : vector<16x32xf32>
    %159 = vector.broadcast %138 : vector<1x32xf32> to vector<16x32xf32>
    %160 = arith.addf %158, %159 : vector<16x32xf32>
    %161 = arith.truncf %160 : vector<16x32xf32> to vector<16x32xbf16>
    %c0_58 = arith.constant 0 : index
    %c0_59 = arith.constant 0 : index
    %162 = vector.load %arg9[%c0_58, %c0_59] : memref<32x64xbf16, #tpu.memory_space<vmem>>, vector<32x64xbf16>
    %cst_60 = arith.constant dense<0.000000e+00> : vector<16x64xf32>
    %163 = tpu.matmul %161, %162, %cst_60 {dimension_numbers = #tpu.dot_dimension_numbers<[1], [0], [0], [1], [0, 0, 1, 1], [], []>} : vector<16x32xbf16>, vector<32x64xbf16>, vector<16x64xf32> -> vector<16x64xf32>
    %c0_61 = arith.constant 0 : index
    %c0_62 = arith.constant 0 : index
    %164 = vector.load %arg12[%c0_61, %c0_62] : memref<1x64xf32, #tpu.memory_space<vmem>>, vector<1x64xf32>
    %165 = vector.broadcast %164 : vector<1x64xf32> to vector<16x64xf32>
    %166 = arith.addf %163, %165 : vector<16x64xf32>
    %cst_63 = arith.constant 0.000000e+00 : f32
    %167 = vector.broadcast %cst_63 : f32 to vector<16x64xf32>
    %168 = arith.maximumf %166, %167 : vector<16x64xf32>
    %169 = arith.truncf %168 : vector<16x64xf32> to vector<16x64xbf16>
    %c0_64 = arith.constant 0 : index
    %c0_65 = arith.constant 0 : index
    %170 = vector.load %arg10[%c0_64, %c0_65] : memref<64x32xbf16, #tpu.memory_space<vmem>>, vector<64x32xbf16>
    %cst_66 = arith.constant dense<0.000000e+00> : vector<16x32xf32>
    %171 = tpu.matmul %169, %170, %cst_66 {dimension_numbers = #tpu.dot_dimension_numbers<[1], [0], [0], [1], [0, 0, 1, 1], [], []>} : vector<16x64xbf16>, vector<64x32xbf16>, vector<16x32xf32> -> vector<16x32xf32>
    %c0_67 = arith.constant 0 : index
    %c0_68 = arith.constant 0 : index
    %172 = vector.load %arg13[%c0_67, %c0_68] : memref<1x32xf32, #tpu.memory_space<vmem>>, vector<1x32xf32>
    %173 = vector.broadcast %172 : vector<1x32xf32> to vector<16x32xf32>
    %174 = arith.addf %171, %173 : vector<16x32xf32>
    %175 = arith.addf %174, %160 : vector<16x32xf32>
    %176 = vector.extract_strided_slice %4 {offsets = [4, 0], sizes = [1, 32], strides = [1, 1]} : vector<6x32xf32> to vector<1x32xf32>
    %177 = vector.extract_strided_slice %4 {offsets = [5, 0], sizes = [1, 32], strides = [1, 1]} : vector<6x32xf32> to vector<1x32xf32>
    %cst_69 = arith.constant dense<0.000000e+00> : vector<16xf32>
    %178 = vector.multi_reduction <add>, %175, %cst_69 [1] : vector<16x32xf32> to vector<16xf32>
    %179 = vector.shape_cast %178 : vector<16xf32> to vector<16x1xf32>
    %cst_70 = arith.constant 3.200000e+01 : f32
    %180 = vector.broadcast %cst_70 : f32 to vector<16x1xf32>
    %181 = arith.divf %179, %180 : vector<16x1xf32>
    %182 = vector.broadcast %181 : vector<16x1xf32> to vector<16x32xf32>
    %183 = arith.subf %175, %182 : vector<16x32xf32>
    %184 = arith.mulf %183, %183 : vector<16x32xf32>
    %cst_71 = arith.constant dense<0.000000e+00> : vector<16xf32>
    %185 = vector.multi_reduction <add>, %184, %cst_71 [1] : vector<16x32xf32> to vector<16xf32>
    %186 = vector.shape_cast %185 : vector<16xf32> to vector<16x1xf32>
    %cst_72 = arith.constant 3.200000e+01 : f32
    %187 = vector.broadcast %cst_72 : f32 to vector<16x1xf32>
    %188 = arith.divf %186, %187 : vector<16x1xf32>
    %189 = vector.broadcast %181 : vector<16x1xf32> to vector<16x32xf32>
    %190 = arith.subf %175, %189 : vector<16x32xf32>
    %cst_73 = arith.constant 9.99999997E-7 : f32
    %191 = vector.broadcast %cst_73 : f32 to vector<16x1xf32>
    %192 = arith.addf %188, %191 : vector<16x1xf32>
    %193 = math.rsqrt %192 : vector<16x1xf32>
    %194 = vector.broadcast %193 : vector<16x1xf32> to vector<16x32xf32>
    %195 = arith.mulf %190, %194 : vector<16x32xf32>
    %196 = vector.broadcast %176 : vector<1x32xf32> to vector<16x32xf32>
    %197 = arith.mulf %195, %196 : vector<16x32xf32>
    %198 = vector.broadcast %177 : vector<1x32xf32> to vector<16x32xf32>
    %199 = arith.addf %197, %198 : vector<16x32xf32>
    %200 = vector.shape_cast %199 : vector<16x32xf32> to vector<2x8x32xf32>
    %c0_74 = arith.constant 0 : index
    %c0_75 = arith.constant 0 : index
    %c0_76 = arith.constant 0 : index
    %201 = vector.load %arg14[%c0_74, %c0_75, %c0_76] : memref<2x8x32xf32, #tpu.memory_space<vmem>>, vector<2x8x32xf32>
    tpu.vector_store %arg14[%c0_74, %c0_75, %c0_76], %200 {strides = array<i32>} : memref<2x8x32xf32, #tpu.memory_space<vmem>>, vector<2x8x32xf32>,
    return
  }
}

</mosaic_0001>

<llo_original>
// kernel: tpu_custom_call.1
$region0: #{tpu_custom_call.1}
  #allocation0 [shape = 'u32[]', space=smem, size = 0x4, offset = 0x4, fixed_abs, tag = 'smem constant byte address 0x4 - core index']
  #allocation1 [shape = 'u32[72,128]{1,0:T(1,128)}', space=vmem, size = 0x9000, scoped, tag = 'internal scratch']
  %s0 = inlined_call_operand.vmem [shape: f32[2,8,32], index: 0, kind: input, shape index: {}]
  %s1 = inlined_call_operand.vmem [shape: f32[2,8,32], index: 1, kind: input, shape index: {}]
  %s2 = inlined_call_operand.hbm [shape: s8[2,8,8], index: 2, kind: input, shape index: {}]
  %s3 = inlined_call_operand.hbm [shape: s8[2,8,8], index: 3, kind: input, shape index: {}]
  %s4 = inlined_call_operand.vmem [shape: bf16[32,96], index: 4, kind: input, shape index: {}]
  %s5 = inlined_call_operand.hbm [shape: bf16[32,32], index: 5, kind: input, shape index: {}]
  %s6 = inlined_call_operand.hbm [shape: bf16[32,32], index: 6, kind: input, shape index: {}]
  %s7 = inlined_call_operand.hbm [shape: bf16[32,64], index: 7, kind: input, shape index: {}]
  %s8 = inlined_call_operand.hbm [shape: bf16[32,32], index: 8, kind: input, shape index: {}]
  %s9 = inlined_call_operand.hbm [shape: bf16[32,64], index: 9, kind: input, shape index: {}]
  %s10 = inlined_call_operand.vmem [shape: bf16[64,32], index: 10, kind: input, shape index: {}]
  %s11 = inlined_call_operand.vmem [shape: f32[6,32], index: 11, kind: input, shape index: {}]
  %s12 = inlined_call_operand.vmem [shape: f32[1,64], index: 12, kind: input, shape index: {}]
  %s13 = inlined_call_operand.vmem [shape: f32[1,32], index: 13, kind: input, shape index: {}]
  %s14 = inlined_call_operand.hbm [shape: f32[2,8,32], index: 14, kind: output, shape index: {0}]
  %s15 = inlined_call_operand.hbm [shape: bf16[2,4,8,8], index: 15, kind: output, shape index: {1}]
  %s16 = inlined_call_operand.hbm [shape: bf16[2,4,8,8], index: 16, kind: output, shape index: {2}]
  %17 = xla_tuple %s14, %s15, %s16
  %s18 = sld [smem:[#allocation0]]
  $region110: #{tpu_custom_call.1} parent=0
    _
  %s20 = ssub.s32 1, %s18
  %s21 = scalar_select 0, %s20, %s18
  $region1: #{tpu_custom_call.1} parent=0
    #allocation2 [shape = 'u8[2048]{0}', space=vmem, size = 0x800, scoped, tag = 'input window, operand 2, single buffered']
    #allocation3 [shape = 's32[1]{0}', space=sflag, size = 0x4, scoped, tag = 'scoped memory for tpu_custom_call.1']
    #allocation4 [shape = 's32[1]{0}', space=sflag, size = 0x4, scoped, tag = 'scoped memory for tpu_custom_call.1']
    #allocation5 [shape = 'u8[2048]{0}', space=vmem, size = 0x800, scoped, tag = 'input window, operand 3, single buffered']
    #allocation6 [shape = 's32[1]{0}', space=sflag, size = 0x4, scoped, tag = 'scoped memory for tpu_custom_call.1']
    #allocation7 [shape = 'u8[8192]{0}', space=vmem, size = 0x2000, scoped, tag = 'input window, operand 5, single buffered']
    #allocation8 [shape = 'u8[8192]{0}', space=vmem, size = 0x2000, scoped, tag = 'input window, operand 6, single buffered']
    #allocation9 [shape = 's32[1]{0}', space=sflag, size = 0x4, scoped, tag = 'scoped memory for tpu_custom_call.1']
    #allocation10 [shape = 'u8[8192]{0}', space=vmem, size = 0x2000, scoped, tag = 'input window, operand 7, single buffered']
    #allocation11 [shape = 'u8[8192]{0}', space=vmem, size = 0x2000, scoped, tag = 'input window, operand 8, single buffered']
    #allocation12 [shape = 's32[1]{0}', space=sflag, size = 0x4, scoped, tag = 'scoped memory for tpu_custom_call.1']
    #allocation13 [shape = 'u8[8192]{0}', space=vmem, size = 0x2000, scoped, tag = 'input window, operand 9, single buffered']
    #allocation14 [shape = 'u8[8192]{0}', space=vmem, size = 0x2000, scoped, tag = 'output window, operand 0, single buffered']
    #allocation15 [shape = 'u8[16384]{0}', space=vmem, size = 0x4000, scoped, tag = 'output window, operand 1, single buffered']
    #allocation16 [shape = 's32[1]{0}', space=sflag, size = 0x4, scoped, tag = 'scoped memory for tpu_custom_call.1']
    #allocation17 [shape = 'u8[16384]{0}', space=vmem, size = 0x4000, scoped, tag = 'output window, operand 2, single buffered']
    %22 = vsyncpa [#allocation3], 0
    %23 = vsyncpa [#allocation6], 0
    %24 = vsyncpa [#allocation9], 0
    %25 = vsyncpa [#allocation12], 0
    %26 = vsyncpa [#allocation4], 0
    %27 = vsyncpa [#allocation16], 0
    // Predicated region
    $region2: #{tpu_custom_call.1} parent=1 // pred_check
      _
    $region3: #{tpu_custom_call.1} parent=1 // pred_check_branch
      %29 = sbr.rel (0) target = $region5
    $region4: #{tpu_custom_call.1} parent=1 // pred_region
      _
    $region5: #{tpu_custom_call.1} parent=1 // pred_fallthru
      _
    // Predicated region
    $region6: #{tpu_custom_call.1} parent=1 // pred_check
      _
    $region7: #{tpu_custom_call.1} parent=1 // pred_check_branch
      %31 = sbr.rel (0) target = $region9
    $region8: #{tpu_custom_call.1} parent=1 // pred_region
      _
    $region9: #{tpu_custom_call.1} parent=1 // pred_fallthru
      _
    // Predicated region
    $region10: #{tpu_custom_call.1} parent=1 // pred_check
      _
    $region11: #{tpu_custom_call.1} parent=1 // pred_check_branch
      %33 = sbr.rel (0) target = $region13
    $region12: #{tpu_custom_call.1} parent=1 // pred_region
      %35 = vsyncadd [#allocation3], 0
      %s36 = sshll.u32 %s2, 4
      %s37 = int_to_ptr.hbm [resolvable:$true] %s36
      %s38 = sshll.u32 [#allocation2], 4
      %s39 = int_to_ptr.vmem [resolvable:$true] %s38
      %44 = dma.hbm_to_vmem [thread:$0]  %s37, 64, %s39, [#allocation3], 32, 32, 2
    $region13: #{tpu_custom_call.1} parent=1 // pred_fallthru
      _
    // Predicated region
    $region14: #{tpu_custom_call.1} parent=1 // pred_check
      _
    $region15: #{tpu_custom_call.1} parent=1 // pred_check_branch
      %46 = sbr.rel (0) target = $region17
    $region16: #{tpu_custom_call.1} parent=1 // pred_region
      %48 = vsyncadd [#allocation6], 0
      %s49 = sshll.u32 %s3, 4
      %s50 = int_to_ptr.hbm [resolvable:$true] %s49
      %s51 = sshll.u32 [#allocation5], 4
      %s52 = int_to_ptr.vmem [resolvable:$true] %s51
      %57 = dma.hbm_to_vmem [thread:$0]  %s50, 64, %s52, [#allocation6], 32, 32, 2
    $region17: #{tpu_custom_call.1} parent=1 // pred_fallthru
      _
    // Predicated region
    $region18: #{tpu_custom_call.1} parent=1 // pred_check
      _
    $region19: #{tpu_custom_call.1} parent=1 // pred_check_branch
      %59 = sbr.rel (0) target = $region21
    $region20: #{tpu_custom_call.1} parent=1 // pred_region
      _
    $region21: #{tpu_custom_call.1} parent=1 // pred_fallthru
      _
    // Predicated region
    $region22: #{tpu_custom_call.1} parent=1 // pred_check
      _
    $region23: #{tpu_custom_call.1} parent=1 // pred_check_branch
      %61 = sbr.rel (0) target = $region25
    $region24: #{tpu_custom_call.1} parent=1 // pred_region
      %63 = vsyncadd [#allocation6], 0
      %s64 = sshll.u32 %s5, 4
      %s65 = int_to_ptr.hbm [resolvable:$true] %s64
      %s66 = sshll.u32 [#allocation7], 4
      %s67 = int_to_ptr.vmem [resolvable:$true] %s66
      %72 = dma.hbm_to_vmem [thread:$0]  %s65, 256, %s67, [#allocation6], 64, 64, 4
    $region25: #{tpu_custom_call.1} parent=1 // pred_fallthru
      _
    // Predicated region
    $region26: #{tpu_custom_call.1} parent=1 // pred_check
      _
    $region27: #{tpu_custom_call.1} parent=1 // pred_check_branch
      %74 = sbr.rel (0) target = $region29
    $region28: #{tpu_custom_call.1} parent=1 // pred_region
      %76 = vsyncadd [#allocation9], 0
      %s77 = sshll.u32 %s6, 4
      %s78 = int_to_ptr.hbm [resolvable:$true] %s77
      %s79 = sshll.u32 [#allocation8], 4
      %s80 = int_to_ptr.vmem [resolvable:$true] %s79
      %85 = dma.hbm_to_vmem [thread:$0]  %s78, 256, %s80, [#allocation9], 64, 64, 4
    $region29: #{tpu_custom_call.1} parent=1 // pred_fallthru
      _
    // Predicated region
    $region30: #{tpu_custom_call.1} parent=1 // pred_check
      _
    $region31: #{tpu_custom_call.1} parent=1 // pred_check_branch
      %87 = sbr.rel (0) target = $region33
    $region32: #{tpu_custom_call.1} parent=1 // pred_region
      %89 = vsyncadd [#allocation9], 0
      %s90 = sshll.u32 %s7, 4
      %s91 = int_to_ptr.hbm [resolvable:$true] %s90
      %s92 = sshll.u32 [#allocation10], 4
      %s93 = int_to_ptr.vmem [resolvable:$true] %s92
      %98 = dma.hbm_to_vmem [thread:$0]  %s91, 256, %s93, [#allocation9], 64, 64, 4
    $region33: #{tpu_custom_call.1} parent=1 // pred_fallthru
      _
    // Predicated region
    $region34: #{tpu_custom_call.1} parent=1 // pred_check
      _
    $region35: #{tpu_custom_call.1} parent=1 // pred_check_branch
      %100 = sbr.rel (0) target = $region37
    $region36: #{tpu_custom_call.1} parent=1 // pred_region
      %102 = vsyncadd [#allocation12], 0
      %s103 = sshll.u32 %s8, 4
      %s104 = int_to_ptr.hbm [resolvable:$true] %s103
      %s105 = sshll.u32 [#allocation11], 4
      %s106 = int_to_ptr.vmem [resolvable:$true] %s105
      %111 = dma.hbm_to_vmem [thread:$0]  %s104, 256, %s106, [#allocation12], 64, 64, 4
    $region37: #{tpu_custom_call.1} parent=1 // pred_fallthru
      _
    // Predicated region
    $region38: #{tpu_custom_call.1} parent=1 // pred_check
      _
    $region39: #{tpu_custom_call.1} parent=1 // pred_check_branch
      %113 = sbr.rel (0) target = $region41
    $region40: #{tpu_custom_call.1} parent=1 // pred_region
      %115 = vsyncadd [#allocation12], 0
      %s116 = sshll.u32 %s9, 4
      %s117 = int_to_ptr.hbm [resolvable:$true] %s116
      %s118 = sshll.u32 [#allocation13], 4
      %s119 = int_to_ptr.vmem [resolvable:$true] %s118
      %124 = dma.hbm_to_vmem [thread:$0]  %s117, 256, %s119, [#allocation12], 64, 64, 4
    $region41: #{tpu_custom_call.1} parent=1 // pred_fallthru
      _
    // Predicated region
    $region42: #{tpu_custom_call.1} parent=1 // pred_check
      _
    $region43: #{tpu_custom_call.1} parent=1 // pred_check_branch
      %126 = sbr.rel (0) target = $region45
    $region44: #{tpu_custom_call.1} parent=1 // pred_region
      _
    $region45: #{tpu_custom_call.1} parent=1 // pred_fallthru
      _
    // Predicated region
    $region46: #{tpu_custom_call.1} parent=1 // pred_check
      _
    $region47: #{tpu_custom_call.1} parent=1 // pred_check_branch
      %128 = sbr.rel (0) target = $region49
    $region48: #{tpu_custom_call.1} parent=1 // pred_region
      _
    $region49: #{tpu_custom_call.1} parent=1 // pred_fallthru
      _
    // Predicated region
    $region50: #{tpu_custom_call.1} parent=1 // pred_check
      _
    $region51: #{tpu_custom_call.1} parent=1 // pred_check_branch
      %130 = sbr.rel (0) target = $region53
    $region52: #{tpu_custom_call.1} parent=1 // pred_region
      _
    $region53: #{tpu_custom_call.1} parent=1 // pred_fallthru
      _
    // Predicated region
    $region54: #{tpu_custom_call.1} parent=1 // pred_check
      _
    $region55: #{tpu_custom_call.1} parent=1 // pred_check_branch
      %132 = sbr.rel (0) target = $region57
    $region56: #{tpu_custom_call.1} parent=1 // pred_region
      _
    $region57: #{tpu_custom_call.1} parent=1 // pred_fallthru
      _
    // Predicated region
    $region58: #{tpu_custom_call.1} parent=1 // pred_check
      _
    $region59: #{tpu_custom_call.1} parent=1 // pred_check_branch
      %134 = sbr.rel (0) target = $region61
    $region60: #{tpu_custom_call.1} parent=1 // pred_region
      %136 = dma.done [#allocation3], 64
    $region61: #{tpu_custom_call.1} parent=1 // pred_fallthru
      _
    // Predicated region
    $region62: #{tpu_custom_call.1} parent=1 // pred_check
      _
    $region63: #{tpu_custom_call.1} parent=1 // pred_check_branch
      %138 = sbr.rel (0) target = $region65
    $region64: #{tpu_custom_call.1} parent=1 // pred_region
      %140 = dma.done [#allocation6], 64
    $region65: #{tpu_custom_call.1} parent=1 // pred_fallthru
      _
    // Predicated region
    $region66: #{tpu_custom_call.1} parent=1 // pred_check
      _
    $region67: #{tpu_custom_call.1} parent=1 // pred_check_branch
      %142 = sbr.rel (0) target = $region69
    $region68: #{tpu_custom_call.1} parent=1 // pred_region
      %144 = dma.done [#allocation6], 256
    $region69: #{tpu_custom_call.1} parent=1 // pred_fallthru
      _
    // Predicated region
    $region70: #{tpu_custom_call.1} parent=1 // pred_check
      _
    $region71: #{tpu_custom_call.1} parent=1 // pred_check_branch
      %146 = sbr.rel (0) target = $region73
    $region72: #{tpu_custom_call.1} parent=1 // pred_region
      %148 = dma.done [#allocation9], 256
    $region73: #{tpu_custom_call.1} parent=1 // pred_fallthru
      _
    // Predicated region
    $region74: #{tpu_custom_call.1} parent=1 // pred_check
      _
    $region75: #{tpu_custom_call.1} parent=1 // pred_check_branch
      %150 = sbr.rel (0) target = $region77
    $region76: #{tpu_custom_call.1} parent=1 // pred_region
      %152 = dma.done [#allocation9], 256
    $region77: #{tpu_custom_call.1} parent=1 // pred_fallthru
      _
    // Predicated region
    $region78: #{tpu_custom_call.1} parent=1 // pred_check
      _
    $region79: #{tpu_custom_call.1} parent=1 // pred_check_branch
      %154 = sbr.rel (0) target = $region81
    $region80: #{tpu_custom_call.1} parent=1 // pred_region
      %156 = dma.done [#allocation12], 256
    $region81: #{tpu_custom_call.1} parent=1 // pred_fallthru
      _
    // Predicated region
    $region82: #{tpu_custom_call.1} parent=1 // pred_check
      _
    $region83: #{tpu_custom_call.1} parent=1 // pred_check_branch
      %158 = sbr.rel (0) target = $region85
    $region84: #{tpu_custom_call.1} parent=1 // pred_region
      %160 = dma.done [#allocation12], 256
    $region85: #{tpu_custom_call.1} parent=1 // pred_fallthru
      _
    %v164 = vld [vmem:[%s0] sm:$0xff]
    %v165 = vld [vmem:[%s0 + $0x8] sm:$0xff]
    %v166 = vld [vmem:[%s1] sm:$0xff]
    %v167 = vld [vmem:[%s1 + $0x8] sm:$0xff]
    %v168 = vld [vmem:[%s11] sm:$0x3f]
    %v169 = vpack.c.bf16 %v165, %v164
    %v170 = vld [vmem:[%s4] sm:$0xf]
    %v171 = vld [vmem:[%s4 + $0x4] sm:$0xf]
    %v172 = vld [vmem:[%s4 + $0x8] sm:$0xf]
    %v173 = vld [vmem:[%s4 + $0xc] sm:$0xf]
    %v178 = vunpack.c.l.b16 %v170
    %v179 = vunpack.c.l.b16 %v171
    %v180 = vunpack.c.l.b16 %v172
    %v181 = vunpack.c.l.b16 %v173
    %v182 = vpack.c.b16 %v179, %v178
    %v183 = vpack.c.b16 %v181, %v180
    %vm186 = vcmask 261120
    %v188 = vsel %vm186, %v169, 0
    %190 = vmatpush.bf16.msra.mxu0 0
    %191 = vmatpush.bf16.msra.mxu0 0
    %192 = vmatpush.bf16.msra.mxu0 0
    %193 = vmatpush.bf16.msra.mxu0 0
    %194 = vmatpush.bf16.msra.mxu0 0
    %195 = vmatpush.bf16.msra.mxu0 0
    %196 = vmatpush.bf16.msra.mxu0 %v183
    %197 = vmatpush.bf16.msra.mxu0 %v182
    %198 = vmatmul.bf16.gmra.mxu0 %v188
    %v199 = vpop.f32.mrf.mxu0
    %v200 = vadd.f32 0.0, %v199
    %v201 = vpop.f32.mrf.mxu0
    %v202 = vadd.f32 0.0, %v201
    %203 = vdwg.mxu0
    %v204 = vmul.f32 %v200, 0.35355338
    %v205 = vmul.f32 %v202, 0.35355338
    %208 = vrot.lane.b32.xlu0 %v204, 120
    %v209 = vpop.permute.xlu0 %208
    %210 = vrot.lane.b32.xlu0 %v205, 120
    %v211 = vpop.permute.xlu0 %210
    %214 = vrot.lane.b32.xlu0 %v204, 112
    %v215 = vpop.permute.xlu0 %214
    %216 = vrot.lane.b32.xlu0 %v205, 112
    %v217 = vpop.permute.xlu0 %216
    %220 = vrot.lane.b32.xlu0 %v204, 104
    %v221 = vpop.permute.xlu0 %220
    %222 = vrot.lane.b32.xlu0 %v205, 104
    %v223 = vpop.permute.xlu0 %222
    %v226 = vrot.slane %v215, 4
    %vm227 = vcmask 1047556
    %v228 = vsel %vm227, %v226, %v204
    %v229 = vrot.slane %v204, 4
    %v230 = vsel %vm227, %v215, %v229
    %v232 = vunpack.c.l.s4 1983009808
    %v233 = vunpack.c.0.s8 %v232
    %v234 = vperm.slane %v228, %v233
    %v236 = vunpack.c.l.s4 1983009808
    %v237 = vunpack.c.0.s8 %v236
    %v238 = vperm.slane %v230, %v237
    %v239 = vrot.slane %v221, 4
    %v240 = vsel %vm227, %v239, %v209
    %v241 = vrot.slane %v209, 4
    %v242 = vsel %vm227, %v221, %v241
    %v244 = vunpack.c.l.s4 1983009808
    %v245 = vunpack.c.0.s8 %v244
    %v246 = vperm.slane %v240, %v245
    %v248 = vunpack.c.l.s4 1983009808
    %v249 = vunpack.c.0.s8 %v248
    %v250 = vperm.slane %v242, %v249
    %v251 = vrot.slane %v246, 4
    %v252 = vsel %vm227, %v251, %v234
    %v253 = vrot.slane %v234, 4
    %v254 = vsel %vm227, %v246, %v253
    %v256 = vunpack.c.l.s4 1934713408
    %v257 = vunpack.c.0.s8 %v256
    %v258 = vperm.slane %v252, %v257
    %v260 = vunpack.c.l.s4 1934713408
    %v261 = vunpack.c.0.s8 %v260
    %v262 = vperm.slane %v254, %v261
    %v263 = vrot.slane %v250, 4
    %v264 = vsel %vm227, %v263, %v238
    %v265 = vrot.slane %v238, 4
    %v266 = vsel %vm227, %v250, %v265
    %v268 = vunpack.c.l.s4 1934713408
    %v269 = vunpack.c.0.s8 %v268
    %v270 = vperm.slane %v264, %v269
    %v272 = vunpack.c.l.s4 1934713408
    %v273 = vunpack.c.0.s8 %v272
    %v274 = vperm.slane %v266, %v273
    %v275 = vrot.slane %v258, 4
    %v276 = vsel %vm227, 0.0, %v275
    %v277 = vrot.slane %v262, 4
    %v278 = vsel %vm227, 0.0, %v277
    %v279 = vrot.slane %v270, 4
    %v280 = vsel %vm227, 0.0, %v279
    %v281 = vrot.slane %v274, 4
    %v282 = vsel %vm227, 0.0, %v281
    %v283 = vrot.slane %v217, 4
    %v284 = vsel %vm227, %v283, %v205
    %v285 = vrot.slane %v205, 4
    %v286 = vsel %vm227, %v217, %v285
    %v288 = vunpack.c.l.s4 1983009808
    %v289 = vunpack.c.0.s8 %v288
    %v290 = vperm.slane %v284, %v289
    %v292 = vunpack.c.l.s4 1983009808
    %v293 = vunpack.c.0.s8 %v292
    %v294 = vperm.slane %v286, %v293
    %v295 = vrot.slane %v223, 4
    %v296 = vsel %vm227, %v295, %v211
    %v297 = vrot.slane %v211, 4
    %v298 = vsel %vm227, %v223, %v297
    %v300 = vunpack.c.l.s4 1983009808
    %v301 = vunpack.c.0.s8 %v300
    %v302 = vperm.slane %v296, %v301
    %v304 = vunpack.c.l.s4 1983009808
    %v305 = vunpack.c.0.s8 %v304
    %v306 = vperm.slane %v298, %v305
    %v307 = vrot.slane %v302, 4
    %v308 = vsel %vm227, %v307, %v290
    %v309 = vrot.slane %v290, 4
    %v310 = vsel %vm227, %v302, %v309
    %v312 = vunpack.c.l.s4 1934713408
    %v313 = vunpack.c.0.s8 %v312
    %v314 = vperm.slane %v308, %v313
    %v316 = vunpack.c.l.s4 1934713408
    %v317 = vunpack.c.0.s8 %v316
    %v318 = vperm.slane %v310, %v317
    %v319 = vrot.slane %v306, 4
    %v320 = vsel %vm227, %v319, %v294
    %v321 = vrot.slane %v294, 4
    %v322 = vsel %vm227, %v306, %v321
    %v324 = vunpack.c.l.s4 1934713408
    %v325 = vunpack.c.0.s8 %v324
    %v326 = vperm.slane %v320, %v325
    %v328 = vunpack.c.l.s4 1934713408
    %v329 = vunpack.c.0.s8 %v328
    %v330 = vperm.slane %v322, %v329
    %v331 = vrot.slane %v314, 4
    %v332 = vsel %vm227, 0.0, %v331
    %v333 = vrot.slane %v318, 4
    %v334 = vsel %vm227, 0.0, %v333
    %v335 = vrot.slane %v326, 4
    %v336 = vsel %vm227, 0.0, %v335
    %v337 = vrot.slane %v330, 4
    %v338 = vsel %vm227, 0.0, %v337
    %v339 = vsel %vm227, %v277, %v258
    %v341 = vunpack.c.l.s4 1983009808
    %v342 = vunpack.c.0.s8 %v341
    %v343 = vperm.slane %v339, %v342
    %v344 = vrot.slane %v278, 4
    %v345 = vsel %vm227, %v344, %v276
    %v347 = vunpack.c.l.s4 1983009808
    %v348 = vunpack.c.0.s8 %v347
    %v349 = vperm.slane %v345, %v348
    %v350 = vsel %vm227, %v281, %v270
    %v352 = vunpack.c.l.s4 1983009808
    %v353 = vunpack.c.0.s8 %v352
    %v354 = vperm.slane %v350, %v353
    %v355 = vrot.slane %v282, 4
    %v356 = vsel %vm227, %v355, %v280
    %v358 = vunpack.c.l.s4 1983009808
    %v359 = vunpack.c.0.s8 %v358
    %v360 = vperm.slane %v356, %v359
    %v361 = vrot.slane %v349, 4
    %v362 = vsel %vm227, %v361, %v343
    %v363 = vrot.slane %v343, 4
    %v364 = vsel %vm227, %v349, %v363
    %v366 = vunpack.c.l.s4 1934713408
    %v367 = vunpack.c.0.s8 %v366
    %v368 = vperm.slane %v362, %v367
    %v370 = vunpack.c.l.s4 1934713408
    %v371 = vunpack.c.0.s8 %v370
    %v372 = vperm.slane %v364, %v371
    %v373 = vrot.slane %v360, 4
    %v374 = vsel %vm227, %v373, %v354
    %v375 = vrot.slane %v354, 4
    %v376 = vsel %vm227, %v360, %v375
    %v378 = vunpack.c.l.s4 1934713408
    %v379 = vunpack.c.0.s8 %v378
    %v380 = vperm.slane %v374, %v379
    %v382 = vunpack.c.l.s4 1934713408
    %v383 = vunpack.c.0.s8 %v382
    %v384 = vperm.slane %v376, %v383
    %v385 = vrot.slane %v380, 4
    %v386 = vsel %vm227, %v385, %v368
    %v387 = vrot.slane %v368, 4
    %v388 = vsel %vm227, %v380, %v387
    %v389 = vrot.slane %v384, 4
    %v390 = vsel %vm227, %v389, %v372
    %v391 = vrot.slane %v372, 4
    %v392 = vsel %vm227, %v384, %v391
    %v393 = vsel %vm227, %v333, %v314
    %v395 = vunpack.c.l.s4 1983009808
    %v396 = vunpack.c.0.s8 %v395
    %v397 = vperm.slane %v393, %v396
    %v398 = vrot.slane %v334, 4
    %v399 = vsel %vm227, %v398, %v332
    %v401 = vunpack.c.l.s4 1983009808
    %v402 = vunpack.c.0.s8 %v401
    %v403 = vperm.slane %v399, %v402
    %v404 = vsel %vm227, %v337, %v326
    %v406 = vunpack.c.l.s4 1983009808
    %v407 = vunpack.c.0.s8 %v406
    %v408 = vperm.slane %v404, %v407
    %v409 = vrot.slane %v338, 4
    %v410 = vsel %vm227, %v409, %v336
    %v412 = vunpack.c.l.s4 1983009808
    %v413 = vunpack.c.0.s8 %v412
    %v414 = vperm.slane %v410, %v413
    %v415 = vrot.slane %v403, 4
    %v416 = vsel %vm227, %v415, %v397
    %v417 = vrot.slane %v397, 4
    %v418 = vsel %vm227, %v403, %v417
    %v420 = vunpack.c.l.s4 1934713408
    %v421 = vunpack.c.0.s8 %v420
    %v422 = vperm.slane %v416, %v421
    %v424 = vunpack.c.l.s4 1934713408
    %v425 = vunpack.c.0.s8 %v424
    %v426 = vperm.slane %v418, %v425
    %v427 = vrot.slane %v414, 4
    %v428 = vsel %vm227, %v427, %v408
    %v429 = vrot.slane %v408, 4
    %v430 = vsel %vm227, %v414, %v429
    %v432 = vunpack.c.l.s4 1934713408
    %v433 = vunpack.c.0.s8 %v432
    %v434 = vperm.slane %v428, %v433
    %v436 = vunpack.c.l.s4 1934713408
    %v437 = vunpack.c.0.s8 %v436
    %v438 = vperm.slane %v430, %v437
    %v439 = vrot.slane %v434, 4
    %v440 = vsel %vm227, %v439, %v422
    %v441 = vrot.slane %v422, 4
    %v442 = vsel %vm227, %v434, %v441
    %v443 = vrot.slane %v438, 4
    %v444 = vsel %vm227, %v443, %v426
    %v445 = vrot.slane %v426, 4
    %v446 = vsel %vm227, %v438, %v445
    %449 = vrot.lane.b32.xlu0 %v200, 120
    %v450 = vpop.permute.xlu0 %449
    %451 = vrot.lane.b32.xlu0 %v202, 120
    %v452 = vpop.permute.xlu0 %451
    %453 = vrot.lane.b32.xlu0 %v200, 112
    %v454 = vpop.permute.xlu0 %453
    %455 = vrot.lane.b32.xlu0 %v202, 112
    %v456 = vpop.permute.xlu0 %455
    %457 = vrot.lane.b32.xlu0 %v200, 104
    %v458 = vpop.permute.xlu0 %457
    %459 = vrot.lane.b32.xlu0 %v202, 104
    %v460 = vpop.permute.xlu0 %459
    %461 = vrot.lane.b32.xlu0 %v200, 96
    %v462 = vpop.permute.xlu0 %461
    %463 = vrot.lane.b32.xlu0 %v202, 96
    %v464 = vpop.permute.xlu0 %463
    %465 = vrot.lane.b32.xlu0 %v450, 96
    %v466 = vpop.permute.xlu0 %465
    %467 = vrot.lane.b32.xlu0 %v452, 96
    %v468 = vpop.permute.xlu0 %467
    %469 = vrot.lane.b32.xlu0 %v454, 96
    %v470 = vpop.permute.xlu0 %469
    %471 = vrot.lane.b32.xlu0 %v456, 96
    %v472 = vpop.permute.xlu0 %471
    %473 = vrot.lane.b32.xlu0 %v458, 96
    %v474 = vpop.permute.xlu0 %473
    %475 = vrot.lane.b32.xlu0 %v460, 96
    %v476 = vpop.permute.xlu0 %475
    %v485 = vrot.slane %v470, 4
    %v486 = vsel %vm227, %v485, %v462
    %v487 = vrot.slane %v462, 4
    %v488 = vsel %vm227, %v470, %v487
    %v490 = vunpack.c.l.s4 1983009808
    %v491 = vunpack.c.0.s8 %v490
    %v492 = vperm.slane %v486, %v491
    %v494 = vunpack.c.l.s4 1983009808
    %v495 = vunpack.c.0.s8 %v494
    %v496 = vperm.slane %v488, %v495
    %v497 = vrot.slane %v474, 4
    %v498 = vsel %vm227, %v497, %v466
    %v499 = vrot.slane %v466, 4
    %v500 = vsel %vm227, %v474, %v499
    %v502 = vunpack.c.l.s4 1983009808
    %v503 = vunpack.c.0.s8 %v502
    %v504 = vperm.slane %v498, %v503
    %v506 = vunpack.c.l.s4 1983009808
    %v507 = vunpack.c.0.s8 %v506
    %v508 = vperm.slane %v500, %v507
    %v509 = vrot.slane %v504, 4
    %v510 = vsel %vm227, %v509, %v492
    %v511 = vrot.slane %v492, 4
    %v512 = vsel %vm227, %v504, %v511
    %v514 = vunpack.c.l.s4 1934713408
    %v515 = vunpack.c.0.s8 %v514
    %v516 = vperm.slane %v510, %v515
    %v518 = vunpack.c.l.s4 1934713408
    %v519 = vunpack.c.0.s8 %v518
    %v520 = vperm.slane %v512, %v519
    %v521 = vrot.slane %v508, 4
    %v522 = vsel %vm227, %v521, %v496
    %v523 = vrot.slane %v496, 4
    %v524 = vsel %vm227, %v508, %v523
    %v526 = vunpack.c.l.s4 1934713408
    %v527 = vunpack.c.0.s8 %v526
    %v528 = vperm.slane %v522, %v527
    %v530 = vunpack.c.l.s4 1934713408
    %v531 = vunpack.c.0.s8 %v530
    %v532 = vperm.slane %v524, %v531
    %v533 = vrot.slane %v516, 4
    %v534 = vsel %vm227, 0.0, %v533
    %v535 = vrot.slane %v520, 4
    %v536 = vsel %vm227, 0.0, %v535
    %v537 = vrot.slane %v528, 4
    %v538 = vsel %vm227, 0.0, %v537
    %v539 = vrot.slane %v532, 4
    %v540 = vsel %vm227, 0.0, %v539
    %v541 = vrot.slane %v472, 4
    %v542 = vsel %vm227, %v541, %v464
    %v543 = vrot.slane %v464, 4
    %v544 = vsel %vm227, %v472, %v543
    %v546 = vunpack.c.l.s4 1983009808
    %v547 = vunpack.c.0.s8 %v546
    %v548 = vperm.slane %v542, %v547
    %v550 = vunpack.c.l.s4 1983009808
    %v551 = vunpack.c.0.s8 %v550
    %v552 = vperm.slane %v544, %v551
    %v553 = vrot.slane %v476, 4
    %v554 = vsel %vm227, %v553, %v468
    %v555 = vrot.slane %v468, 4
    %v556 = vsel %vm227, %v476, %v555
    %v558 = vunpack.c.l.s4 1983009808
    %v559 = vunpack.c.0.s8 %v558
    %v560 = vperm.slane %v554, %v559
    %v562 = vunpack.c.l.s4 1983009808
    %v563 = vunpack.c.0.s8 %v562
    %v564 = vperm.slane %v556, %v563
    %v565 = vrot.slane %v560, 4
    %v566 = vsel %vm227, %v565, %v548
    %v567 = vrot.slane %v548, 4
    %v568 = vsel %vm227, %v560, %v567
    %v570 = vunpack.c.l.s4 1934713408
    %v571 = vunpack.c.0.s8 %v570
    %v572 = vperm.slane %v566, %v571
    %v574 = vunpack.c.l.s4 1934713408
    %v575 = vunpack.c.0.s8 %v574
    %v576 = vperm.slane %v568, %v575
    %v577 = vrot.slane %v564, 4
    %v578 = vsel %vm227, %v577, %v552
    %v579 = vrot.slane %v552, 4
    %v580 = vsel %vm227, %v564, %v579
    %v582 = vunpack.c.l.s4 1934713408
    %v583 = vunpack.c.0.s8 %v582
    %v584 = vperm.slane %v578, %v583
    %v586 = vunpack.c.l.s4 1934713408
    %v587 = vunpack.c.0.s8 %v586
    %v588 = vperm.slane %v580, %v587
    %v589 = vrot.slane %v572, 4
    %v590 = vsel %vm227, 0.0, %v589
    %v591 = vrot.slane %v576, 4
    %v592 = vsel %vm227, 0.0, %v591
    %v593 = vrot.slane %v584, 4
    %v594 = vsel %vm227, 0.0, %v593
    %v595 = vrot.slane %v588, 4
    %v596 = vsel %vm227, 0.0, %v595
    %v597 = vsel %vm227, %v535, %v516
    %v599 = vunpack.c.l.s4 1983009808
    %v600 = vunpack.c.0.s8 %v599
    %v601 = vperm.slane %v597, %v600
    %v602 = vrot.slane %v536, 4
    %v603 = vsel %vm227, %v602, %v534
    %v605 = vunpack.c.l.s4 1983009808
    %v606 = vunpack.c.0.s8 %v605
    %v607 = vperm.slane %v603, %v606
    %v608 = vsel %vm227, %v539, %v528
    %v610 = vunpack.c.l.s4 1983009808
    %v611 = vunpack.c.0.s8 %v610
    %v612 = vperm.slane %v608, %v611
    %v613 = vrot.slane %v540, 4
    %v614 = vsel %vm227, %v613, %v538
    %v616 = vunpack.c.l.s4 1983009808
    %v617 = vunpack.c.0.s8 %v616
    %v618 = vperm.slane %v614, %v617
    %v619 = vrot.slane %v607, 4
    %v620 = vsel %vm227, %v619, %v601
    %v621 = vrot.slane %v601, 4
    %v622 = vsel %vm227, %v607, %v621
    %v624 = vunpack.c.l.s4 1934713408
    %v625 = vunpack.c.0.s8 %v624
    %v626 = vperm.slane %v620, %v625
    %v628 = vunpack.c.l.s4 1934713408
    %v629 = vunpack.c.0.s8 %v628
    %v630 = vperm.slane %v622, %v629
    %v631 = vrot.slane %v618, 4
    %v632 = vsel %vm227, %v631, %v612
    %v633 = vrot.slane %v612, 4
    %v634 = vsel %vm227, %v618, %v633
    %v636 = vunpack.c.l.s4 1934713408
    %v637 = vunpack.c.0.s8 %v636
    %v638 = vperm.slane %v632, %v637
    %v640 = vunpack.c.l.s4 1934713408
    %v641 = vunpack.c.0.s8 %v640
    %v642 = vperm.slane %v634, %v641
    %v643 = vrot.slane %v638, 4
    %v644 = vsel %vm227, %v643, %v626
    %v645 = vrot.slane %v626, 4
    %v646 = vsel %vm227, %v638, %v645
    %v647 = vrot.slane %v642, 4
    %v648 = vsel %vm227, %v647, %v630
    %v649 = vrot.slane %v630, 4
    %v650 = vsel %vm227, %v642, %v649
    %v651 = vsel %vm227, %v591, %v572
    %v653 = vunpack.c.l.s4 1983009808
    %v654 = vunpack.c.0.s8 %v653
    %v655 = vperm.slane %v651, %v654
    %v656 = vrot.slane %v592, 4
    %v657 = vsel %vm227, %v656, %v590
    %v659 = vunpack.c.l.s4 1983009808
    %v660 = vunpack.c.0.s8 %v659
    %v661 = vperm.slane %v657, %v660
    %v662 = vsel %vm227, %v595, %v584
    %v664 = vunpack.c.l.s4 1983009808
    %v665 = vunpack.c.0.s8 %v664
    %v666 = vperm.slane %v662, %v665
    %v667 = vrot.slane %v596, 4
    %v668 = vsel %vm227, %v667, %v594
    %v670 = vunpack.c.l.s4 1983009808
    %v671 = vunpack.c.0.s8 %v670
    %v672 = vperm.slane %v668, %v671
    %v673 = vrot.slane %v661, 4
    %v674 = vsel %vm227, %v673, %v655
    %v675 = vrot.slane %v655, 4
    %v676 = vsel %vm227, %v661, %v675
    %v678 = vunpack.c.l.s4 1934713408
    %v679 = vunpack.c.0.s8 %v678
    %v680 = vperm.slane %v674, %v679
    %v682 = vunpack.c.l.s4 1934713408
    %v683 = vunpack.c.0.s8 %v682
    %v684 = vperm.slane %v676, %v683
    %v685 = vrot.slane %v672, 4
    %v686 = vsel %vm227, %v685, %v666
    %v687 = vrot.slane %v666, 4
    %v688 = vsel %vm227, %v672, %v687
    %v690 = vunpack.c.l.s4 1934713408
    %v691 = vunpack.c.0.s8 %v690
    %v692 = vperm.slane %v686, %v691
    %v694 = vunpack.c.l.s4 1934713408
    %v695 = vunpack.c.0.s8 %v694
    %v696 = vperm.slane %v688, %v695
    %v697 = vrot.slane %v692, 4
    %v698 = vsel %vm227, %v697, %v680
    %v699 = vrot.slane %v680, 4
    %v700 = vsel %vm227, %v692, %v699
    %v701 = vrot.slane %v696, 4
    %v702 = vsel %vm227, %v701, %v684
    %v703 = vrot.slane %v684, 4
    %v704 = vsel %vm227, %v696, %v703
    %705 = vrot.lane.b32.xlu0 %v200, 64
    %v706 = vpop.permute.xlu0 %705
    %707 = vrot.lane.b32.xlu0 %v202, 64
    %v708 = vpop.permute.xlu0 %707
    %709 = vrot.lane.b32.xlu0 %v450, 64
    %v710 = vpop.permute.xlu0 %709
    %711 = vrot.lane.b32.xlu0 %v452, 64
    %v712 = vpop.permute.xlu0 %711
    %713 = vrot.lane.b32.xlu0 %v454, 64
    %v714 = vpop.permute.xlu0 %713
    %715 = vrot.lane.b32.xlu0 %v456, 64
    %v716 = vpop.permute.xlu0 %715
    %717 = vrot.lane.b32.xlu0 %v458, 64
    %v718 = vpop.permute.xlu0 %717
    %719 = vrot.lane.b32.xlu0 %v460, 64
    %v720 = vpop.permute.xlu0 %719
    %v729 = vrot.slane %v714, 4
    %v730 = vsel %vm227, %v729, %v706
    %v731 = vrot.slane %v706, 4
    %v732 = vsel %vm227, %v714, %v731
    %v734 = vunpack.c.l.s4 1983009808
    %v735 = vunpack.c.0.s8 %v734
    %v736 = vperm.slane %v730, %v735
    %v738 = vunpack.c.l.s4 1983009808
    %v739 = vunpack.c.0.s8 %v738
    %v740 = vperm.slane %v732, %v739
    %v741 = vrot.slane %v718, 4
    %v742 = vsel %vm227, %v741, %v710
    %v743 = vrot.slane %v710, 4
    %v744 = vsel %vm227, %v718, %v743
    %v746 = vunpack.c.l.s4 1983009808
    %v747 = vunpack.c.0.s8 %v746
    %v748 = vperm.slane %v742, %v747
    %v750 = vunpack.c.l.s4 1983009808
    %v751 = vunpack.c.0.s8 %v750
    %v752 = vperm.slane %v744, %v751
    %v753 = vrot.slane %v748, 4
    %v754 = vsel %vm227, %v753, %v736
    %v755 = vrot.slane %v736, 4
    %v756 = vsel %vm227, %v748, %v755
    %v758 = vunpack.c.l.s4 1934713408
    %v759 = vunpack.c.0.s8 %v758
    %v760 = vperm.slane %v754, %v759
    %v762 = vunpack.c.l.s4 1934713408
    %v763 = vunpack.c.0.s8 %v762
    %v764 = vperm.slane %v756, %v763
    %v765 = vrot.slane %v752, 4
    %v766 = vsel %vm227, %v765, %v740
    %v767 = vrot.slane %v740, 4
    %v768 = vsel %vm227, %v752, %v767
    %v770 = vunpack.c.l.s4 1934713408
    %v771 = vunpack.c.0.s8 %v770
    %v772 = vperm.slane %v766, %v771
    %v774 = vunpack.c.l.s4 1934713408
    %v775 = vunpack.c.0.s8 %v774
    %v776 = vperm.slane %v768, %v775
    %v777 = vrot.slane %v760, 4
    %v778 = vsel %vm227, 0.0, %v777
    %v779 = vrot.slane %v764, 4
    %v780 = vsel %vm227, 0.0, %v779
    %v781 = vrot.slane %v772, 4
    %v782 = vsel %vm227, 0.0, %v781
    %v783 = vrot.slane %v776, 4
    %v784 = vsel %vm227, 0.0, %v783
    %v785 = vrot.slane %v716, 4
    %v786 = vsel %vm227, %v785, %v708
    %v787 = vrot.slane %v708, 4
    %v788 = vsel %vm227, %v716, %v787
    %v790 = vunpack.c.l.s4 1983009808
    %v791 = vunpack.c.0.s8 %v790
    %v792 = vperm.slane %v786, %v791
    %v794 = vunpack.c.l.s4 1983009808
    %v795 = vunpack.c.0.s8 %v794
    %v796 = vperm.slane %v788, %v795
    %v797 = vrot.slane %v720, 4
    %v798 = vsel %vm227, %v797, %v712
    %v799 = vrot.slane %v712, 4
    %v800 = vsel %vm227, %v720, %v799
    %v802 = vunpack.c.l.s4 1983009808
    %v803 = vunpack.c.0.s8 %v802
    %v804 = vperm.slane %v798, %v803
    %v806 = vunpack.c.l.s4 1983009808
    %v807 = vunpack.c.0.s8 %v806
    %v808 = vperm.slane %v800, %v807
    %v809 = vrot.slane %v804, 4
    %v810 = vsel %vm227, %v809, %v792
    %v811 = vrot.slane %v792, 4
    %v812 = vsel %vm227, %v804, %v811
    %v814 = vunpack.c.l.s4 1934713408
    %v815 = vunpack.c.0.s8 %v814
    %v816 = vperm.slane %v810, %v815
    %v818 = vunpack.c.l.s4 1934713408
    %v819 = vunpack.c.0.s8 %v818
    %v820 = vperm.slane %v812, %v819
    %v821 = vrot.slane %v808, 4
    %v822 = vsel %vm227, %v821, %v796
    %v823 = vrot.slane %v796, 4
    %v824 = vsel %vm227, %v808, %v823
    %v826 = vunpack.c.l.s4 1934713408
    %v827 = vunpack.c.0.s8 %v826
    %v828 = vperm.slane %v822, %v827
    %v830 = vunpack.c.l.s4 1934713408
    %v831 = vunpack.c.0.s8 %v830
    %v832 = vperm.slane %v824, %v831
    %v833 = vrot.slane %v816, 4
    %v834 = vsel %vm227, 0.0, %v833
    %v835 = vrot.slane %v820, 4
    %v836 = vsel %vm227, 0.0, %v835
    %v837 = vrot.slane %v828, 4
    %v838 = vsel %vm227, 0.0, %v837
    %v839 = vrot.slane %v832, 4
    %v840 = vsel %vm227, 0.0, %v839
    %v841 = vsel %vm227, %v779, %v760
    %v843 = vunpack.c.l.s4 1983009808
    %v844 = vunpack.c.0.s8 %v843
    %v845 = vperm.slane %v841, %v844
    %v846 = vrot.slane %v780, 4
    %v847 = vsel %vm227, %v846, %v778
    %v849 = vunpack.c.l.s4 1983009808
    %v850 = vunpack.c.0.s8 %v849
    %v851 = vperm.slane %v847, %v850
    %v852 = vsel %vm227, %v783, %v772
    %v854 = vunpack.c.l.s4 1983009808
    %v855 = vunpack.c.0.s8 %v854
    %v856 = vperm.slane %v852, %v855
    %v857 = vrot.slane %v784, 4
    %v858 = vsel %vm227, %v857, %v782
    %v860 = vunpack.c.l.s4 1983009808
    %v861 = vunpack.c.0.s8 %v860
    %v862 = vperm.slane %v858, %v861
    %v863 = vrot.slane %v851, 4
    %v864 = vsel %vm227, %v863, %v845
    %v865 = vrot.slane %v845, 4
    %v866 = vsel %vm227, %v851, %v865
    %v868 = vunpack.c.l.s4 1934713408
    %v869 = vunpack.c.0.s8 %v868
    %v870 = vperm.slane %v864, %v869
    %v872 = vunpack.c.l.s4 1934713408
    %v873 = vunpack.c.0.s8 %v872
    %v874 = vperm.slane %v866, %v873
    %v875 = vrot.slane %v862, 4
    %v876 = vsel %vm227, %v875, %v856
    %v877 = vrot.slane %v856, 4
    %v878 = vsel %vm227, %v862, %v877
    %v880 = vunpack.c.l.s4 1934713408
    %v881 = vunpack.c.0.s8 %v880
    %v882 = vperm.slane %v876, %v881
    %v884 = vunpack.c.l.s4 1934713408
    %v885 = vunpack.c.0.s8 %v884
    %v886 = vperm.slane %v878, %v885
    %v887 = vrot.slane %v882, 4
    %v888 = vsel %vm227, %v887, %v870
    %v889 = vrot.slane %v870, 4
    %v890 = vsel %vm227, %v882, %v889
    %v891 = vrot.slane %v886, 4
    %v892 = vsel %vm227, %v891, %v874
    %v893 = vrot.slane %v874, 4
    %v894 = vsel %vm227, %v886, %v893
    %v895 = vsel %vm227, %v835, %v816
    %v897 = vunpack.c.l.s4 1983009808
    %v898 = vunpack.c.0.s8 %v897
    %v899 = vperm.slane %v895, %v898
    %v900 = vrot.slane %v836, 4
    %v901 = vsel %vm227, %v900, %v834
    %v903 = vunpack.c.l.s4 1983009808
    %v904 = vunpack.c.0.s8 %v903
    %v905 = vperm.slane %v901, %v904
    %v906 = vsel %vm227, %v839, %v828
    %v908 = vunpack.c.l.s4 1983009808
    %v909 = vunpack.c.0.s8 %v908
    %v910 = vperm.slane %v906, %v909
    %v911 = vrot.slane %v840, 4
    %v912 = vsel %vm227, %v911, %v838
    %v914 = vunpack.c.l.s4 1983009808
    %v915 = vunpack.c.0.s8 %v914
    %v916 = vperm.slane %v912, %v915
    %v917 = vrot.slane %v905, 4
    %v918 = vsel %vm227, %v917, %v899
    %v919 = vrot.slane %v899, 4
    %v920 = vsel %vm227, %v905, %v919
    %v922 = vunpack.c.l.s4 1934713408
    %v923 = vunpack.c.0.s8 %v922
    %v924 = vperm.slane %v918, %v923
    %v926 = vunpack.c.l.s4 1934713408
    %v927 = vunpack.c.0.s8 %v926
    %v928 = vperm.slane %v920, %v927
    %v929 = vrot.slane %v916, 4
    %v930 = vsel %vm227, %v929, %v910
    %v931 = vrot.slane %v910, 4
    %v932 = vsel %vm227, %v916, %v931
    %v934 = vunpack.c.l.s4 1934713408
    %v935 = vunpack.c.0.s8 %v934
    %v936 = vperm.slane %v930, %v935
    %v938 = vunpack.c.l.s4 1934713408
    %v939 = vunpack.c.0.s8 %v938
    %v940 = vperm.slane %v932, %v939
    %v941 = vrot.slane %v936, 4
    %v942 = vsel %vm227, %v941, %v924
    %v943 = vrot.slane %v924, 4
    %v944 = vsel %vm227, %v936, %v943
    %v945 = vrot.slane %v940, 4
    %v946 = vsel %vm227, %v945, %v928
    %v947 = vrot.slane %v928, 4
    %v948 = vsel %vm227, %v940, %v947
    %v949 = vpack.c.bf16 %v386, %v386
    %v950 = vpack.c.bf16 %v440, %v440
    %v951 = vpack.c.bf16 %v388, %v388
    %v952 = vpack.c.bf16 %v442, %v442
    %v953 = vpack.c.bf16 %v390, %v390
    %v954 = vpack.c.bf16 %v444, %v444
    %v955 = vpack.c.bf16 %v392, %v392
    %v956 = vpack.c.bf16 %v446, %v446
    %v957 = vpack.c.bf16 %v644, %v644
    %v958 = vpack.c.bf16 %v698, %v698
    %v959 = vpack.c.bf16 %v646, %v646
    %v960 = vpack.c.bf16 %v700, %v700
    %v961 = vpack.c.bf16 %v648, %v648
    %v962 = vpack.c.bf16 %v702, %v702
    %v963 = vpack.c.bf16 %v650, %v650
    %v964 = vpack.c.bf16 %v704, %v704
    %vm965 = vcmask 64512
    %v967 = vsel %vm965, %v949, 0
    %v970 = vsel %vm965, %v957, 0
    %972 = vmatpush.bf16.xpose.msra.mxu0 0
    %973 = vmatpush.bf16.xpose.msra.mxu0 0
    %974 = vmatpush.bf16.xpose.msra.mxu0 0
    %975 = vmatpush.bf16.xpose.msra.mxu0 0
    %976 = vmatpush.bf16.xpose.msra.mxu0 0
    %977 = vmatpush.bf16.xpose.msra.mxu0 0
    %978 = vmatpush.bf16.xpose.msra.mxu0 0
    %979 = vmatpush.bf16.xpose.msra.mxu0 %v970
    %980 = vmatmul.bf16.gmra.mxu0 %v967
    %v981 = vpop.f32.mrf.mxu0
    %v982 = vadd.f32 0.0, %v981
    %v983 = vpop.f32.mrf.mxu0
    %984 = vdwg.mxu0
    %v986 = vsel %vm965, %v950, 0
    %v989 = vsel %vm965, %v958, 0
    %991 = vmatpush.bf16.xpose.msra.mxu0 0
    %992 = vmatpush.bf16.xpose.msra.mxu0 0
    %993 = vmatpush.bf16.xpose.msra.mxu0 0
    %994 = vmatpush.bf16.xpose.msra.mxu0 0
    %995 = vmatpush.bf16.xpose.msra.mxu0 0
    %996 = vmatpush.bf16.xpose.msra.mxu0 0
    %997 = vmatpush.bf16.xpose.msra.mxu0 0
    %998 = vmatpush.bf16.xpose.msra.mxu0 %v989
    %999 = vmatmul.bf16.gmra.mxu0 %v986
    %v1000 = vpop.f32.mrf.mxu0
    %v1001 = vadd.f32 0.0, %v1000
    %v1002 = vpop.f32.mrf.mxu0
    %1003 = vdwg.mxu0
    %v1005 = vsel %vm965, %v951, 0
    %v1008 = vsel %vm965, %v959, 0
    %1010 = vmatpush.bf16.xpose.msra.mxu0 0
    %1011 = vmatpush.bf16.xpose.msra.mxu0 0
    %1012 = vmatpush.bf16.xpose.msra.mxu0 0
    %1013 = vmatpush.bf16.xpose.msra.mxu0 0
    %1014 = vmatpush.bf16.xpose.msra.mxu0 0
    %1015 = vmatpush.bf16.xpose.msra.mxu0 0
    %1016 = vmatpush.bf16.xpose.msra.mxu0 0
    %1017 = vmatpush.bf16.xpose.msra.mxu0 %v1008
    %1018 = vmatmul.bf16.gmra.mxu0 %v1005
    %v1019 = vpop.f32.mrf.mxu0
    %v1020 = vadd.f32 0.0, %v1019
    %v1021 = vpop.f32.mrf.mxu0
    %1022 = vdwg.mxu0
    %v1024 = vsel %vm965, %v952, 0
    %v1027 = vsel %vm965, %v960, 0
    %1029 = vmatpush.bf16.xpose.msra.mxu0 0
    %1030 = vmatpush.bf16.xpose.msra.mxu0 0
    %1031 = vmatpush.bf16.xpose.msra.mxu0 0
    %1032 = vmatpush.bf16.xpose.msra.mxu0 0
    %1033 = vmatpush.bf16.xpose.msra.mxu0 0
    %1034 = vmatpush.bf16.xpose.msra.mxu0 0
    %1035 = vmatpush.bf16.xpose.msra.mxu0 0
    %1036 = vmatpush.bf16.xpose.msra.mxu0 %v1027
    %1037 = vmatmul.bf16.gmra.mxu0 %v1024
    %v1038 = vpop.f32.mrf.mxu0
    %v1039 = vadd.f32 0.0, %v1038
    %v1040 = vpop.f32.mrf.mxu0
    %1041 = vdwg.mxu0
    %v1043 = vsel %vm965, %v953, 0
    %v1046 = vsel %vm965, %v961, 0
    %1048 = vmatpush.bf16.xpose.msra.mxu0 0
    %1049 = vmatpush.bf16.xpose.msra.mxu0 0
    %1050 = vmatpush.bf16.xpose.msra.mxu0 0
    %1051 = vmatpush.bf16.xpose.msra.mxu0 0
    %1052 = vmatpush.bf16.xpose.msra.mxu0 0
    %1053 = vmatpush.bf16.xpose.msra.mxu0 0
    %1054 = vmatpush.bf16.xpose.msra.mxu0 0
    %1055 = vmatpush.bf16.xpose.msra.mxu0 %v1046
    %1056 = vmatmul.bf16.gmra.mxu0 %v1043
    %v1057 = vpop.f32.mrf.mxu0
    %v1058 = vadd.f32 0.0, %v1057
    %v1059 = vpop.f32.mrf.mxu0
    %1060 = vdwg.mxu0
    %v1062 = vsel %vm965, %v954, 0
    %v1065 = vsel %vm965, %v962, 0
    %1067 = vmatpush.bf16.xpose.msra.mxu0 0
    %1068 = vmatpush.bf16.xpose.msra.mxu0 0
    %1069 = vmatpush.bf16.xpose.msra.mxu0 0
    %1070 = vmatpush.bf16.xpose.msra.mxu0 0
    %1071 = vmatpush.bf16.xpose.msra.mxu0 0
    %1072 = vmatpush.bf16.xpose.msra.mxu0 0
    %1073 = vmatpush.bf16.xpose.msra.mxu0 0
    %1074 = vmatpush.bf16.xpose.msra.mxu0 %v1065
    %1075 = vmatmul.bf16.gmra.mxu0 %v1062
    %v1076 = vpop.f32.mrf.mxu0
    %v1077 = vadd.f32 0.0, %v1076
    %v1078 = vpop.f32.mrf.mxu0
    %1079 = vdwg.mxu0
    %v1081 = vsel %vm965, %v955, 0
    %v1084 = vsel %vm965, %v963, 0
    %1086 = vmatpush.bf16.xpose.msra.mxu0 0
    %1087 = vmatpush.bf16.xpose.msra.mxu0 0
    %1088 = vmatpush.bf16.xpose.msra.mxu0 0
    %1089 = vmatpush.bf16.xpose.msra.mxu0 0
    %1090 = vmatpush.bf16.xpose.msra.mxu0 0
    %1091 = vmatpush.bf16.xpose.msra.mxu0 0
    %1092 = vmatpush.bf16.xpose.msra.mxu0 0
    %1093 = vmatpush.bf16.xpose.msra.mxu0 %v1084
    %1094 = vmatmul.bf16.gmra.mxu0 %v1081
    %v1095 = vpop.f32.mrf.mxu0
    %v1096 = vadd.f32 0.0, %v1095
    %v1097 = vpop.f32.mrf.mxu0
    %1098 = vdwg.mxu0
    %v1100 = vsel %vm965, %v956, 0
    %v1103 = vsel %vm965, %v964, 0
    %1105 = vmatpush.bf16.xpose.msra.mxu0 0
    %1106 = vmatpush.bf16.xpose.msra.mxu0 0
    %1107 = vmatpush.bf16.xpose.msra.mxu0 0
    %1108 = vmatpush.bf16.xpose.msra.mxu0 0
    %1109 = vmatpush.bf16.xpose.msra.mxu0 0
    %1110 = vmatpush.bf16.xpose.msra.mxu0 0
    %1111 = vmatpush.bf16.xpose.msra.mxu0 0
    %1112 = vmatpush.bf16.xpose.msra.mxu0 %v1103
    %1113 = vmatmul.bf16.gmra.mxu0 %v1100
    %v1114 = vpop.f32.mrf.mxu0
    %v1115 = vadd.f32 0.0, %v1114
    %v1116 = vpop.f32.mrf.mxu0
    %1117 = vdwg.mxu0
    %v1118 = vld [vmem:[#allocation2] sm:$0x3]
    %v1119 = vld [vmem:[#allocation2 + $0x2] sm:$0x3]
    %vm1120 = vnez %v1118
    %vm1121 = vnez %v1119
    %v1122 = vsel %vm1120, 16843009, 0
    %v1123 = vsel %vm1121, 16843009, 0
    %v1124 = vunpack.c.0.s8 %v1122
    %v1125 = vunpack.c.0.s8 %v1123
    %vm1126 = vcmp.ne.s32.totalorder %v1124, 0
    %vm1127 = vcmp.ne.s32.totalorder %v1125, 0
    %v1128 = vsel %vm1126, 1, 0
    %v1129 = vsel %vm1127, 1, 0
    %vm1130 = vcmp.eq.s32.totalorder %v1128, 1
    %vm1131 = vcmp.eq.s32.totalorder %v1129, 1
    %v1132 = vsel %vm1130, %v982, -1e+09
    %v1133 = vsel %vm1131, %v1001, -1e+09
    %v1134 = vsel %vm1130, %v1020, -1e+09
    %v1135 = vsel %vm1131, %v1039, -1e+09
    %v1136 = vsel %vm1130, %v1058, -1e+09
    %v1137 = vsel %vm1131, %v1077, -1e+09
    %v1138 = vsel %vm1130, %v1096, -1e+09
    %v1139 = vsel %vm1131, %v1115, -1e+09
    %v1140 = vsel %vm965, %v1132, -inf
    %1141 = vmax.xlane.f32.xlu0 %v1140
    %v1142 = vpop.xlane.xlu0 %1141
    %v1143 = vsel %vm965, %v1133, -inf
    %1144 = vmax.xlane.f32.xlu0 %v1143
    %v1145 = vpop.xlane.xlu0 %1144
    %v1146 = vsel %vm965, %v1134, -inf
    %1147 = vmax.xlane.f32.xlu0 %v1146
    %v1148 = vpop.xlane.xlu0 %1147
    %v1149 = vsel %vm965, %v1135, -inf
    %1150 = vmax.xlane.f32.xlu0 %v1149
    %v1151 = vpop.xlane.xlu0 %1150
    %v1152 = vsel %vm965, %v1136, -inf
    %1153 = vmax.xlane.f32.xlu0 %v1152
    %v1154 = vpop.xlane.xlu0 %1153
    %v1155 = vsel %vm965, %v1137, -inf
    %1156 = vmax.xlane.f32.xlu0 %v1155
    %v1157 = vpop.xlane.xlu0 %1156
    %v1158 = vsel %vm965, %v1138, -inf
    %1159 = vmax.xlane.f32.xlu0 %v1158
    %v1160 = vpop.xlane.xlu0 %1159
    %v1161 = vsel %vm965, %v1139, -inf
    %1162 = vmax.xlane.f32.xlu0 %v1161
    %v1163 = vpop.xlane.xlu0 %1162
    %v1164 = vsub.f32 %v1132, %v1142
    %v1165 = vsub.f32 %v1133, %v1145
    %v1166 = vsub.f32 %v1134, %v1148
    %v1167 = vsub.f32 %v1135, %v1151
    %v1168 = vsub.f32 %v1136, %v1154
    %v1169 = vsub.f32 %v1137, %v1157
    %v1170 = vsub.f32 %v1138, %v1160
    %v1171 = vsub.f32 %v1139, %v1163
    %v1172 = vmul.f32 %v1164, 1.442695
    %v1173 = vpow.pop %v1172
    %v1174 = vmul.f32 %v1165, 1.442695
    %v1175 = vpow.pop %v1174
    %v1176 = vmul.f32 %v1166, 1.442695
    %v1177 = vpow.pop %v1176
    %v1178 = vmul.f32 %v1167, 1.442695
    %v1179 = vpow.pop %v1178
    %v1180 = vmul.f32 %v1168, 1.442695
    %v1181 = vpow.pop %v1180
    %v1182 = vmul.f32 %v1169, 1.442695
    %v1183 = vpow.pop %v1182
    %v1184 = vmul.f32 %v1170, 1.442695
    %v1185 = vpow.pop %v1184
    %v1186 = vmul.f32 %v1171, 1.442695
    %v1187 = vpow.pop %v1186
    %v1188 = vsel %vm965, %v1173, 0.0
    %1189 = vadd.xlane.f32.xlu0 %v1188
    %v1190 = vpop.xlane.xlu0 %1189
    %v1191 = vsel %vm965, %v1175, 0.0
    %1192 = vadd.xlane.f32.xlu0 %v1191
    %v1193 = vpop.xlane.xlu0 %1192
    %v1194 = vsel %vm965, %v1177, 0.0
    %1195 = vadd.xlane.f32.xlu0 %v1194
    %v1196 = vpop.xlane.xlu0 %1195
    %v1197 = vsel %vm965, %v1179, 0.0
    %1198 = vadd.xlane.f32.xlu0 %v1197
    %v1199 = vpop.xlane.xlu0 %1198
    %v1200 = vsel %vm965, %v1181, 0.0
    %1201 = vadd.xlane.f32.xlu0 %v1200
    %v1202 = vpop.xlane.xlu0 %1201
    %v1203 = vsel %vm965, %v1183, 0.0
    %1204 = vadd.xlane.f32.xlu0 %v1203
    %v1205 = vpop.xlane.xlu0 %1204
    %v1206 = vsel %vm965, %v1185, 0.0
    %1207 = vadd.xlane.f32.xlu0 %v1206
    %v1208 = vpop.xlane.xlu0 %1207
    %v1209 = vsel %vm965, %v1187, 0.0
    %1210 = vadd.xlane.f32.xlu0 %v1209
    %v1211 = vpop.xlane.xlu0 %1210
    %v1212 = vrcp.pop %v1190
    %v1213 = vrcp.pop %v1193
    %v1214 = vrcp.pop %v1196
    %v1215 = vrcp.pop %v1199
    %v1216 = vrcp.pop %v1202
    %v1217 = vrcp.pop %v1205
    %v1218 = vrcp.pop %v1208
    %v1219 = vrcp.pop %v1211
    %v1220 = vmul.f32 %v1173, %v1212
    %v1221 = vmul.f32 %v1175, %v1213
    %v1222 = vmul.f32 %v1177, %v1214
    %v1223 = vmul.f32 %v1179, %v1215
    %v1224 = vmul.f32 %v1181, %v1216
    %v1225 = vmul.f32 %v1183, %v1217
    %v1226 = vmul.f32 %v1185, %v1218
    %v1227 = vmul.f32 %v1187, %v1219
    %v1228 = vpack.c.bf16 %v1220, %v1220
    %v1229 = vpack.c.bf16 %v1222, %v1222
    %v1230 = vpack.c.bf16 %v1224, %v1224
    %v1231 = vpack.c.bf16 %v1226, %v1226
    %v1232 = vpack.c.bf16 %v1221, %v1221
    %v1233 = vpack.c.bf16 %v1223, %v1223
    %v1234 = vpack.c.bf16 %v1225, %v1225
    %v1235 = vpack.c.bf16 %v1227, %v1227
    %vm1236 = vcmask 60416
    %1237 = vst.msk [vmem:[#allocation15] sm:$0xf] %vm1236, %v1228
    %1238 = vst.msk [vmem:[#allocation15 + $0x4] sm:$0xf] %vm1236, %v1229
    %1239 = vst.msk [vmem:[#allocation15 + $0x8] sm:$0xf] %vm1236, %v1230
    %1240 = vst.msk [vmem:[#allocation15 + $0xc] sm:$0xf] %vm1236, %v1231
    %1241 = vst.msk [vmem:[#allocation15 + $0x10] sm:$0xf] %vm1236, %v1232
    %1242 = vst.msk [vmem:[#allocation15 + $0x14] sm:$0xf] %vm1236, %v1233
    %1243 = vst.msk [vmem:[#allocation15 + $0x18] sm:$0xf] %vm1236, %v1234
    %1244 = vst.msk [vmem:[#allocation15 + $0x1c] sm:$0xf] %vm1236, %v1235
    %v1245 = vpack.c.bf16 %v888, %v888
    %v1246 = vpack.c.bf16 %v942, %v942
    %v1247 = vpack.c.bf16 %v890, %v890
    %v1248 = vpack.c.bf16 %v944, %v944
    %v1249 = vpack.c.bf16 %v892, %v892
    %v1250 = vpack.c.bf16 %v946, %v946
    %v1251 = vpack.c.bf16 %v894, %v894
    %v1252 = vpack.c.bf16 %v948, %v948
    %v1254 = vsel %vm965, %v1228, 0
    %vm1256 = vcmask 1043456
    %v1258 = vsel %vm1256, %v1245, 0
    %1260 = vmatpush.bf16.msra.mxu0 0
    %1261 = vmatpush.bf16.msra.mxu0 0
    %1262 = vmatpush.bf16.msra.mxu0 0
    %1263 = vmatpush.bf16.msra.mxu0 0
    %1264 = vmatpush.bf16.msra.mxu0 0
    %1265 = vmatpush.bf16.msra.mxu0 0
    %1266 = vmatpush.bf16.msra.mxu0 0
    %1267 = vmatpush.bf16.msra.mxu0 %v1258
    %1268 = vmatmul.bf16.gmra.mxu0 %v1254
    %v1269 = vpop.f32.mrf.mxu0
    %v1270 = vadd.f32 0.0, %v1269
    %v1271 = vpop.f32.mrf.mxu0
    %1272 = vdwg.mxu0
    %v1274 = vsel %vm965, %v1232, 0
    %v1277 = vsel %vm1256, %v1246, 0
    %1279 = vmatpush.bf16.msra.mxu0 0
    %1280 = vmatpush.bf16.msra.mxu0 0
    %1281 = vmatpush.bf16.msra.mxu0 0
    %1282 = vmatpush.bf16.msra.mxu0 0
    %1283 = vmatpush.bf16.msra.mxu0 0
    %1284 = vmatpush.bf16.msra.mxu0 0
    %1285 = vmatpush.bf16.msra.mxu0 0
    %1286 = vmatpush.bf16.msra.mxu0 %v1277
    %1287 = vmatmul.bf16.gmra.mxu0 %v1274
    %v1288 = vpop.f32.mrf.mxu0
    %v1289 = vadd.f32 0.0, %v1288
    %v1290 = vpop.f32.mrf.mxu0
    %1291 = vdwg.mxu0
    %v1293 = vsel %vm965, %v1229, 0
    %v1296 = vsel %vm1256, %v1247, 0
    %1298 = vmatpush.bf16.msra.mxu0 0
    %1299 = vmatpush.bf16.msra.mxu0 0
    %1300 = vmatpush.bf16.msra.mxu0 0
    %1301 = vmatpush.bf16.msra.mxu0 0
    %1302 = vmatpush.bf16.msra.mxu0 0
    %1303 = vmatpush.bf16.msra.mxu0 0
    %1304 = vmatpush.bf16.msra.mxu0 0
    %1305 = vmatpush.bf16.msra.mxu0 %v1296
    %1306 = vmatmul.bf16.gmra.mxu0 %v1293
    %v1307 = vpop.f32.mrf.mxu0
    %v1308 = vadd.f32 0.0, %v1307
    %v1309 = vpop.f32.mrf.mxu0
    %1310 = vdwg.mxu0
    %v1312 = vsel %vm965, %v1233, 0
    %v1315 = vsel %vm1256, %v1248, 0
    %1317 = vmatpush.bf16.msra.mxu0 0
    %1318 = vmatpush.bf16.msra.mxu0 0
    %1319 = vmatpush.bf16.msra.mxu0 0
    %1320 = vmatpush.bf16.msra.mxu0 0
    %1321 = vmatpush.bf16.msra.mxu0 0
    %1322 = vmatpush.bf16.msra.mxu0 0
    %1323 = vmatpush.bf16.msra.mxu0 0
    %1324 = vmatpush.bf16.msra.mxu0 %v1315
    %1325 = vmatmul.bf16.gmra.mxu0 %v1312
    %v1326 = vpop.f32.mrf.mxu0
    %v1327 = vadd.f32 0.0, %v1326
    %v1328 = vpop.f32.mrf.mxu0
    %1329 = vdwg.mxu0
    %v1331 = vsel %vm965, %v1230, 0
    %v1334 = vsel %vm1256, %v1249, 0
    %1336 = vmatpush.bf16.msra.mxu0 0
    %1337 = vmatpush.bf16.msra.mxu0 0
    %1338 = vmatpush.bf16.msra.mxu0 0
    %1339 = vmatpush.bf16.msra.mxu0 0
    %1340 = vmatpush.bf16.msra.mxu0 0
    %1341 = vmatpush.bf16.msra.mxu0 0
    %1342 = vmatpush.bf16.msra.mxu0 0
    %1343 = vmatpush.bf16.msra.mxu0 %v1334
    %1344 = vmatmul.bf16.gmra.mxu0 %v1331
    %v1345 = vpop.f32.mrf.mxu0
    %v1346 = vadd.f32 0.0, %v1345
    %v1347 = vpop.f32.mrf.mxu0
    %1348 = vdwg.mxu0
    %v1350 = vsel %vm965, %v1234, 0
    %v1353 = vsel %vm1256, %v1250, 0
    %1355 = vmatpush.bf16.msra.mxu0 0
    %1356 = vmatpush.bf16.msra.mxu0 0
    %1357 = vmatpush.bf16.msra.mxu0 0
    %1358 = vmatpush.bf16.msra.mxu0 0
    %1359 = vmatpush.bf16.msra.mxu0 0
    %1360 = vmatpush.bf16.msra.mxu0 0
    %1361 = vmatpush.bf16.msra.mxu0 0
    %1362 = vmatpush.bf16.msra.mxu0 %v1353
    %1363 = vmatmul.bf16.gmra.mxu0 %v1350
    %v1364 = vpop.f32.mrf.mxu0
    %v1365 = vadd.f32 0.0, %v1364
    %v1366 = vpop.f32.mrf.mxu0
    %1367 = vdwg.mxu0
    %v1369 = vsel %vm965, %v1231, 0
    %v1372 = vsel %vm1256, %v1251, 0
    %1374 = vmatpush.bf16.msra.mxu0 0
    %1375 = vmatpush.bf16.msra.mxu0 0
    %1376 = vmatpush.bf16.msra.mxu0 0
    %1377 = vmatpush.bf16.msra.mxu0 0
    %1378 = vmatpush.bf16.msra.mxu0 0
    %1379 = vmatpush.bf16.msra.mxu0 0
    %1380 = vmatpush.bf16.msra.mxu0 0
    %1381 = vmatpush.bf16.msra.mxu0 %v1372
    %1382 = vmatmul.bf16.gmra.mxu0 %v1369
    %v1383 = vpop.f32.mrf.mxu0
    %v1384 = vadd.f32 0.0, %v1383
    %v1385 = vpop.f32.mrf.mxu0
    %1386 = vdwg.mxu0
    %v1388 = vsel %vm965, %v1235, 0
    %v1391 = vsel %vm1256, %v1252, 0
    %1393 = vmatpush.bf16.msra.mxu0 0
    %1394 = vmatpush.bf16.msra.mxu0 0
    %1395 = vmatpush.bf16.msra.mxu0 0
    %1396 = vmatpush.bf16.msra.mxu0 0
    %1397 = vmatpush.bf16.msra.mxu0 0
    %1398 = vmatpush.bf16.msra.mxu0 0
    %1399 = vmatpush.bf16.msra.mxu0 0
    %1400 = vmatpush.bf16.msra.mxu0 %v1391
    %1401 = vmatmul.bf16.gmra.mxu0 %v1388
    %v1402 = vpop.f32.mrf.mxu0
    %v1403 = vadd.f32 0.0, %v1402
    %v1404 = vpop.f32.mrf.mxu0
    %1405 = vdwg.mxu0
    %v1406 = vrot.slane %v1346, 4
    %v1407 = vsel %vm227, %v1406, %v1270
    %v1408 = vrot.slane %v1270, 4
    %v1409 = vsel %vm227, %v1346, %v1408
    %v1411 = vunpack.c.l.s4 1983009808
    %v1412 = vunpack.c.0.s8 %v1411
    %v1413 = vperm.slane %v1407, %v1412
    %v1415 = vunpack.c.l.s4 1983009808
    %v1416 = vunpack.c.0.s8 %v1415
    %v1417 = vperm.slane %v1409, %v1416
    %v1418 = vrot.slane %v1384, 4
    %v1419 = vsel %vm227, %v1418, %v1308
    %v1420 = vrot.slane %v1308, 4
    %v1421 = vsel %vm227, %v1384, %v1420
    %v1423 = vunpack.c.l.s4 1983009808
    %v1424 = vunpack.c.0.s8 %v1423
    %v1425 = vperm.slane %v1419, %v1424
    %v1427 = vunpack.c.l.s4 1983009808
    %v1428 = vunpack.c.0.s8 %v1427
    %v1429 = vperm.slane %v1421, %v1428
    %v1430 = vrot.slane %v1425, 4
    %v1431 = vsel %vm227, %v1430, %v1413
    %v1432 = vrot.slane %v1413, 4
    %v1433 = vsel %vm227, %v1425, %v1432
    %v1435 = vunpack.c.l.s4 1934713408
    %v1436 = vunpack.c.0.s8 %v1435
    %v1437 = vperm.slane %v1431, %v1436
    %v1439 = vunpack.c.l.s4 1934713408
    %v1440 = vunpack.c.0.s8 %v1439
    %v1441 = vperm.slane %v1433, %v1440
    %v1442 = vrot.slane %v1429, 4
    %v1443 = vsel %vm227, %v1442, %v1417
    %v1444 = vrot.slane %v1417, 4
    %v1445 = vsel %vm227, %v1429, %v1444
    %v1447 = vunpack.c.l.s4 1934713408
    %v1448 = vunpack.c.0.s8 %v1447
    %v1449 = vperm.slane %v1443, %v1448
    %v1451 = vunpack.c.l.s4 1934713408
    %v1452 = vunpack.c.0.s8 %v1451
    %v1453 = vperm.slane %v1445, %v1452
    %v1454 = vrot.slane %v1437, 4
    %v1455 = vsel %vm227, 0.0, %v1454
    %v1456 = vrot.slane %v1441, 4
    %v1457 = vsel %vm227, 0.0, %v1456
    %v1458 = vrot.slane %v1449, 4
    %v1459 = vsel %vm227, 0.0, %v1458
    %v1460 = vrot.slane %v1453, 4
    %v1461 = vsel %vm227, 0.0, %v1460
    %v1462 = vrot.slane %v1365, 4
    %v1463 = vsel %vm227, %v1462, %v1289
    %v1464 = vrot.slane %v1289, 4
    %v1465 = vsel %vm227, %v1365, %v1464
    %v1467 = vunpack.c.l.s4 1983009808
    %v1468 = vunpack.c.0.s8 %v1467
    %v1469 = vperm.slane %v1463, %v1468
    %v1471 = vunpack.c.l.s4 1983009808
    %v1472 = vunpack.c.0.s8 %v1471
    %v1473 = vperm.slane %v1465, %v1472
    %v1474 = vrot.slane %v1403, 4
    %v1475 = vsel %vm227, %v1474, %v1327
    %v1476 = vrot.slane %v1327, 4
    %v1477 = vsel %vm227, %v1403, %v1476
    %v1479 = vunpack.c.l.s4 1983009808
    %v1480 = vunpack.c.0.s8 %v1479
    %v1481 = vperm.slane %v1475, %v1480
    %v1483 = vunpack.c.l.s4 1983009808
    %v1484 = vunpack.c.0.s8 %v1483
    %v1485 = vperm.slane %v1477, %v1484
    %v1486 = vrot.slane %v1481, 4
    %v1487 = vsel %vm227, %v1486, %v1469
    %v1488 = vrot.slane %v1469, 4
    %v1489 = vsel %vm227, %v1481, %v1488
    %v1491 = vunpack.c.l.s4 1934713408
    %v1492 = vunpack.c.0.s8 %v1491
    %v1493 = vperm.slane %v1487, %v1492
    %v1495 = vunpack.c.l.s4 1934713408
    %v1496 = vunpack.c.0.s8 %v1495
    %v1497 = vperm.slane %v1489, %v1496
    %v1498 = vrot.slane %v1485, 4
    %v1499 = vsel %vm227, %v1498, %v1473
    %v1500 = vrot.slane %v1473, 4
    %v1501 = vsel %vm227, %v1485, %v1500
    %v1503 = vunpack.c.l.s4 1934713408
    %v1504 = vunpack.c.0.s8 %v1503
    %v1505 = vperm.slane %v1499, %v1504
    %v1507 = vunpack.c.l.s4 1934713408
    %v1508 = vunpack.c.0.s8 %v1507
    %v1509 = vperm.slane %v1501, %v1508
    %v1510 = vrot.slane %v1493, 4
    %v1511 = vsel %vm227, 0.0, %v1510
    %v1512 = vrot.slane %v1497, 4
    %v1513 = vsel %vm227, 0.0, %v1512
    %v1514 = vrot.slane %v1505, 4
    %v1515 = vsel %vm227, 0.0, %v1514
    %v1516 = vrot.slane %v1509, 4
    %v1517 = vsel %vm227, 0.0, %v1516
    %v1518 = vsel %vm227, %v1456, %v1437
    %v1520 = vunpack.c.l.s4 1983009808
    %v1521 = vunpack.c.0.s8 %v1520
    %v1522 = vperm.slane %v1518, %v1521
    %v1523 = vrot.slane %v1457, 4
    %v1524 = vsel %vm227, %v1523, %v1455
    %v1526 = vunpack.c.l.s4 1983009808
    %v1527 = vunpack.c.0.s8 %v1526
    %v1528 = vperm.slane %v1524, %v1527
    %v1529 = vsel %vm227, %v1460, %v1449
    %v1531 = vunpack.c.l.s4 1983009808
    %v1532 = vunpack.c.0.s8 %v1531
    %v1533 = vperm.slane %v1529, %v1532
    %v1534 = vrot.slane %v1461, 4
    %v1535 = vsel %vm227, %v1534, %v1459
    %v1537 = vunpack.c.l.s4 1983009808
    %v1538 = vunpack.c.0.s8 %v1537
    %v1539 = vperm.slane %v1535, %v1538
    %v1540 = vrot.slane %v1528, 4
    %v1541 = vsel %vm227, %v1540, %v1522
    %v1542 = vrot.slane %v1522, 4
    %v1543 = vsel %vm227, %v1528, %v1542
    %v1545 = vunpack.c.l.s4 1934713408
    %v1546 = vunpack.c.0.s8 %v1545
    %v1547 = vperm.slane %v1541, %v1546
    %v1549 = vunpack.c.l.s4 1934713408
    %v1550 = vunpack.c.0.s8 %v1549
    %v1551 = vperm.slane %v1543, %v1550
    %v1552 = vrot.slane %v1539, 4
    %v1553 = vsel %vm227, %v1552, %v1533
    %v1554 = vrot.slane %v1533, 4
    %v1555 = vsel %vm227, %v1539, %v1554
    %v1557 = vunpack.c.l.s4 1934713408
    %v1558 = vunpack.c.0.s8 %v1557
    %v1559 = vperm.slane %v1553, %v1558
    %v1561 = vunpack.c.l.s4 1934713408
    %v1562 = vunpack.c.0.s8 %v1561
    %v1563 = vperm.slane %v1555, %v1562
    %v1564 = vrot.slane %v1559, 4
    %v1565 = vsel %vm227, %v1564, %v1547
    %v1566 = vrot.slane %v1547, 4
    %v1567 = vsel %vm227, %v1559, %v1566
    %v1568 = vrot.slane %v1563, 4
    %v1569 = vsel %vm227, %v1568, %v1551
    %v1570 = vrot.slane %v1551, 4
    %v1571 = vsel %vm227, %v1563, %v1570
    %v1572 = vsel %vm227, %v1512, %v1493
    %v1574 = vunpack.c.l.s4 1983009808
    %v1575 = vunpack.c.0.s8 %v1574
    %v1576 = vperm.slane %v1572, %v1575
    %v1577 = vrot.slane %v1513, 4
    %v1578 = vsel %vm227, %v1577, %v1511
    %v1580 = vunpack.c.l.s4 1983009808
    %v1581 = vunpack.c.0.s8 %v1580
    %v1582 = vperm.slane %v1578, %v1581
    %v1583 = vsel %vm227, %v1516, %v1505
    %v1585 = vunpack.c.l.s4 1983009808
    %v1586 = vunpack.c.0.s8 %v1585
    %v1587 = vperm.slane %v1583, %v1586
    %v1588 = vrot.slane %v1517, 4
    %v1589 = vsel %vm227, %v1588, %v1515
    %v1591 = vunpack.c.l.s4 1983009808
    %v1592 = vunpack.c.0.s8 %v1591
    %v1593 = vperm.slane %v1589, %v1592
    %v1594 = vrot.slane %v1582, 4
    %v1595 = vsel %vm227, %v1594, %v1576
    %v1596 = vrot.slane %v1576, 4
    %v1597 = vsel %vm227, %v1582, %v1596
    %v1599 = vunpack.c.l.s4 1934713408
    %v1600 = vunpack.c.0.s8 %v1599
    %v1601 = vperm.slane %v1595, %v1600
    %v1603 = vunpack.c.l.s4 1934713408
    %v1604 = vunpack.c.0.s8 %v1603
    %v1605 = vperm.slane %v1597, %v1604
    %v1606 = vrot.slane %v1593, 4
    %v1607 = vsel %vm227, %v1606, %v1587
    %v1608 = vrot.slane %v1587, 4
    %v1609 = vsel %vm227, %v1593, %v1608
    %v1611 = vunpack.c.l.s4 1934713408
    %v1612 = vunpack.c.0.s8 %v1611
    %v1613 = vperm.slane %v1607, %v1612
    %v1615 = vunpack.c.l.s4 1934713408
    %v1616 = vunpack.c.0.s8 %v1615
    %v1617 = vperm.slane %v1609, %v1616
    %v1618 = vrot.slane %v1613, 4
    %v1619 = vsel %vm227, %v1618, %v1601
    %v1620 = vrot.slane %v1601, 4
    %v1621 = vsel %vm227, %v1613, %v1620
    %v1622 = vrot.slane %v1617, 4
    %v1623 = vsel %vm227, %v1622, %v1605
    %v1624 = vrot.slane %v1605, 4
    %v1625 = vsel %vm227, %v1617, %v1624
    %1628 = vrot.lane.b32.xlu0 %v1567, 8
    %v1629 = vpop.permute.xlu0 %1628
    %1630 = vrot.lane.b32.xlu0 %v1621, 8
    %v1631 = vpop.permute.xlu0 %1630
    %1636 = vrot.lane.b32.xlu0 %v1569, 16
    %v1637 = vpop.permute.xlu0 %1636
    %1638 = vrot.lane.b32.xlu0 %v1623, 16
    %v1639 = vpop.permute.xlu0 %1638
    %1644 = vrot.lane.b32.xlu0 %v1571, 24
    %v1645 = vpop.permute.xlu0 %1644
    %1646 = vrot.lane.b32.xlu0 %v1625, 24
    %v1647 = vpop.permute.xlu0 %1646
    %v1650 = vsel %vm965, %v1565, %v1629
    %v1651 = vsel %vm965, %v1619, %v1631
    %vm1652 = vcmask 130048
    %v1653 = vsel %vm1652, %v1650, %v1637
    %v1654 = vsel %vm1652, %v1651, %v1639
    %vm1655 = vcmask 195584
    %v1656 = vsel %vm1655, %v1653, %v1645
    %v1657 = vsel %vm1655, %v1654, %v1647
    %v1658 = vpack.c.bf16 %v1657, %v1656
    %v1659 = vld [vmem:[#allocation7] sm:$0xf]
    %v1660 = vld [vmem:[#allocation7 + $0x4] sm:$0xf]
    %v1661 = vld [vmem:[#allocation7 + $0x8] sm:$0xf]
    %v1662 = vld [vmem:[#allocation7 + $0xc] sm:$0xf]
    %v1667 = vunpack.c.l.b16 %v1659
    %v1668 = vunpack.c.l.b16 %v1660
    %v1669 = vunpack.c.l.b16 %v1661
    %v1670 = vunpack.c.l.b16 %v1662
    %v1671 = vpack.c.b16 %v1668, %v1667
    %v1672 = vpack.c.b16 %v1670, %v1669
    %v1676 = vsel %vm186, %v1658, 0
    %1678 = vmatpush.bf16.msra.mxu0 0
    %1679 = vmatpush.bf16.msra.mxu0 0
    %1680 = vmatpush.bf16.msra.mxu0 0
    %1681 = vmatpush.bf16.msra.mxu0 0
    %1682 = vmatpush.bf16.msra.mxu0 0
    %1683 = vmatpush.bf16.msra.mxu0 0
    %1684 = vmatpush.bf16.msra.mxu0 %v1672
    %1685 = vmatpush.bf16.msra.mxu0 %v1671
    %1686 = vmatmul.bf16.gmra.mxu0 %v1676
    %v1687 = vpop.f32.mrf.mxu0
    %v1688 = vadd.f32 %v164, %v1687
    %v1689 = vpop.f32.mrf.mxu0
    %v1690 = vadd.f32 %v165, %v1689
    %1691 = vdwg.mxu0
    %v1692 = vsel %vm186, %v1688, 0.0
    %1693 = vadd.xlane.f32.xlu0 %v1692
    %v1694 = vpop.xlane.xlu0 %1693
    %v1695 = vsel %vm186, %v1690, 0.0
    %1696 = vadd.xlane.f32.xlu0 %v1695
    %v1697 = vpop.xlane.xlu0 %1696
    %v1698 = vrcp.pop 32.0
    %v1699 = vmul.f32 32.0, %v1698
    %v1700 = vsub.f32 1.0, %v1699
    %v1701 = vmul.f32 %v1698, %v1700
    %v1702 = vadd.f32 %v1698, %v1701
    %vm1703 = vweird.f32 %v1698
    %v1704 = vsel %vm1703, %v1698, %v1702
    %v1705 = vmul.f32 %v1694, %v1704
    %v1706 = vmul.f32 %v1697, %v1704
    %v1707 = vsub.f32 %v1688, %v1705
    %v1708 = vsub.f32 %v1690, %v1706
    %v1709 = vmul.f32 %v1707, %v1707
    %v1710 = vmul.f32 %v1708, %v1708
    %v1711 = vsel %vm186, %v1709, 0.0
    %1712 = vadd.xlane.f32.xlu0 %v1711
    %v1713 = vpop.xlane.xlu0 %1712
    %v1714 = vsel %vm186, %v1710, 0.0
    %1715 = vadd.xlane.f32.xlu0 %v1714
    %v1716 = vpop.xlane.xlu0 %1715
    %v1717 = vmul.f32 %v1713, %v1704
    %v1718 = vmul.f32 %v1716, %v1704
    %v1719 = vadd.f32 %v1717, 1e-06
    %v1720 = vadd.f32 %v1718, 1e-06
    %v1721 = vrsqrt.pop %v1719
    %v1722 = vmul.f32 %v1721, %v1719
    %v1723 = vmul.f32 %v1722, %v1721
    %v1724 = vmul.f32 0.5, %v1723
    %v1725 = vsub.f32 1.5, %v1724
    %v1726 = vmul.f32 %v1721, %v1725
    %vm1727 = vweird.f32 %v1719
    %vm1728 = vweird.f32 %v1721
    %vm1729 = vmor %vm1727, %vm1728
    %v1730 = vsel %vm1729, %v1721, %v1726
    %v1731 = vrsqrt.pop %v1720
    %v1732 = vmul.f32 %v1731, %v1720
    %v1733 = vmul.f32 %v1732, %v1731
    %v1734 = vmul.f32 0.5, %v1733
    %v1735 = vsub.f32 1.5, %v1734
    %v1736 = vmul.f32 %v1731, %v1735
    %vm1737 = vweird.f32 %v1720
    %vm1738 = vweird.f32 %v1731
    %vm1739 = vmor %vm1737, %vm1738
    %v1740 = vsel %vm1739, %v1731, %v1736
    %v1741 = vmul.f32 %v1707, %v1730
    %v1742 = vmul.f32 %v1708, %v1740
    %v1743 = vperm.slane %v168, 0
    %v1744 = vmul.f32 %v1741, %v1743
    %v1745 = vmul.f32 %v1742, %v1743
    %v1746 = vperm.slane %v168, 1
    %v1747 = vadd.f32 %v1744, %v1746
    %v1748 = vadd.f32 %v1745, %v1746
    %v1749 = vpack.c.bf16 %v1748, %v1747
    %v1750 = vld [vmem:[#allocation8] sm:$0xf]
    %v1751 = vld [vmem:[#allocation8 + $0x4] sm:$0xf]
    %v1752 = vld [vmem:[#allocation8 + $0x8] sm:$0xf]
    %v1753 = vld [vmem:[#allocation8 + $0xc] sm:$0xf]
    %v1758 = vunpack.c.l.b16 %v1750
    %v1759 = vunpack.c.l.b16 %v1751
    %v1760 = vunpack.c.l.b16 %v1752
    %v1761 = vunpack.c.l.b16 %v1753
    %v1762 = vpack.c.b16 %v1759, %v1758
    %v1763 = vpack.c.b16 %v1761, %v1760
    %v1767 = vsel %vm186, %v1749, 0
    %1769 = vmatpush.bf16.msra.mxu0 0
    %1770 = vmatpush.bf16.msra.mxu0 0
    %1771 = vmatpush.bf16.msra.mxu0 0
    %1772 = vmatpush.bf16.msra.mxu0 0
    %1773 = vmatpush.bf16.msra.mxu0 0
    %1774 = vmatpush.bf16.msra.mxu0 0
    %1775 = vmatpush.bf16.msra.mxu0 %v1763
    %1776 = vmatpush.bf16.msra.mxu0 %v1762
    %1777 = vmatmul.bf16.gmra.mxu0 %v1767
    %v1778 = vpop.f32.mrf.mxu0
    %v1779 = vadd.f32 0.0, %v1778
    %v1780 = vpop.f32.mrf.mxu0
    %v1781 = vadd.f32 0.0, %v1780
    %1782 = vdwg.mxu0
    %v1783 = vmul.f32 %v1779, 0.35355338
    %v1784 = vmul.f32 %v1781, 0.35355338
    %v1785 = vpack.c.bf16 %v167, %v166
    %v1786 = vld [vmem:[#allocation10] sm:$0xf]
    %v1787 = vld [vmem:[#allocation10 + $0x4] sm:$0xf]
    %v1788 = vld [vmem:[#allocation10 + $0x8] sm:$0xf]
    %v1789 = vld [vmem:[#allocation10 + $0xc] sm:$0xf]
    %v1794 = vunpack.c.l.b16 %v1786
    %v1795 = vunpack.c.l.b16 %v1787
    %v1796 = vunpack.c.l.b16 %v1788
    %v1797 = vunpack.c.l.b16 %v1789
    %v1798 = vpack.c.b16 %v1795, %v1794
    %v1799 = vpack.c.b16 %v1797, %v1796
    %v1803 = vsel %vm186, %v1785, 0
    %1805 = vmatpush.bf16.msra.mxu0 0
    %1806 = vmatpush.bf16.msra.mxu0 0
    %1807 = vmatpush.bf16.msra.mxu0 0
    %1808 = vmatpush.bf16.msra.mxu0 0
    %1809 = vmatpush.bf16.msra.mxu0 0
    %1810 = vmatpush.bf16.msra.mxu0 0
    %1811 = vmatpush.bf16.msra.mxu0 %v1799
    %1812 = vmatpush.bf16.msra.mxu0 %v1798
    %1813 = vmatmul.bf16.gmra.mxu0 %v1803
    %v1814 = vpop.f32.mrf.mxu0
    %v1815 = vadd.f32 0.0, %v1814
    %v1816 = vpop.f32.mrf.mxu0
    %v1817 = vadd.f32 0.0, %v1816
    %1818 = vdwg.mxu0
    %1821 = vrot.lane.b32.xlu0 %v1783, 120
    %v1822 = vpop.permute.xlu0 %1821
    %1823 = vrot.lane.b32.xlu0 %v1784, 120
    %v1824 = vpop.permute.xlu0 %1823
    %1827 = vrot.lane.b32.xlu0 %v1783, 112
    %v1828 = vpop.permute.xlu0 %1827
    %1829 = vrot.lane.b32.xlu0 %v1784, 112
    %v1830 = vpop.permute.xlu0 %1829
    %1833 = vrot.lane.b32.xlu0 %v1783, 104
    %v1834 = vpop.permute.xlu0 %1833
    %1835 = vrot.lane.b32.xlu0 %v1784, 104
    %v1836 = vpop.permute.xlu0 %1835
    %v1839 = vrot.slane %v1828, 4
    %v1840 = vsel %vm227, %v1839, %v1783
    %v1841 = vrot.slane %v1783, 4
    %v1842 = vsel %vm227, %v1828, %v1841
    %v1844 = vunpack.c.l.s4 1983009808
    %v1845 = vunpack.c.0.s8 %v1844
    %v1846 = vperm.slane %v1840, %v1845
    %v1848 = vunpack.c.l.s4 1983009808
    %v1849 = vunpack.c.0.s8 %v1848
    %v1850 = vperm.slane %v1842, %v1849
    %v1851 = vrot.slane %v1834, 4
    %v1852 = vsel %vm227, %v1851, %v1822
    %v1853 = vrot.slane %v1822, 4
    %v1854 = vsel %vm227, %v1834, %v1853
    %v1856 = vunpack.c.l.s4 1983009808
    %v1857 = vunpack.c.0.s8 %v1856
    %v1858 = vperm.slane %v1852, %v1857
    %v1860 = vunpack.c.l.s4 1983009808
    %v1861 = vunpack.c.0.s8 %v1860
    %v1862 = vperm.slane %v1854, %v1861
    %v1863 = vrot.slane %v1858, 4
    %v1864 = vsel %vm227, %v1863, %v1846
    %v1865 = vrot.slane %v1846, 4
    %v1866 = vsel %vm227, %v1858, %v1865
    %v1868 = vunpack.c.l.s4 1934713408
    %v1869 = vunpack.c.0.s8 %v1868
    %v1870 = vperm.slane %v1864, %v1869
    %v1872 = vunpack.c.l.s4 1934713408
    %v1873 = vunpack.c.0.s8 %v1872
    %v1874 = vperm.slane %v1866, %v1873
    %v1875 = vrot.slane %v1862, 4
    %v1876 = vsel %vm227, %v1875, %v1850
    %v1877 = vrot.slane %v1850, 4
    %v1878 = vsel %vm227, %v1862, %v1877
    %v1880 = vunpack.c.l.s4 1934713408
    %v1881 = vunpack.c.0.s8 %v1880
    %v1882 = vperm.slane %v1876, %v1881
    %v1884 = vunpack.c.l.s4 1934713408
    %v1885 = vunpack.c.0.s8 %v1884
    %v1886 = vperm.slane %v1878, %v1885
    %v1887 = vrot.slane %v1870, 4
    %v1888 = vsel %vm227, 0.0, %v1887
    %v1889 = vrot.slane %v1874, 4
    %v1890 = vsel %vm227, 0.0, %v1889
    %v1891 = vrot.slane %v1882, 4
    %v1892 = vsel %vm227, 0.0, %v1891
    %v1893 = vrot.slane %v1886, 4
    %v1894 = vsel %vm227, 0.0, %v1893
    %v1895 = vrot.slane %v1830, 4
    %v1896 = vsel %vm227, %v1895, %v1784
    %v1897 = vrot.slane %v1784, 4
    %v1898 = vsel %vm227, %v1830, %v1897
    %v1900 = vunpack.c.l.s4 1983009808
    %v1901 = vunpack.c.0.s8 %v1900
    %v1902 = vperm.slane %v1896, %v1901
    %v1904 = vunpack.c.l.s4 1983009808
    %v1905 = vunpack.c.0.s8 %v1904
    %v1906 = vperm.slane %v1898, %v1905
    %v1907 = vrot.slane %v1836, 4
    %v1908 = vsel %vm227, %v1907, %v1824
    %v1909 = vrot.slane %v1824, 4
    %v1910 = vsel %vm227, %v1836, %v1909
    %v1912 = vunpack.c.l.s4 1983009808
    %v1913 = vunpack.c.0.s8 %v1912
    %v1914 = vperm.slane %v1908, %v1913
    %v1916 = vunpack.c.l.s4 1983009808
    %v1917 = vunpack.c.0.s8 %v1916
    %v1918 = vperm.slane %v1910, %v1917
    %v1919 = vrot.slane %v1914, 4
    %v1920 = vsel %vm227, %v1919, %v1902
    %v1921 = vrot.slane %v1902, 4
    %v1922 = vsel %vm227, %v1914, %v1921
    %v1924 = vunpack.c.l.s4 1934713408
    %v1925 = vunpack.c.0.s8 %v1924
    %v1926 = vperm.slane %v1920, %v1925
    %v1928 = vunpack.c.l.s4 1934713408
    %v1929 = vunpack.c.0.s8 %v1928
    %v1930 = vperm.slane %v1922, %v1929
    %v1931 = vrot.slane %v1918, 4
    %v1932 = vsel %vm227, %v1931, %v1906
    %v1933 = vrot.slane %v1906, 4
    %v1934 = vsel %vm227, %v1918, %v1933
    %v1936 = vunpack.c.l.s4 1934713408
    %v1937 = vunpack.c.0.s8 %v1936
    %v1938 = vperm.slane %v1932, %v1937
    %v1940 = vunpack.c.l.s4 1934713408
    %v1941 = vunpack.c.0.s8 %v1940
    %v1942 = vperm.slane %v1934, %v1941
    %v1943 = vrot.slane %v1926, 4
    %v1944 = vsel %vm227, 0.0, %v1943
    %v1945 = vrot.slane %v1930, 4
    %v1946 = vsel %vm227, 0.0, %v1945
    %v1947 = vrot.slane %v1938, 4
    %v1948 = vsel %vm227, 0.0, %v1947
    %v1949 = vrot.slane %v1942, 4
    %v1950 = vsel %vm227, 0.0, %v1949
    %v1951 = vsel %vm227, %v1889, %v1870
    %v1953 = vunpack.c.l.s4 1983009808
    %v1954 = vunpack.c.0.s8 %v1953
    %v1955 = vperm.slane %v1951, %v1954
    %v1956 = vrot.slane %v1890, 4
    %v1957 = vsel %vm227, %v1956, %v1888
    %v1959 = vunpack.c.l.s4 1983009808
    %v1960 = vunpack.c.0.s8 %v1959
    %v1961 = vperm.slane %v1957, %v1960
    %v1962 = vsel %vm227, %v1893, %v1882
    %v1964 = vunpack.c.l.s4 1983009808
    %v1965 = vunpack.c.0.s8 %v1964
    %v1966 = vperm.slane %v1962, %v1965
    %v1967 = vrot.slane %v1894, 4
    %v1968 = vsel %vm227, %v1967, %v1892
    %v1970 = vunpack.c.l.s4 1983009808
    %v1971 = vunpack.c.0.s8 %v1970
    %v1972 = vperm.slane %v1968, %v1971
    %v1973 = vrot.slane %v1961, 4
    %v1974 = vsel %vm227, %v1973, %v1955
    %v1975 = vrot.slane %v1955, 4
    %v1976 = vsel %vm227, %v1961, %v1975
    %v1978 = vunpack.c.l.s4 1934713408
    %v1979 = vunpack.c.0.s8 %v1978
    %v1980 = vperm.slane %v1974, %v1979
    %v1982 = vunpack.c.l.s4 1934713408
    %v1983 = vunpack.c.0.s8 %v1982
    %v1984 = vperm.slane %v1976, %v1983
    %v1985 = vrot.slane %v1972, 4
    %v1986 = vsel %vm227, %v1985, %v1966
    %v1987 = vrot.slane %v1966, 4
    %v1988 = vsel %vm227, %v1972, %v1987
    %v1990 = vunpack.c.l.s4 1934713408
    %v1991 = vunpack.c.0.s8 %v1990
    %v1992 = vperm.slane %v1986, %v1991
    %v1994 = vunpack.c.l.s4 1934713408
    %v1995 = vunpack.c.0.s8 %v1994
    %v1996 = vperm.slane %v1988, %v1995
    %v1997 = vrot.slane %v1992, 4
    %v1998 = vsel %vm227, %v1997, %v1980
    %v1999 = vrot.slane %v1980, 4
    %v2000 = vsel %vm227, %v1992, %v1999
    %v2001 = vrot.slane %v1996, 4
    %v2002 = vsel %vm227, %v2001, %v1984
    %v2003 = vrot.slane %v1984, 4
    %v2004 = vsel %vm227, %v1996, %v2003
    %v2005 = vsel %vm227, %v1945, %v1926
    %v2007 = vunpack.c.l.s4 1983009808
    %v2008 = vunpack.c.0.s8 %v2007
    %v2009 = vperm.slane %v2005, %v2008
    %v2010 = vrot.slane %v1946, 4
    %v2011 = vsel %vm227, %v2010, %v1944
    %v2013 = vunpack.c.l.s4 1983009808
    %v2014 = vunpack.c.0.s8 %v2013
    %v2015 = vperm.slane %v2011, %v2014
    %v2016 = vsel %vm227, %v1949, %v1938
    %v2018 = vunpack.c.l.s4 1983009808
    %v2019 = vunpack.c.0.s8 %v2018
    %v2020 = vperm.slane %v2016, %v2019
    %v2021 = vrot.slane %v1950, 4
    %v2022 = vsel %vm227, %v2021, %v1948
    %v2024 = vunpack.c.l.s4 1983009808
    %v2025 = vunpack.c.0.s8 %v2024
    %v2026 = vperm.slane %v2022, %v2025
    %v2027 = vrot.slane %v2015, 4
    %v2028 = vsel %vm227, %v2027, %v2009
    %v2029 = vrot.slane %v2009, 4
    %v2030 = vsel %vm227, %v2015, %v2029
    %v2032 = vunpack.c.l.s4 1934713408
    %v2033 = vunpack.c.0.s8 %v2032
    %v2034 = vperm.slane %v2028, %v2033
    %v2036 = vunpack.c.l.s4 1934713408
    %v2037 = vunpack.c.0.s8 %v2036
    %v2038 = vperm.slane %v2030, %v2037
    %v2039 = vrot.slane %v2026, 4
    %v2040 = vsel %vm227, %v2039, %v2020
    %v2041 = vrot.slane %v2020, 4
    %v2042 = vsel %vm227, %v2026, %v2041
    %v2044 = vunpack.c.l.s4 1934713408
    %v2045 = vunpack.c.0.s8 %v2044
    %v2046 = vperm.slane %v2040, %v2045
    %v2048 = vunpack.c.l.s4 1934713408
    %v2049 = vunpack.c.0.s8 %v2048
    %v2050 = vperm.slane %v2042, %v2049
    %v2051 = vrot.slane %v2046, 4
    %v2052 = vsel %vm227, %v2051, %v2034
    %v2053 = vrot.slane %v2034, 4
    %v2054 = vsel %vm227, %v2046, %v2053
    %v2055 = vrot.slane %v2050, 4
    %v2056 = vsel %vm227, %v2055, %v2038
    %v2057 = vrot.slane %v2038, 4
    %v2058 = vsel %vm227, %v2050, %v2057
    %2061 = vrot.lane.b32.xlu0 %v1815, 120
    %v2062 = vpop.permute.xlu0 %2061
    %2063 = vrot.lane.b32.xlu0 %v1817, 120
    %v2064 = vpop.permute.xlu0 %2063
    %2067 = vrot.lane.b32.xlu0 %v1815, 112
    %v2068 = vpop.permute.xlu0 %2067
    %2069 = vrot.lane.b32.xlu0 %v1817, 112
    %v2070 = vpop.permute.xlu0 %2069
    %2073 = vrot.lane.b32.xlu0 %v1815, 104
    %v2074 = vpop.permute.xlu0 %2073
    %2075 = vrot.lane.b32.xlu0 %v1817, 104
    %v2076 = vpop.permute.xlu0 %2075
    %v2079 = vrot.slane %v2068, 4
    %v2080 = vsel %vm227, %v2079, %v1815
    %v2081 = vrot.slane %v1815, 4
    %v2082 = vsel %vm227, %v2068, %v2081
    %v2084 = vunpack.c.l.s4 1983009808
    %v2085 = vunpack.c.0.s8 %v2084
    %v2086 = vperm.slane %v2080, %v2085
    %v2088 = vunpack.c.l.s4 1983009808
    %v2089 = vunpack.c.0.s8 %v2088
    %v2090 = vperm.slane %v2082, %v2089
    %v2091 = vrot.slane %v2074, 4
    %v2092 = vsel %vm227, %v2091, %v2062
    %v2093 = vrot.slane %v2062, 4
    %v2094 = vsel %vm227, %v2074, %v2093
    %v2096 = vunpack.c.l.s4 1983009808
    %v2097 = vunpack.c.0.s8 %v2096
    %v2098 = vperm.slane %v2092, %v2097
    %v2100 = vunpack.c.l.s4 1983009808
    %v2101 = vunpack.c.0.s8 %v2100
    %v2102 = vperm.slane %v2094, %v2101
    %v2103 = vrot.slane %v2098, 4
    %v2104 = vsel %vm227, %v2103, %v2086
    %v2105 = vrot.slane %v2086, 4
    %v2106 = vsel %vm227, %v2098, %v2105
    %v2108 = vunpack.c.l.s4 1934713408
    %v2109 = vunpack.c.0.s8 %v2108
    %v2110 = vperm.slane %v2104, %v2109
    %v2112 = vunpack.c.l.s4 1934713408
    %v2113 = vunpack.c.0.s8 %v2112
    %v2114 = vperm.slane %v2106, %v2113
    %v2115 = vrot.slane %v2102, 4
    %v2116 = vsel %vm227, %v2115, %v2090
    %v2117 = vrot.slane %v2090, 4
    %v2118 = vsel %vm227, %v2102, %v2117
    %v2120 = vunpack.c.l.s4 1934713408
    %v2121 = vunpack.c.0.s8 %v2120
    %v2122 = vperm.slane %v2116, %v2121
    %v2124 = vunpack.c.l.s4 1934713408
    %v2125 = vunpack.c.0.s8 %v2124
    %v2126 = vperm.slane %v2118, %v2125
    %v2127 = vrot.slane %v2110, 4
    %v2128 = vsel %vm227, 0.0, %v2127
    %v2129 = vrot.slane %v2114, 4
    %v2130 = vsel %vm227, 0.0, %v2129
    %v2131 = vrot.slane %v2122, 4
    %v2132 = vsel %vm227, 0.0, %v2131
    %v2133 = vrot.slane %v2126, 4
    %v2134 = vsel %vm227, 0.0, %v2133
    %v2135 = vrot.slane %v2070, 4
    %v2136 = vsel %vm227, %v2135, %v1817
    %v2137 = vrot.slane %v1817, 4
    %v2138 = vsel %vm227, %v2070, %v2137
    %v2140 = vunpack.c.l.s4 1983009808
    %v2141 = vunpack.c.0.s8 %v2140
    %v2142 = vperm.slane %v2136, %v2141
    %v2144 = vunpack.c.l.s4 1983009808
    %v2145 = vunpack.c.0.s8 %v2144
    %v2146 = vperm.slane %v2138, %v2145
    %v2147 = vrot.slane %v2076, 4
    %v2148 = vsel %vm227, %v2147, %v2064
    %v2149 = vrot.slane %v2064, 4
    %v2150 = vsel %vm227, %v2076, %v2149
    %v2152 = vunpack.c.l.s4 1983009808
    %v2153 = vunpack.c.0.s8 %v2152
    %v2154 = vperm.slane %v2148, %v2153
    %v2156 = vunpack.c.l.s4 1983009808
    %v2157 = vunpack.c.0.s8 %v2156
    %v2158 = vperm.slane %v2150, %v2157
    %v2159 = vrot.slane %v2154, 4
    %v2160 = vsel %vm227, %v2159, %v2142
    %v2161 = vrot.slane %v2142, 4
    %v2162 = vsel %vm227, %v2154, %v2161
    %v2164 = vunpack.c.l.s4 1934713408
    %v2165 = vunpack.c.0.s8 %v2164
    %v2166 = vperm.slane %v2160, %v2165
    %v2168 = vunpack.c.l.s4 1934713408
    %v2169 = vunpack.c.0.s8 %v2168
    %v2170 = vperm.slane %v2162, %v2169
    %v2171 = vrot.slane %v2158, 4
    %v2172 = vsel %vm227, %v2171, %v2146
    %v2173 = vrot.slane %v2146, 4
    %v2174 = vsel %vm227, %v2158, %v2173
    %v2176 = vunpack.c.l.s4 1934713408
    %v2177 = vunpack.c.0.s8 %v2176
    %v2178 = vperm.slane %v2172, %v2177
    %v2180 = vunpack.c.l.s4 1934713408
    %v2181 = vunpack.c.0.s8 %v2180
    %v2182 = vperm.slane %v2174, %v2181
    %v2183 = vrot.slane %v2166, 4
    %v2184 = vsel %vm227, 0.0, %v2183
    %v2185 = vrot.slane %v2170, 4
    %v2186 = vsel %vm227, 0.0, %v2185
    %v2187 = vrot.slane %v2178, 4
    %v2188 = vsel %vm227, 0.0, %v2187
    %v2189 = vrot.slane %v2182, 4
    %v2190 = vsel %vm227, 0.0, %v2189
    %v2191 = vsel %vm227, %v2129, %v2110
    %v2193 = vunpack.c.l.s4 1983009808
    %v2194 = vunpack.c.0.s8 %v2193
    %v2195 = vperm.slane %v2191, %v2194
    %v2196 = vrot.slane %v2130, 4
    %v2197 = vsel %vm227, %v2196, %v2128
    %v2199 = vunpack.c.l.s4 1983009808
    %v2200 = vunpack.c.0.s8 %v2199
    %v2201 = vperm.slane %v2197, %v2200
    %v2202 = vsel %vm227, %v2133, %v2122
    %v2204 = vunpack.c.l.s4 1983009808
    %v2205 = vunpack.c.0.s8 %v2204
    %v2206 = vperm.slane %v2202, %v2205
    %v2207 = vrot.slane %v2134, 4
    %v2208 = vsel %vm227, %v2207, %v2132
    %v2210 = vunpack.c.l.s4 1983009808
    %v2211 = vunpack.c.0.s8 %v2210
    %v2212 = vperm.slane %v2208, %v2211
    %v2213 = vrot.slane %v2201, 4
    %v2214 = vsel %vm227, %v2213, %v2195
    %v2215 = vrot.slane %v2195, 4
    %v2216 = vsel %vm227, %v2201, %v2215
    %v2218 = vunpack.c.l.s4 1934713408
    %v2219 = vunpack.c.0.s8 %v2218
    %v2220 = vperm.slane %v2214, %v2219
    %v2222 = vunpack.c.l.s4 1934713408
    %v2223 = vunpack.c.0.s8 %v2222
    %v2224 = vperm.slane %v2216, %v2223
    %v2225 = vrot.slane %v2212, 4
    %v2226 = vsel %vm227, %v2225, %v2206
    %v2227 = vrot.slane %v2206, 4
    %v2228 = vsel %vm227, %v2212, %v2227
    %v2230 = vunpack.c.l.s4 1934713408
    %v2231 = vunpack.c.0.s8 %v2230
    %v2232 = vperm.slane %v2226, %v2231
    %v2234 = vunpack.c.l.s4 1934713408
    %v2235 = vunpack.c.0.s8 %v2234
    %v2236 = vperm.slane %v2228, %v2235
    %v2237 = vrot.slane %v2232, 4
    %v2238 = vsel %vm227, %v2237, %v2220
    %v2239 = vrot.slane %v2220, 4
    %v2240 = vsel %vm227, %v2232, %v2239
    %v2241 = vrot.slane %v2236, 4
    %v2242 = vsel %vm227, %v2241, %v2224
    %v2243 = vrot.slane %v2224, 4
    %v2244 = vsel %vm227, %v2236, %v2243
    %v2245 = vsel %vm227, %v2185, %v2166
    %v2247 = vunpack.c.l.s4 1983009808
    %v2248 = vunpack.c.0.s8 %v2247
    %v2249 = vperm.slane %v2245, %v2248
    %v2250 = vrot.slane %v2186, 4
    %v2251 = vsel %vm227, %v2250, %v2184
    %v2253 = vunpack.c.l.s4 1983009808
    %v2254 = vunpack.c.0.s8 %v2253
    %v2255 = vperm.slane %v2251, %v2254
    %v2256 = vsel %vm227, %v2189, %v2178
    %v2258 = vunpack.c.l.s4 1983009808
    %v2259 = vunpack.c.0.s8 %v2258
    %v2260 = vperm.slane %v2256, %v2259
    %v2261 = vrot.slane %v2190, 4
    %v2262 = vsel %vm227, %v2261, %v2188
    %v2264 = vunpack.c.l.s4 1983009808
    %v2265 = vunpack.c.0.s8 %v2264
    %v2266 = vperm.slane %v2262, %v2265
    %v2267 = vrot.slane %v2255, 4
    %v2268 = vsel %vm227, %v2267, %v2249
    %v2269 = vrot.slane %v2249, 4
    %v2270 = vsel %vm227, %v2255, %v2269
    %v2272 = vunpack.c.l.s4 1934713408
    %v2273 = vunpack.c.0.s8 %v2272
    %v2274 = vperm.slane %v2268, %v2273
    %v2276 = vunpack.c.l.s4 1934713408
    %v2277 = vunpack.c.0.s8 %v2276
    %v2278 = vperm.slane %v2270, %v2277
    %v2279 = vrot.slane %v2266, 4
    %v2280 = vsel %vm227, %v2279, %v2260
    %v2281 = vrot.slane %v2260, 4
    %v2282 = vsel %vm227, %v2266, %v2281
    %v2284 = vunpack.c.l.s4 1934713408
    %v2285 = vunpack.c.0.s8 %v2284
    %v2286 = vperm.slane %v2280, %v2285
    %v2288 = vunpack.c.l.s4 1934713408
    %v2289 = vunpack.c.0.s8 %v2288
    %v2290 = vperm.slane %v2282, %v2289
    %v2291 = vrot.slane %v2286, 4
    %v2292 = vsel %vm227, %v2291, %v2274
    %v2293 = vrot.slane %v2274, 4
    %v2294 = vsel %vm227, %v2286, %v2293
    %v2295 = vrot.slane %v2290, 4
    %v2296 = vsel %vm227, %v2295, %v2278
    %v2297 = vrot.slane %v2278, 4
    %v2298 = vsel %vm227, %v2290, %v2297
    %2299 = vrot.lane.b32.xlu0 %v1815, 96
    %v2300 = vpop.permute.xlu0 %2299
    %2301 = vrot.lane.b32.xlu0 %v1817, 96
    %v2302 = vpop.permute.xlu0 %2301
    %2303 = vrot.lane.b32.xlu0 %v2062, 96
    %v2304 = vpop.permute.xlu0 %2303
    %2305 = vrot.lane.b32.xlu0 %v2064, 96
    %v2306 = vpop.permute.xlu0 %2305
    %2307 = vrot.lane.b32.xlu0 %v2068, 96
    %v2308 = vpop.permute.xlu0 %2307
    %2309 = vrot.lane.b32.xlu0 %v2070, 96
    %v2310 = vpop.permute.xlu0 %2309
    %2311 = vrot.lane.b32.xlu0 %v2074, 96
    %v2312 = vpop.permute.xlu0 %2311
    %2313 = vrot.lane.b32.xlu0 %v2076, 96
    %v2314 = vpop.permute.xlu0 %2313
    %v2323 = vrot.slane %v2308, 4
    %v2324 = vsel %vm227, %v2323, %v2300
    %v2325 = vrot.slane %v2300, 4
    %v2326 = vsel %vm227, %v2308, %v2325
    %v2328 = vunpack.c.l.s4 1983009808
    %v2329 = vunpack.c.0.s8 %v2328
    %v2330 = vperm.slane %v2324, %v2329
    %v2332 = vunpack.c.l.s4 1983009808
    %v2333 = vunpack.c.0.s8 %v2332
    %v2334 = vperm.slane %v2326, %v2333
    %v2335 = vrot.slane %v2312, 4
    %v2336 = vsel %vm227, %v2335, %v2304
    %v2337 = vrot.slane %v2304, 4
    %v2338 = vsel %vm227, %v2312, %v2337
    %v2340 = vunpack.c.l.s4 1983009808
    %v2341 = vunpack.c.0.s8 %v2340
    %v2342 = vperm.slane %v2336, %v2341
    %v2344 = vunpack.c.l.s4 1983009808
    %v2345 = vunpack.c.0.s8 %v2344
    %v2346 = vperm.slane %v2338, %v2345
    %v2347 = vrot.slane %v2342, 4
    %v2348 = vsel %vm227, %v2347, %v2330
    %v2349 = vrot.slane %v2330, 4
    %v2350 = vsel %vm227, %v2342, %v2349
    %v2352 = vunpack.c.l.s4 1934713408
    %v2353 = vunpack.c.0.s8 %v2352
    %v2354 = vperm.slane %v2348, %v2353
    %v2356 = vunpack.c.l.s4 1934713408
    %v2357 = vunpack.c.0.s8 %v2356
    %v2358 = vperm.slane %v2350, %v2357
    %v2359 = vrot.slane %v2346, 4
    %v2360 = vsel %vm227, %v2359, %v2334
    %v2361 = vrot.slane %v2334, 4
    %v2362 = vsel %vm227, %v2346, %v2361
    %v2364 = vunpack.c.l.s4 1934713408
    %v2365 = vunpack.c.0.s8 %v2364
    %v2366 = vperm.slane %v2360, %v2365
    %v2368 = vunpack.c.l.s4 1934713408
    %v2369 = vunpack.c.0.s8 %v2368
    %v2370 = vperm.slane %v2362, %v2369
    %v2371 = vrot.slane %v2354, 4
    %v2372 = vsel %vm227, 0.0, %v2371
    %v2373 = vrot.slane %v2358, 4
    %v2374 = vsel %vm227, 0.0, %v2373
    %v2375 = vrot.slane %v2366, 4
    %v2376 = vsel %vm227, 0.0, %v2375
    %v2377 = vrot.slane %v2370, 4
    %v2378 = vsel %vm227, 0.0, %v2377
    %v2379 = vrot.slane %v2310, 4
    %v2380 = vsel %vm227, %v2379, %v2302
    %v2381 = vrot.slane %v2302, 4
    %v2382 = vsel %vm227, %v2310, %v2381
    %v2384 = vunpack.c.l.s4 1983009808
    %v2385 = vunpack.c.0.s8 %v2384
    %v2386 = vperm.slane %v2380, %v2385
    %v2388 = vunpack.c.l.s4 1983009808
    %v2389 = vunpack.c.0.s8 %v2388
    %v2390 = vperm.slane %v2382, %v2389
    %v2391 = vrot.slane %v2314, 4
    %v2392 = vsel %vm227, %v2391, %v2306
    %v2393 = vrot.slane %v2306, 4
    %v2394 = vsel %vm227, %v2314, %v2393
    %v2396 = vunpack.c.l.s4 1983009808
    %v2397 = vunpack.c.0.s8 %v2396
    %v2398 = vperm.slane %v2392, %v2397
    %v2400 = vunpack.c.l.s4 1983009808
    %v2401 = vunpack.c.0.s8 %v2400
    %v2402 = vperm.slane %v2394, %v2401
    %v2403 = vrot.slane %v2398, 4
    %v2404 = vsel %vm227, %v2403, %v2386
    %v2405 = vrot.slane %v2386, 4
    %v2406 = vsel %vm227, %v2398, %v2405
    %v2408 = vunpack.c.l.s4 1934713408
    %v2409 = vunpack.c.0.s8 %v2408
    %v2410 = vperm.slane %v2404, %v2409
    %v2412 = vunpack.c.l.s4 1934713408
    %v2413 = vunpack.c.0.s8 %v2412
    %v2414 = vperm.slane %v2406, %v2413
    %v2415 = vrot.slane %v2402, 4
    %v2416 = vsel %vm227, %v2415, %v2390
    %v2417 = vrot.slane %v2390, 4
    %v2418 = vsel %vm227, %v2402, %v2417
    %v2420 = vunpack.c.l.s4 1934713408
    %v2421 = vunpack.c.0.s8 %v2420
    %v2422 = vperm.slane %v2416, %v2421
    %v2424 = vunpack.c.l.s4 1934713408
    %v2425 = vunpack.c.0.s8 %v2424
    %v2426 = vperm.slane %v2418, %v2425
    %v2427 = vrot.slane %v2410, 4
    %v2428 = vsel %vm227, 0.0, %v2427
    %v2429 = vrot.slane %v2414, 4
    %v2430 = vsel %vm227, 0.0, %v2429
    %v2431 = vrot.slane %v2422, 4
    %v2432 = vsel %vm227, 0.0, %v2431
    %v2433 = vrot.slane %v2426, 4
    %v2434 = vsel %vm227, 0.0, %v2433
    %v2435 = vsel %vm227, %v2373, %v2354
    %v2437 = vunpack.c.l.s4 1983009808
    %v2438 = vunpack.c.0.s8 %v2437
    %v2439 = vperm.slane %v2435, %v2438
    %v2440 = vrot.slane %v2374, 4
    %v2441 = vsel %vm227, %v2440, %v2372
    %v2443 = vunpack.c.l.s4 1983009808
    %v2444 = vunpack.c.0.s8 %v2443
    %v2445 = vperm.slane %v2441, %v2444
    %v2446 = vsel %vm227, %v2377, %v2366
    %v2448 = vunpack.c.l.s4 1983009808
    %v2449 = vunpack.c.0.s8 %v2448
    %v2450 = vperm.slane %v2446, %v2449
    %v2451 = vrot.slane %v2378, 4
    %v2452 = vsel %vm227, %v2451, %v2376
    %v2454 = vunpack.c.l.s4 1983009808
    %v2455 = vunpack.c.0.s8 %v2454
    %v2456 = vperm.slane %v2452, %v2455
    %v2457 = vrot.slane %v2445, 4
    %v2458 = vsel %vm227, %v2457, %v2439
    %v2459 = vrot.slane %v2439, 4
    %v2460 = vsel %vm227, %v2445, %v2459
    %v2462 = vunpack.c.l.s4 1934713408
    %v2463 = vunpack.c.0.s8 %v2462
    %v2464 = vperm.slane %v2458, %v2463
    %v2466 = vunpack.c.l.s4 1934713408
    %v2467 = vunpack.c.0.s8 %v2466
    %v2468 = vperm.slane %v2460, %v2467
    %v2469 = vrot.slane %v2456, 4
    %v2470 = vsel %vm227, %v2469, %v2450
    %v2471 = vrot.slane %v2450, 4
    %v2472 = vsel %vm227, %v2456, %v2471
    %v2474 = vunpack.c.l.s4 1934713408
    %v2475 = vunpack.c.0.s8 %v2474
    %v2476 = vperm.slane %v2470, %v2475
    %v2478 = vunpack.c.l.s4 1934713408
    %v2479 = vunpack.c.0.s8 %v2478
    %v2480 = vperm.slane %v2472, %v2479
    %v2481 = vrot.slane %v2476, 4
    %v2482 = vsel %vm227, %v2481, %v2464
    %v2483 = vrot.slane %v2464, 4
    %v2484 = vsel %vm227, %v2476, %v2483
    %v2485 = vrot.slane %v2480, 4
    %v2486 = vsel %vm227, %v2485, %v2468
    %v2487 = vrot.slane %v2468, 4
    %v2488 = vsel %vm227, %v2480, %v2487
    %v2489 = vsel %vm227, %v2429, %v2410
    %v2491 = vunpack.c.l.s4 1983009808
    %v2492 = vunpack.c.0.s8 %v2491
    %v2493 = vperm.slane %v2489, %v2492
    %v2494 = vrot.slane %v2430, 4
    %v2495 = vsel %vm227, %v2494, %v2428
    %v2497 = vunpack.c.l.s4 1983009808
    %v2498 = vunpack.c.0.s8 %v2497
    %v2499 = vperm.slane %v2495, %v2498
    %v2500 = vsel %vm227, %v2433, %v2422
    %v2502 = vunpack.c.l.s4 1983009808
    %v2503 = vunpack.c.0.s8 %v2502
    %v2504 = vperm.slane %v2500, %v2503
    %v2505 = vrot.slane %v2434, 4
    %v2506 = vsel %vm227, %v2505, %v2432
    %v2508 = vunpack.c.l.s4 1983009808
    %v2509 = vunpack.c.0.s8 %v2508
    %v2510 = vperm.slane %v2506, %v2509
    %v2511 = vrot.slane %v2499, 4
    %v2512 = vsel %vm227, %v2511, %v2493
    %v2513 = vrot.slane %v2493, 4
    %v2514 = vsel %vm227, %v2499, %v2513
    %v2516 = vunpack.c.l.s4 1934713408
    %v2517 = vunpack.c.0.s8 %v2516
    %v2518 = vperm.slane %v2512, %v2517
    %v2520 = vunpack.c.l.s4 1934713408
    %v2521 = vunpack.c.0.s8 %v2520
    %v2522 = vperm.slane %v2514, %v2521
    %v2523 = vrot.slane %v2510, 4
    %v2524 = vsel %vm227, %v2523, %v2504
    %v2525 = vrot.slane %v2504, 4
    %v2526 = vsel %vm227, %v2510, %v2525
    %v2528 = vunpack.c.l.s4 1934713408
    %v2529 = vunpack.c.0.s8 %v2528
    %v2530 = vperm.slane %v2524, %v2529
    %v2532 = vunpack.c.l.s4 1934713408
    %v2533 = vunpack.c.0.s8 %v2532
    %v2534 = vperm.slane %v2526, %v2533
    %v2535 = vrot.slane %v2530, 4
    %v2536 = vsel %vm227, %v2535, %v2518
    %v2537 = vrot.slane %v2518, 4
    %v2538 = vsel %vm227, %v2530, %v2537
    %v2539 = vrot.slane %v2534, 4
    %v2540 = vsel %vm227, %v2539, %v2522
    %v2541 = vrot.slane %v2522, 4
    %v2542 = vsel %vm227, %v2534, %v2541
    %v2543 = vpack.c.bf16 %v1998, %v1998
    %v2544 = vpack.c.bf16 %v2052, %v2052
    %v2545 = vpack.c.bf16 %v2000, %v2000
    %v2546 = vpack.c.bf16 %v2054, %v2054
    %v2547 = vpack.c.bf16 %v2002, %v2002
    %v2548 = vpack.c.bf16 %v2056, %v2056
    %v2549 = vpack.c.bf16 %v2004, %v2004
    %v2550 = vpack.c.bf16 %v2058, %v2058
    %v2551 = vpack.c.bf16 %v2238, %v2238
    %v2552 = vpack.c.bf16 %v2292, %v2292
    %v2553 = vpack.c.bf16 %v2240, %v2240
    %v2554 = vpack.c.bf16 %v2294, %v2294
    %v2555 = vpack.c.bf16 %v2242, %v2242
    %v2556 = vpack.c.bf16 %v2296, %v2296
    %v2557 = vpack.c.bf16 %v2244, %v2244
    %v2558 = vpack.c.bf16 %v2298, %v2298
    %v2560 = vsel %vm965, %v2543, 0
    %v2563 = vsel %vm965, %v2551, 0
    %2565 = vmatpush.bf16.xpose.msra.mxu0 0
    %2566 = vmatpush.bf16.xpose.msra.mxu0 0
    %2567 = vmatpush.bf16.xpose.msra.mxu0 0
    %2568 = vmatpush.bf16.xpose.msra.mxu0 0
    %2569 = vmatpush.bf16.xpose.msra.mxu0 0
    %2570 = vmatpush.bf16.xpose.msra.mxu0 0
    %2571 = vmatpush.bf16.xpose.msra.mxu0 0
    %2572 = vmatpush.bf16.xpose.msra.mxu0 %v2563
    %2573 = vmatmul.bf16.gmra.mxu0 %v2560
    %v2574 = vpop.f32.mrf.mxu0
    %v2575 = vadd.f32 0.0, %v2574
    %v2576 = vpop.f32.mrf.mxu0
    %2577 = vdwg.mxu0
    %v2579 = vsel %vm965, %v2544, 0
    %v2582 = vsel %vm965, %v2552, 0
    %2584 = vmatpush.bf16.xpose.msra.mxu0 0
    %2585 = vmatpush.bf16.xpose.msra.mxu0 0
    %2586 = vmatpush.bf16.xpose.msra.mxu0 0
    %2587 = vmatpush.bf16.xpose.msra.mxu0 0
    %2588 = vmatpush.bf16.xpose.msra.mxu0 0
    %2589 = vmatpush.bf16.xpose.msra.mxu0 0
    %2590 = vmatpush.bf16.xpose.msra.mxu0 0
    %2591 = vmatpush.bf16.xpose.msra.mxu0 %v2582
    %2592 = vmatmul.bf16.gmra.mxu0 %v2579
    %v2593 = vpop.f32.mrf.mxu0
    %v2594 = vadd.f32 0.0, %v2593
    %v2595 = vpop.f32.mrf.mxu0
    %2596 = vdwg.mxu0
    %v2598 = vsel %vm965, %v2545, 0
    %v2601 = vsel %vm965, %v2553, 0
    %2603 = vmatpush.bf16.xpose.msra.mxu0 0
    %2604 = vmatpush.bf16.xpose.msra.mxu0 0
    %2605 = vmatpush.bf16.xpose.msra.mxu0 0
    %2606 = vmatpush.bf16.xpose.msra.mxu0 0
    %2607 = vmatpush.bf16.xpose.msra.mxu0 0
    %2608 = vmatpush.bf16.xpose.msra.mxu0 0
    %2609 = vmatpush.bf16.xpose.msra.mxu0 0
    %2610 = vmatpush.bf16.xpose.msra.mxu0 %v2601
    %2611 = vmatmul.bf16.gmra.mxu0 %v2598
    %v2612 = vpop.f32.mrf.mxu0
    %v2613 = vadd.f32 0.0, %v2612
    %v2614 = vpop.f32.mrf.mxu0
    %2615 = vdwg.mxu0
    %v2617 = vsel %vm965, %v2546, 0
    %v2620 = vsel %vm965, %v2554, 0
    %2622 = vmatpush.bf16.xpose.msra.mxu0 0
    %2623 = vmatpush.bf16.xpose.msra.mxu0 0
    %2624 = vmatpush.bf16.xpose.msra.mxu0 0
    %2625 = vmatpush.bf16.xpose.msra.mxu0 0
    %2626 = vmatpush.bf16.xpose.msra.mxu0 0
    %2627 = vmatpush.bf16.xpose.msra.mxu0 0
    %2628 = vmatpush.bf16.xpose.msra.mxu0 0
    %2629 = vmatpush.bf16.xpose.msra.mxu0 %v2620
    %2630 = vmatmul.bf16.gmra.mxu0 %v2617
    %v2631 = vpop.f32.mrf.mxu0
    %v2632 = vadd.f32 0.0, %v2631
    %v2633 = vpop.f32.mrf.mxu0
    %2634 = vdwg.mxu0
    %v2636 = vsel %vm965, %v2547, 0
    %v2639 = vsel %vm965, %v2555, 0
    %2641 = vmatpush.bf16.xpose.msra.mxu0 0
    %2642 = vmatpush.bf16.xpose.msra.mxu0 0
    %2643 = vmatpush.bf16.xpose.msra.mxu0 0
    %2644 = vmatpush.bf16.xpose.msra.mxu0 0
    %2645 = vmatpush.bf16.xpose.msra.mxu0 0
    %2646 = vmatpush.bf16.xpose.msra.mxu0 0
    %2647 = vmatpush.bf16.xpose.msra.mxu0 0
    %2648 = vmatpush.bf16.xpose.msra.mxu0 %v2639
    %2649 = vmatmul.bf16.gmra.mxu0 %v2636
    %v2650 = vpop.f32.mrf.mxu0
    %v2651 = vadd.f32 0.0, %v2650
    %v2652 = vpop.f32.mrf.mxu0
    %2653 = vdwg.mxu0
    %v2655 = vsel %vm965, %v2548, 0
    %v2658 = vsel %vm965, %v2556, 0
    %2660 = vmatpush.bf16.xpose.msra.mxu0 0
    %2661 = vmatpush.bf16.xpose.msra.mxu0 0
    %2662 = vmatpush.bf16.xpose.msra.mxu0 0
    %2663 = vmatpush.bf16.xpose.msra.mxu0 0
    %2664 = vmatpush.bf16.xpose.msra.mxu0 0
    %2665 = vmatpush.bf16.xpose.msra.mxu0 0
    %2666 = vmatpush.bf16.xpose.msra.mxu0 0
    %2667 = vmatpush.bf16.xpose.msra.mxu0 %v2658
    %2668 = vmatmul.bf16.gmra.mxu0 %v2655
    %v2669 = vpop.f32.mrf.mxu0
    %v2670 = vadd.f32 0.0, %v2669
    %v2671 = vpop.f32.mrf.mxu0
    %2672 = vdwg.mxu0
    %v2674 = vsel %vm965, %v2549, 0
    %v2677 = vsel %vm965, %v2557, 0
    %2679 = vmatpush.bf16.xpose.msra.mxu0 0
    %2680 = vmatpush.bf16.xpose.msra.mxu0 0
    %2681 = vmatpush.bf16.xpose.msra.mxu0 0
    %2682 = vmatpush.bf16.xpose.msra.mxu0 0
    %2683 = vmatpush.bf16.xpose.msra.mxu0 0
    %2684 = vmatpush.bf16.xpose.msra.mxu0 0
    %2685 = vmatpush.bf16.xpose.msra.mxu0 0
    %2686 = vmatpush.bf16.xpose.msra.mxu0 %v2677
    %2687 = vmatmul.bf16.gmra.mxu0 %v2674
    %v2688 = vpop.f32.mrf.mxu0
    %v2689 = vadd.f32 0.0, %v2688
    %v2690 = vpop.f32.mrf.mxu0
    %2691 = vdwg.mxu0
    %v2693 = vsel %vm965, %v2550, 0
    %v2696 = vsel %vm965, %v2558, 0
    %2698 = vmatpush.bf16.xpose.msra.mxu0 0
    %2699 = vmatpush.bf16.xpose.msra.mxu0 0
    %2700 = vmatpush.bf16.xpose.msra.mxu0 0
    %2701 = vmatpush.bf16.xpose.msra.mxu0 0
    %2702 = vmatpush.bf16.xpose.msra.mxu0 0
    %2703 = vmatpush.bf16.xpose.msra.mxu0 0
    %2704 = vmatpush.bf16.xpose.msra.mxu0 0
    %2705 = vmatpush.bf16.xpose.msra.mxu0 %v2696
    %2706 = vmatmul.bf16.gmra.mxu0 %v2693
    %v2707 = vpop.f32.mrf.mxu0
    %v2708 = vadd.f32 0.0, %v2707
    %v2709 = vpop.f32.mrf.mxu0
    %2710 = vdwg.mxu0
    %v2711 = vld [vmem:[#allocation5] sm:$0x3]
    %v2712 = vld [vmem:[#allocation5 + $0x2] sm:$0x3]
    %vm2713 = vnez %v2711
    %vm2714 = vnez %v2712
    %v2715 = vsel %vm2713, 16843009, 0
    %v2716 = vsel %vm2714, 16843009, 0
    %v2717 = vunpack.c.0.s8 %v2715
    %v2718 = vunpack.c.0.s8 %v2716
    %vm2719 = vcmp.ne.s32.totalorder %v2717, 0
    %vm2720 = vcmp.ne.s32.totalorder %v2718, 0
    %v2721 = vsel %vm2719, 1, 0
    %v2722 = vsel %vm2720, 1, 0
    %vm2723 = vcmp.eq.s32.totalorder %v2721, 1
    %vm2724 = vcmp.eq.s32.totalorder %v2722, 1
    %v2725 = vsel %vm2723, %v2575, -1e+09
    %v2726 = vsel %vm2724, %v2594, -1e+09
    %v2727 = vsel %vm2723, %v2613, -1e+09
    %v2728 = vsel %vm2724, %v2632, -1e+09
    %v2729 = vsel %vm2723, %v2651, -1e+09
    %v2730 = vsel %vm2724, %v2670, -1e+09
    %v2731 = vsel %vm2723, %v2689, -1e+09
    %v2732 = vsel %vm2724, %v2708, -1e+09
    %v2733 = vsel %vm965, %v2725, -inf
    %2734 = vmax.xlane.f32.xlu0 %v2733
    %v2735 = vpop.xlane.xlu0 %2734
    %v2736 = vsel %vm965, %v2726, -inf
    %2737 = vmax.xlane.f32.xlu0 %v2736
    %v2738 = vpop.xlane.xlu0 %2737
    %v2739 = vsel %vm965, %v2727, -inf
    %2740 = vmax.xlane.f32.xlu0 %v2739
    %v2741 = vpop.xlane.xlu0 %2740
    %v2742 = vsel %vm965, %v2728, -inf
    %2743 = vmax.xlane.f32.xlu0 %v2742
    %v2744 = vpop.xlane.xlu0 %2743
    %v2745 = vsel %vm965, %v2729, -inf
    %2746 = vmax.xlane.f32.xlu0 %v2745
    %v2747 = vpop.xlane.xlu0 %2746
    %v2748 = vsel %vm965, %v2730, -inf
    %2749 = vmax.xlane.f32.xlu0 %v2748
    %v2750 = vpop.xlane.xlu0 %2749
    %v2751 = vsel %vm965, %v2731, -inf
    %2752 = vmax.xlane.f32.xlu0 %v2751
    %v2753 = vpop.xlane.xlu0 %2752
    %v2754 = vsel %vm965, %v2732, -inf
    %2755 = vmax.xlane.f32.xlu0 %v2754
    %v2756 = vpop.xlane.xlu0 %2755
    %v2757 = vsub.f32 %v2725, %v2735
    %v2758 = vsub.f32 %v2726, %v2738
    %v2759 = vsub.f32 %v2727, %v2741
    %v2760 = vsub.f32 %v2728, %v2744
    %v2761 = vsub.f32 %v2729, %v2747
    %v2762 = vsub.f32 %v2730, %v2750
    %v2763 = vsub.f32 %v2731, %v2753
    %v2764 = vsub.f32 %v2732, %v2756
    %v2765 = vmul.f32 %v2757, 1.442695
    %v2766 = vpow.pop %v2765
    %v2767 = vmul.f32 %v2758, 1.442695
    %v2768 = vpow.pop %v2767
    %v2769 = vmul.f32 %v2759, 1.442695
    %v2770 = vpow.pop %v2769
    %v2771 = vmul.f32 %v2760, 1.442695
    %v2772 = vpow.pop %v2771
    %v2773 = vmul.f32 %v2761, 1.442695
    %v2774 = vpow.pop %v2773
    %v2775 = vmul.f32 %v2762, 1.442695
    %v2776 = vpow.pop %v2775
    %v2777 = vmul.f32 %v2763, 1.442695
    %v2778 = vpow.pop %v2777
    %v2779 = vmul.f32 %v2764, 1.442695
    %v2780 = vpow.pop %v2779
    %v2781 = vsel %vm965, %v2766, 0.0
    %2782 = vadd.xlane.f32.xlu0 %v2781
    %v2783 = vpop.xlane.xlu0 %2782
    %v2784 = vsel %vm965, %v2768, 0.0
    %2785 = vadd.xlane.f32.xlu0 %v2784
    %v2786 = vpop.xlane.xlu0 %2785
    %v2787 = vsel %vm965, %v2770, 0.0
    %2788 = vadd.xlane.f32.xlu0 %v2787
    %v2789 = vpop.xlane.xlu0 %2788
    %v2790 = vsel %vm965, %v2772, 0.0
    %2791 = vadd.xlane.f32.xlu0 %v2790
    %v2792 = vpop.xlane.xlu0 %2791
    %v2793 = vsel %vm965, %v2774, 0.0
    %2794 = vadd.xlane.f32.xlu0 %v2793
    %v2795 = vpop.xlane.xlu0 %2794
    %v2796 = vsel %vm965, %v2776, 0.0
    %2797 = vadd.xlane.f32.xlu0 %v2796
    %v2798 = vpop.xlane.xlu0 %2797
    %v2799 = vsel %vm965, %v2778, 0.0
    %2800 = vadd.xlane.f32.xlu0 %v2799
    %v2801 = vpop.xlane.xlu0 %2800
    %v2802 = vsel %vm965, %v2780, 0.0
    %2803 = vadd.xlane.f32.xlu0 %v2802
    %v2804 = vpop.xlane.xlu0 %2803
    %v2805 = vrcp.pop %v2783
    %v2806 = vrcp.pop %v2786
    %v2807 = vrcp.pop %v2789
    %v2808 = vrcp.pop %v2792
    %v2809 = vrcp.pop %v2795
    %v2810 = vrcp.pop %v2798
    %v2811 = vrcp.pop %v2801
    %v2812 = vrcp.pop %v2804
    %v2813 = vmul.f32 %v2766, %v2805
    %v2814 = vmul.f32 %v2768, %v2806
    %v2815 = vmul.f32 %v2770, %v2807
    %v2816 = vmul.f32 %v2772, %v2808
    %v2817 = vmul.f32 %v2774, %v2809
    %v2818 = vmul.f32 %v2776, %v2810
    %v2819 = vmul.f32 %v2778, %v2811
    %v2820 = vmul.f32 %v2780, %v2812
    %v2821 = vpack.c.bf16 %v2813, %v2813
    %v2822 = vpack.c.bf16 %v2815, %v2815
    %v2823 = vpack.c.bf16 %v2817, %v2817
    %v2824 = vpack.c.bf16 %v2819, %v2819
    %v2825 = vpack.c.bf16 %v2814, %v2814
    %v2826 = vpack.c.bf16 %v2816, %v2816
    %v2827 = vpack.c.bf16 %v2818, %v2818
    %v2828 = vpack.c.bf16 %v2820, %v2820
    %2829 = vst.msk [vmem:[#allocation17] sm:$0xf] %vm1236, %v2821
    %2830 = vst.msk [vmem:[#allocation17 + $0x4] sm:$0xf] %vm1236, %v2822
    %2831 = vst.msk [vmem:[#allocation17 + $0x8] sm:$0xf] %vm1236, %v2823
    %2832 = vst.msk [vmem:[#allocation17 + $0xc] sm:$0xf] %vm1236, %v2824
    %2833 = vst.msk [vmem:[#allocation17 + $0x10] sm:$0xf] %vm1236, %v2825
    %2834 = vst.msk [vmem:[#allocation17 + $0x14] sm:$0xf] %vm1236, %v2826
    %2835 = vst.msk [vmem:[#allocation17 + $0x18] sm:$0xf] %vm1236, %v2827
    %2836 = vst.msk [vmem:[#allocation17 + $0x1c] sm:$0xf] %vm1236, %v2828
    %v2837 = vpack.c.bf16 %v2482, %v2482
    %v2838 = vpack.c.bf16 %v2536, %v2536
    %v2839 = vpack.c.bf16 %v2484, %v2484
    %v2840 = vpack.c.bf16 %v2538, %v2538
    %v2841 = vpack.c.bf16 %v2486, %v2486
    %v2842 = vpack.c.bf16 %v2540, %v2540
    %v2843 = vpack.c.bf16 %v2488, %v2488
    %v2844 = vpack.c.bf16 %v2542, %v2542
    %v2846 = vsel %vm965, %v2821, 0
    %v2849 = vsel %vm1256, %v2837, 0
    %2851 = vmatpush.bf16.msra.mxu0 0
    %2852 = vmatpush.bf16.msra.mxu0 0
    %2853 = vmatpush.bf16.msra.mxu0 0
    %2854 = vmatpush.bf16.msra.mxu0 0
    %2855 = vmatpush.bf16.msra.mxu0 0
    %2856 = vmatpush.bf16.msra.mxu0 0
    %2857 = vmatpush.bf16.msra.mxu0 0
    %2858 = vmatpush.bf16.msra.mxu0 %v2849
    %2859 = vmatmul.bf16.gmra.mxu0 %v2846
    %v2860 = vpop.f32.mrf.mxu0
    %v2861 = vadd.f32 0.0, %v2860
    %v2862 = vpop.f32.mrf.mxu0
    %2863 = vdwg.mxu0
    %v2865 = vsel %vm965, %v2825, 0
    %v2868 = vsel %vm1256, %v2838, 0
    %2870 = vmatpush.bf16.msra.mxu0 0
    %2871 = vmatpush.bf16.msra.mxu0 0
    %2872 = vmatpush.bf16.msra.mxu0 0
    %2873 = vmatpush.bf16.msra.mxu0 0
    %2874 = vmatpush.bf16.msra.mxu0 0
    %2875 = vmatpush.bf16.msra.mxu0 0
    %2876 = vmatpush.bf16.msra.mxu0 0
    %2877 = vmatpush.bf16.msra.mxu0 %v2868
    %2878 = vmatmul.bf16.gmra.mxu0 %v2865
    %v2879 = vpop.f32.mrf.mxu0
    %v2880 = vadd.f32 0.0, %v2879
    %v2881 = vpop.f32.mrf.mxu0
    %2882 = vdwg.mxu0
    %v2884 = vsel %vm965, %v2822, 0
    %v2887 = vsel %vm1256, %v2839, 0
    %2889 = vmatpush.bf16.msra.mxu0 0
    %2890 = vmatpush.bf16.msra.mxu0 0
    %2891 = vmatpush.bf16.msra.mxu0 0
    %2892 = vmatpush.bf16.msra.mxu0 0
    %2893 = vmatpush.bf16.msra.mxu0 0
    %2894 = vmatpush.bf16.msra.mxu0 0
    %2895 = vmatpush.bf16.msra.mxu0 0
    %2896 = vmatpush.bf16.msra.mxu0 %v2887
    %2897 = vmatmul.bf16.gmra.mxu0 %v2884
    %v2898 = vpop.f32.mrf.mxu0
    %v2899 = vadd.f32 0.0, %v2898
    %v2900 = vpop.f32.mrf.mxu0
    %2901 = vdwg.mxu0
    %v2903 = vsel %vm965, %v2826, 0
    %v2906 = vsel %vm1256, %v2840, 0
    %2908 = vmatpush.bf16.msra.mxu0 0
    %2909 = vmatpush.bf16.msra.mxu0 0
    %2910 = vmatpush.bf16.msra.mxu0 0
    %2911 = vmatpush.bf16.msra.mxu0 0
    %2912 = vmatpush.bf16.msra.mxu0 0
    %2913 = vmatpush.bf16.msra.mxu0 0
    %2914 = vmatpush.bf16.msra.mxu0 0
    %2915 = vmatpush.bf16.msra.mxu0 %v2906
    %2916 = vmatmul.bf16.gmra.mxu0 %v2903
    %v2917 = vpop.f32.mrf.mxu0
    %v2918 = vadd.f32 0.0, %v2917
    %v2919 = vpop.f32.mrf.mxu0
    %2920 = vdwg.mxu0
    %v2922 = vsel %vm965, %v2823, 0
    %v2925 = vsel %vm1256, %v2841, 0
    %2927 = vmatpush.bf16.msra.mxu0 0
    %2928 = vmatpush.bf16.msra.mxu0 0
    %2929 = vmatpush.bf16.msra.mxu0 0
    %2930 = vmatpush.bf16.msra.mxu0 0
    %2931 = vmatpush.bf16.msra.mxu0 0
    %2932 = vmatpush.bf16.msra.mxu0 0
    %2933 = vmatpush.bf16.msra.mxu0 0
    %2934 = vmatpush.bf16.msra.mxu0 %v2925
    %2935 = vmatmul.bf16.gmra.mxu0 %v2922
    %v2936 = vpop.f32.mrf.mxu0
    %v2937 = vadd.f32 0.0, %v2936
    %v2938 = vpop.f32.mrf.mxu0
    %2939 = vdwg.mxu0
    %v2941 = vsel %vm965, %v2827, 0
    %v2944 = vsel %vm1256, %v2842, 0
    %2946 = vmatpush.bf16.msra.mxu0 0
    %2947 = vmatpush.bf16.msra.mxu0 0
    %2948 = vmatpush.bf16.msra.mxu0 0
    %2949 = vmatpush.bf16.msra.mxu0 0
    %2950 = vmatpush.bf16.msra.mxu0 0
    %2951 = vmatpush.bf16.msra.mxu0 0
    %2952 = vmatpush.bf16.msra.mxu0 0
    %2953 = vmatpush.bf16.msra.mxu0 %v2944
    %2954 = vmatmul.bf16.gmra.mxu0 %v2941
    %v2955 = vpop.f32.mrf.mxu0
    %v2956 = vadd.f32 0.0, %v2955
    %v2957 = vpop.f32.mrf.mxu0
    %2958 = vdwg.mxu0
    %v2960 = vsel %vm965, %v2824, 0
    %v2963 = vsel %vm1256, %v2843, 0
    %2965 = vmatpush.bf16.msra.mxu0 0
    %2966 = vmatpush.bf16.msra.mxu0 0
    %2967 = vmatpush.bf16.msra.mxu0 0
    %2968 = vmatpush.bf16.msra.mxu0 0
    %2969 = vmatpush.bf16.msra.mxu0 0
    %2970 = vmatpush.bf16.msra.mxu0 0
    %2971 = vmatpush.bf16.msra.mxu0 0
    %2972 = vmatpush.bf16.msra.mxu0 %v2963
    %2973 = vmatmul.bf16.gmra.mxu0 %v2960
    %v2974 = vpop.f32.mrf.mxu0
    %v2975 = vadd.f32 0.0, %v2974
    %v2976 = vpop.f32.mrf.mxu0
    %2977 = vdwg.mxu0
    %v2979 = vsel %vm965, %v2828, 0
    %v2982 = vsel %vm1256, %v2844, 0
    %2984 = vmatpush.bf16.msra.mxu0 0
    %2985 = vmatpush.bf16.msra.mxu0 0
    %2986 = vmatpush.bf16.msra.mxu0 0
    %2987 = vmatpush.bf16.msra.mxu0 0
    %2988 = vmatpush.bf16.msra.mxu0 0
    %2989 = vmatpush.bf16.msra.mxu0 0
    %2990 = vmatpush.bf16.msra.mxu0 0
    %2991 = vmatpush.bf16.msra.mxu0 %v2982
    %2992 = vmatmul.bf16.gmra.mxu0 %v2979
    %v2993 = vpop.f32.mrf.mxu0
    %v2994 = vadd.f32 0.0, %v2993
    %v2995 = vpop.f32.mrf.mxu0
    %2996 = vdwg.mxu0
    %v2997 = vrot.slane %v2937, 4
    %v2998 = vsel %vm227, %v2997, %v2861
    %v2999 = vrot.slane %v2861, 4
    %v3000 = vsel %vm227, %v2937, %v2999
    %v3002 = vunpack.c.l.s4 1983009808
    %v3003 = vunpack.c.0.s8 %v3002
    %v3004 = vperm.slane %v2998, %v3003
    %v3006 = vunpack.c.l.s4 1983009808
    %v3007 = vunpack.c.0.s8 %v3006
    %v3008 = vperm.slane %v3000, %v3007
    %v3009 = vrot.slane %v2975, 4
    %v3010 = vsel %vm227, %v3009, %v2899
    %v3011 = vrot.slane %v2899, 4
    %v3012 = vsel %vm227, %v2975, %v3011
    %v3014 = vunpack.c.l.s4 1983009808
    %v3015 = vunpack.c.0.s8 %v3014
    %v3016 = vperm.slane %v3010, %v3015
    %v3018 = vunpack.c.l.s4 1983009808
    %v3019 = vunpack.c.0.s8 %v3018
    %v3020 = vperm.slane %v3012, %v3019
    %v3021 = vrot.slane %v3016, 4
    %v3022 = vsel %vm227, %v3021, %v3004
    %v3023 = vrot.slane %v3004, 4
    %v3024 = vsel %vm227, %v3016, %v3023
    %v3026 = vunpack.c.l.s4 1934713408
    %v3027 = vunpack.c.0.s8 %v3026
    %v3028 = vperm.slane %v3022, %v3027
    %v3030 = vunpack.c.l.s4 1934713408
    %v3031 = vunpack.c.0.s8 %v3030
    %v3032 = vperm.slane %v3024, %v3031
    %v3033 = vrot.slane %v3020, 4
    %v3034 = vsel %vm227, %v3033, %v3008
    %v3035 = vrot.slane %v3008, 4
    %v3036 = vsel %vm227, %v3020, %v3035
    %v3038 = vunpack.c.l.s4 1934713408
    %v3039 = vunpack.c.0.s8 %v3038
    %v3040 = vperm.slane %v3034, %v3039
    %v3042 = vunpack.c.l.s4 1934713408
    %v3043 = vunpack.c.0.s8 %v3042
    %v3044 = vperm.slane %v3036, %v3043
    %v3045 = vrot.slane %v3028, 4
    %v3046 = vsel %vm227, 0.0, %v3045
    %v3047 = vrot.slane %v3032, 4
    %v3048 = vsel %vm227, 0.0, %v3047
    %v3049 = vrot.slane %v3040, 4
    %v3050 = vsel %vm227, 0.0, %v3049
    %v3051 = vrot.slane %v3044, 4
    %v3052 = vsel %vm227, 0.0, %v3051
    %v3053 = vrot.slane %v2956, 4
    %v3054 = vsel %vm227, %v3053, %v2880
    %v3055 = vrot.slane %v2880, 4
    %v3056 = vsel %vm227, %v2956, %v3055
    %v3058 = vunpack.c.l.s4 1983009808
    %v3059 = vunpack.c.0.s8 %v3058
    %v3060 = vperm.slane %v3054, %v3059
    %v3062 = vunpack.c.l.s4 1983009808
    %v3063 = vunpack.c.0.s8 %v3062
    %v3064 = vperm.slane %v3056, %v3063
    %v3065 = vrot.slane %v2994, 4
    %v3066 = vsel %vm227, %v3065, %v2918
    %v3067 = vrot.slane %v2918, 4
    %v3068 = vsel %vm227, %v2994, %v3067
    %v3070 = vunpack.c.l.s4 1983009808
    %v3071 = vunpack.c.0.s8 %v3070
    %v3072 = vperm.slane %v3066, %v3071
    %v3074 = vunpack.c.l.s4 1983009808
    %v3075 = vunpack.c.0.s8 %v3074
    %v3076 = vperm.slane %v3068, %v3075
    %v3077 = vrot.slane %v3072, 4
    %v3078 = vsel %vm227, %v3077, %v3060
    %v3079 = vrot.slane %v3060, 4
    %v3080 = vsel %vm227, %v3072, %v3079
    %v3082 = vunpack.c.l.s4 1934713408
    %v3083 = vunpack.c.0.s8 %v3082
    %v3084 = vperm.slane %v3078, %v3083
    %v3086 = vunpack.c.l.s4 1934713408
    %v3087 = vunpack.c.0.s8 %v3086
    %v3088 = vperm.slane %v3080, %v3087
    %v3089 = vrot.slane %v3076, 4
    %v3090 = vsel %vm227, %v3089, %v3064
    %v3091 = vrot.slane %v3064, 4
    %v3092 = vsel %vm227, %v3076, %v3091
    %v3094 = vunpack.c.l.s4 1934713408
    %v3095 = vunpack.c.0.s8 %v3094
    %v3096 = vperm.slane %v3090, %v3095
    %v3098 = vunpack.c.l.s4 1934713408
    %v3099 = vunpack.c.0.s8 %v3098
    %v3100 = vperm.slane %v3092, %v3099
    %v3101 = vrot.slane %v3084, 4
    %v3102 = vsel %vm227, 0.0, %v3101
    %v3103 = vrot.slane %v3088, 4
    %v3104 = vsel %vm227, 0.0, %v3103
    %v3105 = vrot.slane %v3096, 4
    %v3106 = vsel %vm227, 0.0, %v3105
    %v3107 = vrot.slane %v3100, 4
    %v3108 = vsel %vm227, 0.0, %v3107
    %v3109 = vsel %vm227, %v3047, %v3028
    %v3111 = vunpack.c.l.s4 1983009808
    %v3112 = vunpack.c.0.s8 %v3111
    %v3113 = vperm.slane %v3109, %v3112
    %v3114 = vrot.slane %v3048, 4
    %v3115 = vsel %vm227, %v3114, %v3046
    %v3117 = vunpack.c.l.s4 1983009808
    %v3118 = vunpack.c.0.s8 %v3117
    %v3119 = vperm.slane %v3115, %v3118
    %v3120 = vsel %vm227, %v3051, %v3040
    %v3122 = vunpack.c.l.s4 1983009808
    %v3123 = vunpack.c.0.s8 %v3122
    %v3124 = vperm.slane %v3120, %v3123
    %v3125 = vrot.slane %v3052, 4
    %v3126 = vsel %vm227, %v3125, %v3050
    %v3128 = vunpack.c.l.s4 1983009808
    %v3129 = vunpack.c.0.s8 %v3128
    %v3130 = vperm.slane %v3126, %v3129
    %v3131 = vrot.slane %v3119, 4
    %v3132 = vsel %vm227, %v3131, %v3113
    %v3133 = vrot.slane %v3113, 4
    %v3134 = vsel %vm227, %v3119, %v3133
    %v3136 = vunpack.c.l.s4 1934713408
    %v3137 = vunpack.c.0.s8 %v3136
    %v3138 = vperm.slane %v3132, %v3137
    %v3140 = vunpack.c.l.s4 1934713408
    %v3141 = vunpack.c.0.s8 %v3140
    %v3142 = vperm.slane %v3134, %v3141
    %v3143 = vrot.slane %v3130, 4
    %v3144 = vsel %vm227, %v3143, %v3124
    %v3145 = vrot.slane %v3124, 4
    %v3146 = vsel %vm227, %v3130, %v3145
    %v3148 = vunpack.c.l.s4 1934713408
    %v3149 = vunpack.c.0.s8 %v3148
    %v3150 = vperm.slane %v3144, %v3149
    %v3152 = vunpack.c.l.s4 1934713408
    %v3153 = vunpack.c.0.s8 %v3152
    %v3154 = vperm.slane %v3146, %v3153
    %v3155 = vrot.slane %v3150, 4
    %v3156 = vsel %vm227, %v3155, %v3138
    %v3157 = vrot.slane %v3138, 4
    %v3158 = vsel %vm227, %v3150, %v3157
    %v3159 = vrot.slane %v3154, 4
    %v3160 = vsel %vm227, %v3159, %v3142
    %v3161 = vrot.slane %v3142, 4
    %v3162 = vsel %vm227, %v3154, %v3161
    %v3163 = vsel %vm227, %v3103, %v3084
    %v3165 = vunpack.c.l.s4 1983009808
    %v3166 = vunpack.c.0.s8 %v3165
    %v3167 = vperm.slane %v3163, %v3166
    %v3168 = vrot.slane %v3104, 4
    %v3169 = vsel %vm227, %v3168, %v3102
    %v3171 = vunpack.c.l.s4 1983009808
    %v3172 = vunpack.c.0.s8 %v3171
    %v3173 = vperm.slane %v3169, %v3172
    %v3174 = vsel %vm227, %v3107, %v3096
    %v3176 = vunpack.c.l.s4 1983009808
    %v3177 = vunpack.c.0.s8 %v3176
    %v3178 = vperm.slane %v3174, %v3177
    %v3179 = vrot.slane %v3108, 4
    %v3180 = vsel %vm227, %v3179, %v3106
    %v3182 = vunpack.c.l.s4 1983009808
    %v3183 = vunpack.c.0.s8 %v3182
    %v3184 = vperm.slane %v3180, %v3183
    %v3185 = vrot.slane %v3173, 4
    %v3186 = vsel %vm227, %v3185, %v3167
    %v3187 = vrot.slane %v3167, 4
    %v3188 = vsel %vm227, %v3173, %v3187
    %v3190 = vunpack.c.l.s4 1934713408
    %v3191 = vunpack.c.0.s8 %v3190
    %v3192 = vperm.slane %v3186, %v3191
    %v3194 = vunpack.c.l.s4 1934713408
    %v3195 = vunpack.c.0.s8 %v3194
    %v3196 = vperm.slane %v3188, %v3195
    %v3197 = vrot.slane %v3184, 4
    %v3198 = vsel %vm227, %v3197, %v3178
    %v3199 = vrot.slane %v3178, 4
    %v3200 = vsel %vm227, %v3184, %v3199
    %v3202 = vunpack.c.l.s4 1934713408
    %v3203 = vunpack.c.0.s8 %v3202
    %v3204 = vperm.slane %v3198, %v3203
    %v3206 = vunpack.c.l.s4 1934713408
    %v3207 = vunpack.c.0.s8 %v3206
    %v3208 = vperm.slane %v3200, %v3207
    %v3209 = vrot.slane %v3204, 4
    %v3210 = vsel %vm227, %v3209, %v3192
    %v3211 = vrot.slane %v3192, 4
    %v3212 = vsel %vm227, %v3204, %v3211
    %v3213 = vrot.slane %v3208, 4
    %v3214 = vsel %vm227, %v3213, %v3196
    %v3215 = vrot.slane %v3196, 4
    %v3216 = vsel %vm227, %v3208, %v3215
    %3219 = vrot.lane.b32.xlu0 %v3158, 8
    %v3220 = vpop.permute.xlu0 %3219
    %3221 = vrot.lane.b32.xlu0 %v3212, 8
    %v3222 = vpop.permute.xlu0 %3221
    %3227 = vrot.lane.b32.xlu0 %v3160, 16
    %v3228 = vpop.permute.xlu0 %3227
    %3229 = vrot.lane.b32.xlu0 %v3214, 16
    %v3230 = vpop.permute.xlu0 %3229
    %3235 = vrot.lane.b32.xlu0 %v3162, 24
    %v3236 = vpop.permute.xlu0 %3235
    %3237 = vrot.lane.b32.xlu0 %v3216, 24
    %v3238 = vpop.permute.xlu0 %3237
    %v3241 = vsel %vm965, %v3156, %v3220
    %v3242 = vsel %vm965, %v3210, %v3222
    %v3243 = vsel %vm1652, %v3241, %v3228
    %v3244 = vsel %vm1652, %v3242, %v3230
    %v3245 = vsel %vm1655, %v3243, %v3236
    %v3246 = vsel %vm1655, %v3244, %v3238
    %v3247 = vpack.c.bf16 %v3246, %v3245
    %v3248 = vld [vmem:[#allocation11] sm:$0xf]
    %v3249 = vld [vmem:[#allocation11 + $0x4] sm:$0xf]
    %v3250 = vld [vmem:[#allocation11 + $0x8] sm:$0xf]
    %v3251 = vld [vmem:[#allocation11 + $0xc] sm:$0xf]
    %v3256 = vunpack.c.l.b16 %v3248
    %v3257 = vunpack.c.l.b16 %v3249
    %v3258 = vunpack.c.l.b16 %v3250
    %v3259 = vunpack.c.l.b16 %v3251
    %v3260 = vpack.c.b16 %v3257, %v3256
    %v3261 = vpack.c.b16 %v3259, %v3258
    %v3265 = vsel %vm186, %v3247, 0
    %3267 = vmatpush.bf16.msra.mxu0 0
    %3268 = vmatpush.bf16.msra.mxu0 0
    %3269 = vmatpush.bf16.msra.mxu0 0
    %3270 = vmatpush.bf16.msra.mxu0 0
    %3271 = vmatpush.bf16.msra.mxu0 0
    %3272 = vmatpush.bf16.msra.mxu0 0
    %3273 = vmatpush.bf16.msra.mxu0 %v3261
    %3274 = vmatpush.bf16.msra.mxu0 %v3260
    %3275 = vmatmul.bf16.gmra.mxu0 %v3265
    %v3276 = vpop.f32.mrf.mxu0
    %v3277 = vadd.f32 %v1747, %v3276
    %v3278 = vpop.f32.mrf.mxu0
    %v3279 = vadd.f32 %v1748, %v3278
    %3280 = vdwg.mxu0
    %v3281 = vsel %vm186, %v3277, 0.0
    %3282 = vadd.xlane.f32.xlu0 %v3281
    %v3283 = vpop.xlane.xlu0 %3282
    %v3284 = vsel %vm186, %v3279, 0.0
    %3285 = vadd.xlane.f32.xlu0 %v3284
    %v3286 = vpop.xlane.xlu0 %3285
    %v3287 = vmul.f32 %v3283, %v1704
    %v3288 = vmul.f32 %v3286, %v1704
    %v3289 = vsub.f32 %v3277, %v3287
    %v3290 = vsub.f32 %v3279, %v3288
    %v3291 = vmul.f32 %v3289, %v3289
    %v3292 = vmul.f32 %v3290, %v3290
    %v3293 = vsel %vm186, %v3291, 0.0
    %3294 = vadd.xlane.f32.xlu0 %v3293
    %v3295 = vpop.xlane.xlu0 %3294
    %v3296 = vsel %vm186, %v3292, 0.0
    %3297 = vadd.xlane.f32.xlu0 %v3296
    %v3298 = vpop.xlane.xlu0 %3297
    %v3299 = vmul.f32 %v3295, %v1704
    %v3300 = vmul.f32 %v3298, %v1704
    %v3301 = vadd.f32 %v3299, 1e-06
    %v3302 = vadd.f32 %v3300, 1e-06
    %v3303 = vrsqrt.pop %v3301
    %v3304 = vmul.f32 %v3303, %v3301
    %v3305 = vmul.f32 %v3304, %v3303
    %v3306 = vmul.f32 0.5, %v3305
    %v3307 = vsub.f32 1.5, %v3306
    %v3308 = vmul.f32 %v3303, %v3307
    %vm3309 = vweird.f32 %v3301
    %vm3310 = vweird.f32 %v3303
    %vm3311 = vmor %vm3309, %vm3310
    %v3312 = vsel %vm3311, %v3303, %v3308
    %v3313 = vrsqrt.pop %v3302
    %v3314 = vmul.f32 %v3313, %v3302
    %v3315 = vmul.f32 %v3314, %v3313
    %v3316 = vmul.f32 0.5, %v3315
    %v3317 = vsub.f32 1.5, %v3316
    %v3318 = vmul.f32 %v3313, %v3317
    %vm3319 = vweird.f32 %v3302
    %vm3320 = vweird.f32 %v3313
    %vm3321 = vmor %vm3319, %vm3320
    %v3322 = vsel %vm3321, %v3313, %v3318
    %v3323 = vmul.f32 %v3289, %v3312
    %v3324 = vmul.f32 %v3290, %v3322
    %v3325 = vperm.slane %v168, 2
    %v3326 = vmul.f32 %v3323, %v3325
    %v3327 = vmul.f32 %v3324, %v3325
    %v3328 = vperm.slane %v168, 3
    %v3329 = vadd.f32 %v3326, %v3328
    %v3330 = vadd.f32 %v3327, %v3328
    %v3331 = vpack.c.bf16 %v3330, %v3329
    %v3332 = vld [vmem:[#allocation13] sm:$0xf]
    %v3333 = vld [vmem:[#allocation13 + $0x4] sm:$0xf]
    %v3334 = vld [vmem:[#allocation13 + $0x8] sm:$0xf]
    %v3335 = vld [vmem:[#allocation13 + $0xc] sm:$0xf]
    %v3336 = vld [vmem:[%s12] sm:$0x1]
    %v3338 = vperm.slane %v3336, 0
    %v3344 = vunpack.c.l.b16 %v3332
    %v3345 = vunpack.c.l.b16 %v3333
    %v3346 = vunpack.c.l.b16 %v3334
    %v3347 = vunpack.c.l.b16 %v3335
    %v3348 = vpack.c.b16 %v3345, %v3344
    %v3349 = vpack.c.b16 %v3347, %v3346
    %v3353 = vsel %vm186, %v3331, 0
    %3355 = vmatpush.bf16.msra.mxu0 0
    %3356 = vmatpush.bf16.msra.mxu0 0
    %3357 = vmatpush.bf16.msra.mxu0 0
    %3358 = vmatpush.bf16.msra.mxu0 0
    %3359 = vmatpush.bf16.msra.mxu0 0
    %3360 = vmatpush.bf16.msra.mxu0 0
    %3361 = vmatpush.bf16.msra.mxu0 %v3349
    %3362 = vmatpush.bf16.msra.mxu0 %v3348
    %3363 = vmatmul.bf16.gmra.mxu0 %v3353
    %v3364 = vpop.f32.mrf.mxu0
    %v3365 = vadd.f32 %v3338, %v3364
    %v3366 = vpop.f32.mrf.mxu0
    %v3367 = vadd.f32 %v3338, %v3366
    %3368 = vdwg.mxu0
    %v3369 = vmax.f32 %v3365, 0.0
    %v3370 = vmax.f32 %v3367, 0.0
    %v3371 = vpack.c.bf16 %v3370, %v3369
    %v3372 = vld [vmem:[%s10] sm:$0xf]
    %v3373 = vld [vmem:[%s10 + $0x4] sm:$0xf]
    %v3374 = vld [vmem:[%s10 + $0x8] sm:$0xf]
    %v3375 = vld [vmem:[%s10 + $0xc] sm:$0xf]
    %v3376 = vld [vmem:[%s10 + $0x10] sm:$0xf]
    %v3377 = vld [vmem:[%s10 + $0x14] sm:$0xf]
    %v3378 = vld [vmem:[%s10 + $0x18] sm:$0xf]
    %v3379 = vld [vmem:[%s10 + $0x1c] sm:$0xf]
    %v3380 = vld [vmem:[%s13] sm:$0x1]
    %v3382 = vperm.slane %v3380, 0
    %v3392 = vunpack.c.l.b16 %v3372
    %v3393 = vunpack.c.l.b16 %v3373
    %v3394 = vunpack.c.l.b16 %v3374
    %v3395 = vunpack.c.l.b16 %v3375
    %v3396 = vunpack.c.l.b16 %v3376
    %v3397 = vunpack.c.l.b16 %v3377
    %v3398 = vunpack.c.l.b16 %v3378
    %v3399 = vunpack.c.l.b16 %v3379
    %v3400 = vpack.c.b16 %v3393, %v3392
    %v3401 = vpack.c.b16 %v3395, %v3394
    %v3402 = vpack.c.b16 %v3397, %v3396
    %v3403 = vpack.c.b16 %v3399, %v3398
    %vm3408 = vcmask 523264
    %v3410 = vsel %vm3408, %v3371, 0
    %3412 = vmatpush.bf16.msra.mxu0 0
    %3413 = vmatpush.bf16.msra.mxu0 0
    %3414 = vmatpush.bf16.msra.mxu0 0
    %3415 = vmatpush.bf16.msra.mxu0 0
    %3416 = vmatpush.bf16.msra.mxu0 %v3403
    %3417 = vmatpush.bf16.msra.mxu0 %v3402
    %3418 = vmatpush.bf16.msra.mxu0 %v3401
    %3419 = vmatpush.bf16.msra.mxu0 %v3400
    %3420 = vmatmul.bf16.gmra.mxu0 %v3410
    %v3421 = vpop.f32.mrf.mxu0
    %v3422 = vadd.f32 %v3382, %v3421
    %v3423 = vpop.f32.mrf.mxu0
    %v3424 = vadd.f32 %v3382, %v3423
    %3425 = vdwg.mxu0
    %v3426 = vadd.f32 %v3422, %v3329
    %v3427 = vadd.f32 %v3424, %v3330
    %v3428 = vsel %vm186, %v3426, 0.0
    %3429 = vadd.xlane.f32.xlu0 %v3428
    %v3430 = vpop.xlane.xlu0 %3429
    %v3431 = vsel %vm186, %v3427, 0.0
    %3432 = vadd.xlane.f32.xlu0 %v3431
    %v3433 = vpop.xlane.xlu0 %3432
    %v3434 = vmul.f32 %v3430, %v1704
    %v3435 = vmul.f32 %v3433, %v1704
    %v3436 = vsub.f32 %v3426, %v3434
    %v3437 = vsub.f32 %v3427, %v3435
    %v3438 = vmul.f32 %v3436, %v3436
    %v3439 = vmul.f32 %v3437, %v3437
    %v3440 = vsel %vm186, %v3438, 0.0
    %3441 = vadd.xlane.f32.xlu0 %v3440
    %v3442 = vpop.xlane.xlu0 %3441
    %v3443 = vsel %vm186, %v3439, 0.0
    %3444 = vadd.xlane.f32.xlu0 %v3443
    %v3445 = vpop.xlane.xlu0 %3444
    %v3446 = vmul.f32 %v3442, %v1704
    %v3447 = vmul.f32 %v3445, %v1704
    %v3448 = vadd.f32 %v3446, 1e-06
    %v3449 = vadd.f32 %v3447, 1e-06
    %v3450 = vrsqrt.pop %v3448
    %v3451 = vmul.f32 %v3450, %v3448
    %v3452 = vmul.f32 %v3451, %v3450
    %v3453 = vmul.f32 0.5, %v3452
    %v3454 = vsub.f32 1.5, %v3453
    %v3455 = vmul.f32 %v3450, %v3454
    %vm3456 = vweird.f32 %v3448
    %vm3457 = vweird.f32 %v3450
    %vm3458 = vmor %vm3456, %vm3457
    %v3459 = vsel %vm3458, %v3450, %v3455
    %v3460 = vrsqrt.pop %v3449
    %v3461 = vmul.f32 %v3460, %v3449
    %v3462 = vmul.f32 %v3461, %v3460
    %v3463 = vmul.f32 0.5, %v3462
    %v3464 = vsub.f32 1.5, %v3463
    %v3465 = vmul.f32 %v3460, %v3464
    %vm3466 = vweird.f32 %v3449
    %vm3467 = vweird.f32 %v3460
    %vm3468 = vmor %vm3466, %vm3467
    %v3469 = vsel %vm3468, %v3460, %v3465
    %v3470 = vmul.f32 %v3436, %v3459
    %v3471 = vmul.f32 %v3437, %v3469
    %v3472 = vperm.slane %v168, 4
    %v3473 = vmul.f32 %v3470, %v3472
    %v3474 = vmul.f32 %v3471, %v3472
    %v3475 = vperm.slane %v168, 5
    %v3476 = vadd.f32 %v3473, %v3475
    %v3477 = vadd.f32 %v3474, %v3475
    %3478 = vst.msk [vmem:[#allocation14] sm:$0xff] %vm186, %v3476
    %3479 = vst.msk [vmem:[#allocation14 + $0x8] sm:$0xff] %vm186, %v3477
    // Predicated region
    $region86: #{tpu_custom_call.1} parent=1 // pred_check
      _
    $region87: #{tpu_custom_call.1} parent=1 // pred_check_branch
      %3481 = sbr.rel (0) target = $region89
    $region88: #{tpu_custom_call.1} parent=1 // pred_region
      %3483 = vsyncadd [#allocation4], 0
      %s3484 = sshll.u32 [#allocation14], 4
      %s3485 = int_to_ptr.vmem [resolvable:$true] %s3484
      %s3486 = sshll.u32 %s14, 4
      %s3487 = int_to_ptr.hbm [resolvable:$true] %s3486
      %3492 = dma.vmem_to_hbm [thread:$0]  %s3485, 256, %s3487, [#allocation4], 128, 128, 8
    $region89: #{tpu_custom_call.1} parent=1 // pred_fallthru
      _
    // Predicated region
    $region90: #{tpu_custom_call.1} parent=1 // pred_check
      _
    $region91: #{tpu_custom_call.1} parent=1 // pred_check_branch
      %3494 = sbr.rel (0) target = $region93
    $region92: #{tpu_custom_call.1} parent=1 // pred_region
      %3496 = vsyncadd [#allocation16], 0
      %s3497 = sshll.u32 [#allocation15], 4
      %s3498 = int_to_ptr.vmem [resolvable:$true] %s3497
      %s3499 = sshll.u32 %s15, 4
      %s3500 = int_to_ptr.hbm [resolvable:$true] %s3499
      %3505 = dma.vmem_to_hbm [thread:$0]  %s3498, 512, %s3500, [#allocation16], 64, 64, 4
    $region93: #{tpu_custom_call.1} parent=1 // pred_fallthru
      _
    // Predicated region
    $region94: #{tpu_custom_call.1} parent=1 // pred_check
      _
    $region95: #{tpu_custom_call.1} parent=1 // pred_check_branch
      %3507 = sbr.rel (0) target = $region97
    $region96: #{tpu_custom_call.1} parent=1 // pred_region
      %3509 = vsyncadd [#allocation16], 0
      %s3510 = sshll.u32 [#allocation17], 4
      %s3511 = int_to_ptr.vmem [resolvable:$true] %s3510
      %s3512 = sshll.u32 %s16, 4
      %s3513 = int_to_ptr.hbm [resolvable:$true] %s3512
      %3518 = dma.vmem_to_hbm [thread:$0]  %s3511, 512, %s3513, [#allocation16], 64, 64, 4
    $region97: #{tpu_custom_call.1} parent=1 // pred_fallthru
      _
    // Predicated region
    $region98: #{tpu_custom_call.1} parent=1 // pred_check
      _
    $region99: #{tpu_custom_call.1} parent=1 // pred_check_branch
      %3520 = sbr.rel (0) target = $region101
    $region100: #{tpu_custom_call.1} parent=1 // pred_region
      %3522 = dma.done [#allocation4], 256
    $region101: #{tpu_custom_call.1} parent=1 // pred_fallthru
      _
    // Predicated region
    $region102: #{tpu_custom_call.1} parent=1 // pred_check
      _
    $region103: #{tpu_custom_call.1} parent=1 // pred_check_branch
      %3524 = sbr.rel (0) target = $region105
    $region104: #{tpu_custom_call.1} parent=1 // pred_region
      %3526 = dma.done [#allocation16], 512
    $region105: #{tpu_custom_call.1} parent=1 // pred_fallthru
      _
    // Predicated region
    $region106: #{tpu_custom_call.1} parent=1 // pred_check
      _
    $region107: #{tpu_custom_call.1} parent=1 // pred_check_branch
      %3528 = sbr.rel (0) target = $region109
    $region108: #{tpu_custom_call.1} parent=1 // pred_region
      %3530 = dma.done [#allocation16], 512
    $region109: #{tpu_custom_call.1} parent=1 // pred_fallthru
      _
    %3531 = vsyncpa [#allocation3], 1
    %3532 = vsyncpa [#allocation6], 1
    %3533 = vsyncpa [#allocation9], 1
    %3534 = vsyncpa [#allocation12], 1
    %3535 = vsyncpa [#allocation4], 1
    %3536 = vsyncpa [#allocation16], 1

</llo_original>
